<compile_context>
chip_gen: v6e
topology: v6e:2x2x1
jax: 0.10.0
libtpu: 0.0.40
codegen_flags: <defaults>
</compile_context>

<pallas_src>
import functools
import math

import jax
import jax.numpy as jnp
from jax.experimental import pallas as pl
from jax.experimental.pallas import tpu as pltpu


# ------------------------------ small helpers --------------------------------

def _vmem_limit_bytes():
    """~3/4 of physical VMEM, capped at 96 MiB (=> ~48 MiB on v7x, 96 MiB on v5e/v6e)."""
    try:
        cap = int(pltpu.get_tpu_info().vmem_capacity_bytes)
    except Exception:
        cap = 128 * 1024 * 1024
    return min((cap * 3) // 4, 96 * 1024 * 1024)


def _pick_block_b(b, s, target_rows=512):
    """Largest Bt dividing B with Bt*S ~<= target_rows, keeping >= 2 grid steps
    whenever B >= 2 (v7x has 2 TensorCores sharing the parallel grid)."""
    bt = max(1, min(b, max(1, target_rows // max(s, 1))))
    while b % bt:
        bt -= 1
    while bt > 1 and (b // bt) < 2:
        bt -= 1
        while b % bt:
            bt -= 1
    return bt


# --------------------------- fused residual block ----------------------------

def _resblock_kernel(x_ref, mask_ref,
                     ln1w_ref, ln1b_ref,
                     wqkv_ref, bqkv_ref, wo_ref, bo_ref,
                     ln2w_ref, ln2b_ref,
                     wfc_ref, bfc_ref, wpj_ref, bpj_ref,
                     o_ref,
                     qkv_scr, attn_scr, res_scr,
                     *, n_head, scale, eps, mlp_chunk):
    bt, s, d = x_ref.shape
    hd = d // n_head
    rows = bt * s

    def layer_norm(v, w_ref, b_ref):                       # f32 statistics
        mu = jnp.mean(v, axis=-1, keepdims=True)
        var = jnp.mean(jnp.square(v - mu), axis=-1, keepdims=True)
        return (v - mu) * jax.lax.rsqrt(var + eps) * w_ref[...] + b_ref[...]

    # ---- LN1 + fused QKV projection: ONE (rows, D) @ (D, 3D) MXU matmul --------
    x = x_ref[...].astype(jnp.float32).reshape(rows, d)
    xn = layer_norm(x, ln1w_ref, ln1b_ref).astype(jnp.bfloat16)
    qkv = jnp.dot(xn, wqkv_ref[...], preferred_element_type=jnp.float32) + bqkv_ref[...]
    qkv_scr[...] = qkv.astype(jnp.bfloat16)
    # x / xn / qkv are dead past this point; the attention loop reads only from the
    # VMEM scratch, so per-head temporaries don't pile up in vregs.

    # ---- attention: fori_loop over samples (bounded live ranges), static head loop
    #      (static lane offsets); each head's output goes straight into attn_scr.
    def attn_sample(b_idx, carry):
        r0 = b_idx * s
        if s % 8 == 0:
            r0 = pl.multiple_of(r0, 8)
        mask_b = mask_ref[b_idx].astype(jnp.float32)       # (S, S) additive mask
        for h in range(n_head):
            c0 = h * hd
            q = qkv_scr[pl.ds(r0, s), c0:c0 + hd]          # (S, hd) bf16
            k = qkv_scr[pl.ds(r0, s), d + c0:d + c0 + hd]
            v = qkv_scr[pl.ds(r0, s), 2 * d + c0:2 * d + c0 + hd]
            sc = jax.lax.dot_general(q, k, (((1,), (1,)), ((), ())),
                                     preferred_element_type=jnp.float32)
            sc = sc * scale + mask_b
            sc = sc - jnp.max(sc, axis=-1, keepdims=True)
            p = jnp.exp(sc)                                 # f32 softmax
            p = p * pl.reciprocal(jnp.sum(p, axis=-1, keepdims=True), approx=True)
            o_h = jnp.dot(p.astype(jnp.bfloat16), v, preferred_element_type=jnp.float32)
            attn_scr[pl.ds(r0, s), c0:c0 + hd] = o_h.astype(jnp.bfloat16)
        return carry

    jax.lax.fori_loop(0, bt, attn_sample, 0)

    # ---- ONE full-width out-projection (full-K MXU accumulate) + residual ------
    attn_out = jnp.dot(attn_scr[...], wo_ref[...], preferred_element_type=jnp.float32)
    x1 = x_ref[...].astype(jnp.float32).reshape(rows, d) + attn_out + bo_ref[...]
    res_scr[...] = x1                                      # park residual in VMEM

    # ---- LN2 + MLP; hidden (4D) dimension processed in lane-dense chunks -------
    x2n = layer_norm(x1, ln2w_ref, ln2b_ref).astype(jnp.bfloat16)
    d_ff = wfc_ref.shape[1]
    h2 = jnp.zeros((rows, d), jnp.float32)
    for c0 in range(0, d_ff, mlp_chunk):
        c1 = min(c0 + mlp_chunk, d_ff)
        h1 = jnp.dot(x2n, wfc_ref[:, c0:c1],
                     preferred_element_type=jnp.float32) + bfc_ref[:, c0:c1]
        h1 = h1 * jax.nn.sigmoid(1.702 * h1)               # QuickGELU, f32
        h2 = h2 + jnp.dot(h1.astype(jnp.bfloat16), wpj_ref[c0:c1, :],
                          preferred_element_type=jnp.float32)

    out = res_scr[...] + h2 + bpj_ref[...]
    o_ref[...] = out.reshape(bt, s, d).astype(o_ref.dtype)


def resblock_forward(bp, x, mask, *, n_head, eps=1e-5, block_b=None):
    """bp: packed block params; x: (B, S, D) f32; mask: (B, S, S) f32 additive."""
    b, s, d = x.shape
    hd = d // n_head
    bt = _pick_block_b(b, s) if block_b is None else block_b
    assert b % bt == 0, (b, bt)
    rows = bt * s
    d_ff = bp["w_fc"].shape[1]
    mlp_chunk = min(d_ff, 512)

    weights = [bp["ln1_w"], bp["ln1_b"],
               bp["w_qkv"], bp["b_qkv"], bp["w_out"], bp["b_out"],
               bp["ln2_w"], bp["ln2_b"],
               bp["w_fc"], bp["b_fc"], bp["w_proj"], bp["b_proj"]]
    # Constant block index -> each weight is DMA'd once and stays VMEM-resident
    # across the whole batch grid (no per-step re-fetch).
    w_specs = [pl.BlockSpec(w.shape, lambda i, _z=(0,) * w.ndim: _z) for w in weights]

    return pl.pallas_call(
        functools.partial(_resblock_kernel, n_head=n_head,
                          scale=1.0 / math.sqrt(hd), eps=eps, mlp_chunk=mlp_chunk),
        out_shape=jax.ShapeDtypeStruct((b, s, d), x.dtype),
        grid=(b // bt,),
        in_specs=[pl.BlockSpec((bt, s, d), lambda i: (i, 0, 0)),
                  pl.BlockSpec((bt, s, s), lambda i: (i, 0, 0))] + w_specs,
        out_specs=pl.BlockSpec((bt, s, d), lambda i: (i, 0, 0)),
        scratch_shapes=[pltpu.VMEM((rows, 3 * d), jnp.bfloat16),   # fused QKV
                        pltpu.VMEM((rows, d), jnp.bfloat16),       # head-concat attn out
                        pltpu.VMEM((rows, d), jnp.float32)],       # residual stream
        compiler_params=pltpu.CompilerParams(
            dimension_semantics=("parallel",),
            vmem_limit_bytes=_vmem_limit_bytes()),
    )(x, mask, *weights)


# --------------------- fused final LayerNorm + projection --------------------

def _final_kernel(x_ref, lnw_ref, lnb_ref, proj_ref, o_ref, *, eps):
    x = x_ref[...].astype(jnp.float32)                 # (B, D) — only the EOT rows
    mu = jnp.mean(x, axis=-1, keepdims=True)
    var = jnp.mean(jnp.square(x - mu), axis=-1, keepdims=True)
    xn = (x - mu) * jax.lax.rsqrt(var + eps) * lnw_ref[...] + lnb_ref[...]
    o_ref[...] = jnp.dot(xn.astype(jnp.bfloat16), proj_ref[...],
                         preferred_element_type=jnp.float32).astype(o_ref.dtype)


def final_project(x_eot, ln_w, ln_b, proj, eps=1e-5):
    b, d = x_eot.shape
    p_dim = proj.shape[1]
    return pl.pallas_call(
        functools.partial(_final_kernel, eps=eps),
        out_shape=jax.ShapeDtypeStruct((b, p_dim), jnp.float32),
        grid=(1,),
        in_specs=[pl.BlockSpec((b, d), lambda i: (0, 0)),
                  pl.BlockSpec((1, d), lambda i: (0, 0)),
                  pl.BlockSpec((1, d), lambda i: (0, 0)),
                  pl.BlockSpec((d, p_dim), lambda i: (0, 0))],
        out_specs=pl.BlockSpec((b, p_dim), lambda i: (0, 0)),
        compiler_params=pltpu.CompilerParams(vmem_limit_bytes=_vmem_limit_bytes()),
    )(x_eot, ln_w, ln_b, proj)


# ------------------------------- forward pass ---------------------------------

def text_encoder_forward(params, x, high_prompt, global_prompt,
                         tokenized_prompts, attn, *, flag, n_tpro, n_set, n_head):
    b, s, d = x.shape
    l_hp, c, _ = high_prompt.shape

    hp = high_prompt.reshape(l_hp, c // n_set, n_set, d)
    if not flag:
        hp = jnp.broadcast_to(hp[:, :, None], (l_hp, c // n_set, n_set, n_set, d))
        hp = hp.reshape(l_hp, (c // n_set) * n_set, n_set, d)
    # hp[i] is batch-major (batch, n_set, D); the reference's seq-major permute is
    # dropped because the whole encoder runs in (B, S, D) layout.

    x = x + params["positional_embedding"][None]                  # (B, S, D)

    for layer_idx in range(len(params["blocks"])):
        if layer_idx > 0:
            # prefix/suffix rows are unchanged -> overwrite just the ctx rows with a
            # dynamic_update_slice instead of re-building the full (B,S,D) tensor.
            ctx_g = jnp.broadcast_to(global_prompt[layer_idx - 1][None],
                                     (x.shape[0], n_tpro, d))
            ctx = jnp.concatenate([ctx_g, hp[layer_idx - 1]], axis=1)  # (B, n_tpro+n_set, D)
            x = jax.lax.dynamic_update_slice(x, ctx.astype(x.dtype), (0, 1, 0))
        x = resblock_forward(params["blocks"][layer_idx], x,
                             attn[:, layer_idx], n_head=n_head)

    # EOT gather first (only B rows, XLA glue), then fused LN_final + projection.
    eot = jnp.argmax(tokenized_prompts, axis=-1)
    x_eot = x[jnp.arange(x.shape[0]), eot]                        # (B, D)
    out = final_project(x_eot, params["ln_final_w"], params["ln_final_b"],
                        params["text_projection"])
    if not flag:
        out = out.reshape(out.shape[0] // 5, 5, -1)               # matches hardcoded 5
    return out


# ------------------- deterministic init + one-time packing --------------------

def pack_block_params(raw, n_head):
    """PyTorch-layout block weights -> kernel-ready layouts (done ONCE, outside forward)."""
    d = raw["ln_1_w"].shape[0]
    assert d % n_head == 0
    bf = lambda a: a.astype(jnp.bfloat16)
    r2 = lambda a: a.reshape(1, -1).astype(jnp.float32)
    return dict(
        ln1_w=r2(raw["ln_1_w"]), ln1_b=r2(raw["ln_1_b"]),
        w_qkv=bf(raw["in_proj_w"].T),          # (D, 3D): columns [Q|K|V], heads contiguous
        b_qkv=r2(raw["in_proj_b"]),            # (1, 3D)
        w_out=bf(raw["out_proj_w"].T),         # (D, D): head-concat layout @ w_out
        b_out=r2(raw["out_proj_b"]),
        ln2_w=r2(raw["ln_2_w"]), ln2_b=r2(raw["ln_2_b"]),
        w_fc=bf(raw["mlp_fc_w"].T), b_fc=r2(raw["mlp_fc_b"]),
        w_proj=bf(raw["mlp_proj_w"].T), b_proj=r2(raw["mlp_proj_b"]),
    )


def init_params(key, *, n_layers, d, n_head, proj_dim, seq_len):
    keys = jax.random.split(key, 2 + n_layers)

    def nrm(k, shape, scale=0.02):
        return (scale * jax.random.normal(k, shape)).astype(jnp.float32)

    blocks = []
    for i in range(n_layers):
        bk = jax.random.split(keys[2 + i], 8)
        raw = dict(
            ln_1_w=jnp.ones((d,), jnp.float32), ln_1_b=jnp.zeros((d,), jnp.float32),
            in_proj_w=nrm(bk[0], (3 * d, d)), in_proj_b=nrm(bk[1], (3 * d,)),
            out_proj_w=nrm(bk[2], (d, d)), out_proj_b=nrm(bk[3], (d,)),
            ln_2_w=jnp.ones((d,), jnp.float32), ln_2_b=jnp.zeros((d,), jnp.float32),
            mlp_fc_w=nrm(bk[4], (4 * d, d)), mlp_fc_b=nrm(bk[5], (4 * d,)),
            mlp_proj_w=nrm(bk[6], (d, 4 * d)), mlp_proj_b=nrm(bk[7], (d,)),
        )
        blocks.append(pack_block_params(raw, n_head))

    return dict(
        positional_embedding=nrm(keys[0], (seq_len, d)),
        ln_final_w=jnp.ones((1, d), jnp.float32),
        ln_final_b=jnp.zeros((1, d), jnp.float32),
        text_projection=nrm(keys[1], (d, proj_dim)).astype(jnp.bfloat16),
        blocks=blocks,
    )


if __name__ == "__main__":
    # Small but lane-friendly demo shapes (D multiple of 128, S multiple of 8,
    # B chosen so the batch grid has >= 2 steps for the v7x megacore).
    B, S, D, H = 4, 16, 128, 4
    L = 3                              # transformer layers
    n_tpro, n_set = 2, 2               # t_prompt_length, description_num
    proj_dim = 64
    flag = True                        # flag=True path (no trailing reshape-by-5)

    key = jax.random.PRNGKey(0)
    kp, kx, kh, kg, kt, ka = jax.random.split(key, 6)
    params = init_params(kp, n_layers=L, d=D, n_head=H, proj_dim=proj_dim, seq_len=S)

    x = 0.02 * jax.random.normal(kx, (B, S, D), jnp.float32)
    high_prompt = 0.02 * jax.random.normal(kh, (L - 1, B * n_set, D), jnp.float32)
    global_prompt = 0.02 * jax.random.normal(kg, (L - 1, n_tpro, D), jnp.float32)
    tokenized_prompts = jax.random.randint(kt, (B, S), 0, 1000, jnp.int32)
    attn = 0.1 * jax.random.normal(ka, (B, L, S, S), jnp.float32)

    fwd = jax.jit(functools.partial(text_encoder_forward, flag=flag,
                                    n_tpro=n_tpro, n_set=n_set, n_head=H))
    out = jax.block_until_ready(fwd(params, x, high_prompt, global_prompt,
                                    tokenized_prompts, attn))
    assert out.shape == (B, proj_dim), out.shape
    print("KERNEL_OK")
</pallas_src>

<mosaic_0001>
module attributes {stable_mosaic.version = 11 : i64} {
  func.func @_resblock_kernel(%arg0: i32, %arg1: memref<2x16x128xf32, #tpu.memory_space<vmem>>, %arg2: memref<2x16x16xf32, #tpu.memory_space<vmem>>, %arg3: memref<1x128xf32, #tpu.memory_space<vmem>>, %arg4: memref<1x128xf32, #tpu.memory_space<vmem>>, %arg5: memref<128x384xbf16, #tpu.memory_space<vmem>>, %arg6: memref<1x384xf32, #tpu.memory_space<vmem>>, %arg7: memref<128x128xbf16, #tpu.memory_space<vmem>>, %arg8: memref<1x128xf32, #tpu.memory_space<vmem>>, %arg9: memref<1x128xf32, #tpu.memory_space<vmem>>, %arg10: memref<1x128xf32, #tpu.memory_space<vmem>>, %arg11: memref<128x512xbf16, #tpu.memory_space<vmem>>, %arg12: memref<1x512xf32, #tpu.memory_space<vmem>>, %arg13: memref<512x128xbf16, #tpu.memory_space<vmem>>, %arg14: memref<1x128xf32, #tpu.memory_space<vmem>>, %arg15: memref<2x16x128xf32, #tpu.memory_space<vmem>>, %arg16: memref<32x384xbf16, #tpu.memory_space<vmem>>, %arg17: memref<32x128xbf16, #tpu.memory_space<vmem>>, %arg18: memref<32x128xf32, #tpu.memory_space<vmem>>) attributes {dimension_semantics = [#tpu.dimension_semantics<parallel>], iteration_bounds = array<i64: 2>, scalar_prefetch = 0 : i64, scratch_operands = 3 : i64, tpu.core_type = #tpu.core_type<tc>, window_params = [{transform_indices = @transform_0, window_bounds = array<i64: 2, 16, 128>}, {transform_indices = @transform_1, window_bounds = array<i64: 2, 16, 16>}, {pipeline_mode = #tpu.pipeline_mode<synchronous>, transform_indices = @transform_2, window_bounds = array<i64: 1, 128>}, {pipeline_mode = #tpu.pipeline_mode<synchronous>, transform_indices = @transform_3, window_bounds = array<i64: 1, 128>}, {pipeline_mode = #tpu.pipeline_mode<synchronous>, transform_indices = @transform_4, window_bounds = array<i64: 128, 384>}, {pipeline_mode = #tpu.pipeline_mode<synchronous>, transform_indices = @transform_5, window_bounds = array<i64: 1, 384>}, {pipeline_mode = #tpu.pipeline_mode<synchronous>, transform_indices = @transform_6, window_bounds = array<i64: 128, 128>}, {pipeline_mode = #tpu.pipeline_mode<synchronous>, transform_indices = @transform_7, window_bounds = array<i64: 1, 128>}, {pipeline_mode = #tpu.pipeline_mode<synchronous>, transform_indices = @transform_8, window_bounds = array<i64: 1, 128>}, {pipeline_mode = #tpu.pipeline_mode<synchronous>, transform_indices = @transform_9, window_bounds = array<i64: 1, 128>}, {pipeline_mode = #tpu.pipeline_mode<synchronous>, transform_indices = @transform_10, window_bounds = array<i64: 128, 512>}, {pipeline_mode = #tpu.pipeline_mode<synchronous>, transform_indices = @transform_11, window_bounds = array<i64: 1, 512>}, {pipeline_mode = #tpu.pipeline_mode<synchronous>, transform_indices = @transform_12, window_bounds = array<i64: 512, 128>}, {pipeline_mode = #tpu.pipeline_mode<synchronous>, transform_indices = @transform_13, window_bounds = array<i64: 1, 128>}, {transform_indices = @transform_14, window_bounds = array<i64: 2, 16, 128>}]} {
    %c0 = arith.constant 0 : index
    %c0_0 = arith.constant 0 : index
    %c0_1 = arith.constant 0 : index
    %0 = vector.load %arg1[%c0, %c0_0, %c0_1] : memref<2x16x128xf32, #tpu.memory_space<vmem>>, vector<2x16x128xf32>
    %1 = vector.shape_cast %0 : vector<2x16x128xf32> to vector<32x128xf32>
    %cst = arith.constant dense<0.000000e+00> : vector<32xf32>
    %2 = vector.multi_reduction <add>, %1, %cst [1] : vector<32x128xf32> to vector<32xf32>
    %3 = vector.shape_cast %2 : vector<32xf32> to vector<32x1xf32>
    %cst_2 = arith.constant 1.280000e+02 : f32
    %4 = vector.broadcast %cst_2 : f32 to vector<32x1xf32>
    %5 = arith.divf %3, %4 : vector<32x1xf32>
    %6 = vector.broadcast %5 : vector<32x1xf32> to vector<32x128xf32>
    %7 = arith.subf %1, %6 : vector<32x128xf32>
    %8 = arith.mulf %7, %7 : vector<32x128xf32>
    %cst_3 = arith.constant dense<0.000000e+00> : vector<32xf32>
    %9 = vector.multi_reduction <add>, %8, %cst_3 [1] : vector<32x128xf32> to vector<32xf32>
    %10 = vector.shape_cast %9 : vector<32xf32> to vector<32x1xf32>
    %cst_4 = arith.constant 1.280000e+02 : f32
    %11 = vector.broadcast %cst_4 : f32 to vector<32x1xf32>
    %12 = arith.divf %10, %11 : vector<32x1xf32>
    %13 = vector.broadcast %5 : vector<32x1xf32> to vector<32x128xf32>
    %14 = arith.subf %1, %13 : vector<32x128xf32>
    %cst_5 = arith.constant 9.99999974E-6 : f32
    %15 = vector.broadcast %cst_5 : f32 to vector<32x1xf32>
    %16 = arith.addf %12, %15 : vector<32x1xf32>
    %17 = math.rsqrt %16 : vector<32x1xf32>
    %18 = vector.broadcast %17 : vector<32x1xf32> to vector<32x128xf32>
    %19 = arith.mulf %14, %18 : vector<32x128xf32>
    %c0_6 = arith.constant 0 : index
    %c0_7 = arith.constant 0 : index
    %20 = vector.load %arg3[%c0_6, %c0_7] : memref<1x128xf32, #tpu.memory_space<vmem>>, vector<1x128xf32>
    %21 = vector.broadcast %20 : vector<1x128xf32> to vector<32x128xf32>
    %22 = arith.mulf %19, %21 : vector<32x128xf32>
    %c0_8 = arith.constant 0 : index
    %c0_9 = arith.constant 0 : index
    %23 = vector.load %arg4[%c0_8, %c0_9] : memref<1x128xf32, #tpu.memory_space<vmem>>, vector<1x128xf32>
    %24 = vector.broadcast %23 : vector<1x128xf32> to vector<32x128xf32>
    %25 = arith.addf %22, %24 : vector<32x128xf32>
    %26 = arith.truncf %25 : vector<32x128xf32> to vector<32x128xbf16>
    %c0_10 = arith.constant 0 : index
    %c0_11 = arith.constant 0 : index
    %27 = vector.load %arg5[%c0_10, %c0_11] : memref<128x384xbf16, #tpu.memory_space<vmem>>, vector<128x384xbf16>
    %cst_12 = arith.constant dense<0.000000e+00> : vector<32x384xf32>
    %28 = tpu.matmul %26, %27, %cst_12 {dimension_numbers = #tpu.dot_dimension_numbers<[1], [0], [0], [1], [0, 0, 1, 1], [], []>} : vector<32x128xbf16>, vector<128x384xbf16>, vector<32x384xf32> -> vector<32x384xf32>
    %c0_13 = arith.constant 0 : index
    %c0_14 = arith.constant 0 : index
    %29 = vector.load %arg6[%c0_13, %c0_14] : memref<1x384xf32, #tpu.memory_space<vmem>>, vector<1x384xf32>
    %30 = vector.broadcast %29 : vector<1x384xf32> to vector<32x384xf32>
    %31 = arith.addf %28, %30 : vector<32x384xf32>
    %32 = arith.truncf %31 : vector<32x384xf32> to vector<32x384xbf16>
    %c0_15 = arith.constant 0 : index
    %c0_16 = arith.constant 0 : index
    %33 = vector.load %arg16[%c0_15, %c0_16] : memref<32x384xbf16, #tpu.memory_space<vmem>>, vector<32x384xbf16>
    tpu.vector_store %arg16[%c0_15, %c0_16], %32 {strides = array<i32>} : memref<32x384xbf16, #tpu.memory_space<vmem>>, vector<32x384xbf16>,
    %c0_i32 = arith.constant 0 : i32
    %c2_i32 = arith.constant 2 : i32
    %34 = arith.addi %c0_i32, %c2_i32 : i32
    %c1_i32 = arith.constant 1 : i32
    scf.for %arg19 = %c0_i32 to %34 step %c1_i32  : i32 {
      %c16_i32 = arith.constant 16 : i32
      %95 = arith.muli %arg19, %c16_i32 : i32
      %96 = tpu.assume_multiple %95, 8 : i32
      %97 = arith.index_cast %arg19 : i32 to index
      %c0_57 = arith.constant 0 : index
      %c0_58 = arith.constant 0 : index
      %98 = vector.load %arg2[%97, %c0_57, %c0_58] : memref<2x16x16xf32, #tpu.memory_space<vmem>>, vector<1x16x16xf32>
      %99 = vector.shape_cast %98 : vector<1x16x16xf32> to vector<16x16xf32>
      %100 = arith.index_cast %96 : i32 to index
      %c0_59 = arith.constant 0 : index
      %101 = vector.load %arg16[%100, %c0_59] : memref<32x384xbf16, #tpu.memory_space<vmem>>, vector<16x32xbf16>
      %102 = arith.index_cast %96 : i32 to index
      %c128 = arith.constant 128 : index
      %103 = vector.load %arg16[%102, %c128] : memref<32x384xbf16, #tpu.memory_space<vmem>>, vector<16x32xbf16>
      %104 = arith.index_cast %96 : i32 to index
      %c256 = arith.constant 256 : index
      %105 = vector.load %arg16[%104, %c256] : memref<32x384xbf16, #tpu.memory_space<vmem>>, vector<16x32xbf16>
      %cst_60 = arith.constant dense<0.000000e+00> : vector<16x16xf32>
      %106 = tpu.matmul %101, %103, %cst_60 {dimension_numbers = #tpu.dot_dimension_numbers<[1], [1], [0], [0], [0, 0, 1, 0], [], []>} : vector<16x32xbf16>, vector<16x32xbf16>, vector<16x16xf32> -> vector<16x16xf32>
      %cst_61 = arith.constant 0.176776692 : f32
      %107 = vector.broadcast %cst_61 : f32 to vector<16x16xf32>
      %108 = arith.mulf %106, %107 : vector<16x16xf32>
      %109 = arith.addf %108, %99 : vector<16x16xf32>
      %cst_62 = arith.constant dense<0xFF800000> : vector<16xf32>
      %110 = vector.multi_reduction <maximumf>, %109, %cst_62 [1] : vector<16x16xf32> to vector<16xf32>
      %111 = vector.shape_cast %110 : vector<16xf32> to vector<16x1xf32>
      %112 = vector.broadcast %111 : vector<16x1xf32> to vector<16x16xf32>
      %113 = arith.subf %109, %112 : vector<16x16xf32>
      %114 = math.exp %113 : vector<16x16xf32>
      %cst_63 = arith.constant dense<0.000000e+00> : vector<16xf32>
      %115 = vector.multi_reduction <add>, %114, %cst_63 [1] : vector<16x16xf32> to vector<16xf32>
      %116 = vector.shape_cast %115 : vector<16xf32> to vector<16x1xf32>
      %117 = tpu.reciprocal %116 {approx = true} : vector<16x1xf32> -> vector<16x1xf32>
      %118 = vector.broadcast %117 : vector<16x1xf32> to vector<16x16xf32>
      %119 = arith.mulf %114, %118 : vector<16x16xf32>
      %120 = arith.truncf %119 : vector<16x16xf32> to vector<16x16xbf16>
      %cst_64 = arith.constant dense<0.000000e+00> : vector<16x32xf32>
      %121 = tpu.matmul %120, %105, %cst_64 {dimension_numbers = #tpu.dot_dimension_numbers<[1], [0], [0], [1], [0, 0, 1, 1], [], []>} : vector<16x16xbf16>, vector<16x32xbf16>, vector<16x32xf32> -> vector<16x32xf32>
      %122 = arith.truncf %121 : vector<16x32xf32> to vector<16x32xbf16>
      %123 = arith.index_cast %96 : i32 to index
      %c0_65 = arith.constant 0 : index
      %124 = vector.load %arg17[%123, %c0_65] : memref<32x128xbf16, #tpu.memory_space<vmem>>, vector<16x32xbf16>
      tpu.vector_store %arg17[%123, %c0_65], %122 {strides = array<i32>} : memref<32x128xbf16, #tpu.memory_space<vmem>>, vector<16x32xbf16>,
      %125 = arith.index_cast %96 : i32 to index
      %c32 = arith.constant 32 : index
      %126 = vector.load %arg16[%125, %c32] : memref<32x384xbf16, #tpu.memory_space<vmem>>, vector<16x32xbf16>
      %127 = arith.index_cast %96 : i32 to index
      %c160 = arith.constant 160 : index
      %128 = vector.load %arg16[%127, %c160] : memref<32x384xbf16, #tpu.memory_space<vmem>>, vector<16x32xbf16>
      %129 = arith.index_cast %96 : i32 to index
      %c288 = arith.constant 288 : index
      %130 = vector.load %arg16[%129, %c288] : memref<32x384xbf16, #tpu.memory_space<vmem>>, vector<16x32xbf16>
      %cst_66 = arith.constant dense<0.000000e+00> : vector<16x16xf32>
      %131 = tpu.matmul %126, %128, %cst_66 {dimension_numbers = #tpu.dot_dimension_numbers<[1], [1], [0], [0], [0, 0, 1, 0], [], []>} : vector<16x32xbf16>, vector<16x32xbf16>, vector<16x16xf32> -> vector<16x16xf32>
      %cst_67 = arith.constant 0.176776692 : f32
      %132 = vector.broadcast %cst_67 : f32 to vector<16x16xf32>
      %133 = arith.mulf %131, %132 : vector<16x16xf32>
      %134 = arith.addf %133, %99 : vector<16x16xf32>
      %cst_68 = arith.constant dense<0xFF800000> : vector<16xf32>
      %135 = vector.multi_reduction <maximumf>, %134, %cst_68 [1] : vector<16x16xf32> to vector<16xf32>
      %136 = vector.shape_cast %135 : vector<16xf32> to vector<16x1xf32>
      %137 = vector.broadcast %136 : vector<16x1xf32> to vector<16x16xf32>
      %138 = arith.subf %134, %137 : vector<16x16xf32>
      %139 = math.exp %138 : vector<16x16xf32>
      %cst_69 = arith.constant dense<0.000000e+00> : vector<16xf32>
      %140 = vector.multi_reduction <add>, %139, %cst_69 [1] : vector<16x16xf32> to vector<16xf32>
      %141 = vector.shape_cast %140 : vector<16xf32> to vector<16x1xf32>
      %142 = tpu.reciprocal %141 {approx = true} : vector<16x1xf32> -> vector<16x1xf32>
      %143 = vector.broadcast %142 : vector<16x1xf32> to vector<16x16xf32>
      %144 = arith.mulf %139, %143 : vector<16x16xf32>
      %145 = arith.truncf %144 : vector<16x16xf32> to vector<16x16xbf16>
      %cst_70 = arith.constant dense<0.000000e+00> : vector<16x32xf32>
      %146 = tpu.matmul %145, %130, %cst_70 {dimension_numbers = #tpu.dot_dimension_numbers<[1], [0], [0], [1], [0, 0, 1, 1], [], []>} : vector<16x16xbf16>, vector<16x32xbf16>, vector<16x32xf32> -> vector<16x32xf32>
      %147 = arith.truncf %146 : vector<16x32xf32> to vector<16x32xbf16>
      %148 = arith.index_cast %96 : i32 to index
      %c32_71 = arith.constant 32 : index
      %149 = vector.load %arg17[%148, %c32_71] : memref<32x128xbf16, #tpu.memory_space<vmem>>, vector<16x32xbf16>
      tpu.vector_store %arg17[%148, %c32_71], %147 {strides = array<i32>} : memref<32x128xbf16, #tpu.memory_space<vmem>>, vector<16x32xbf16>,
      %150 = arith.index_cast %96 : i32 to index
      %c64 = arith.constant 64 : index
      %151 = vector.load %arg16[%150, %c64] : memref<32x384xbf16, #tpu.memory_space<vmem>>, vector<16x32xbf16>
      %152 = arith.index_cast %96 : i32 to index
      %c192 = arith.constant 192 : index
      %153 = vector.load %arg16[%152, %c192] : memref<32x384xbf16, #tpu.memory_space<vmem>>, vector<16x32xbf16>
      %154 = arith.index_cast %96 : i32 to index
      %c320 = arith.constant 320 : index
      %155 = vector.load %arg16[%154, %c320] : memref<32x384xbf16, #tpu.memory_space<vmem>>, vector<16x32xbf16>
      %cst_72 = arith.constant dense<0.000000e+00> : vector<16x16xf32>
      %156 = tpu.matmul %151, %153, %cst_72 {dimension_numbers = #tpu.dot_dimension_numbers<[1], [1], [0], [0], [0, 0, 1, 0], [], []>} : vector<16x32xbf16>, vector<16x32xbf16>, vector<16x16xf32> -> vector<16x16xf32>
      %cst_73 = arith.constant 0.176776692 : f32
      %157 = vector.broadcast %cst_73 : f32 to vector<16x16xf32>
      %158 = arith.mulf %156, %157 : vector<16x16xf32>
      %159 = arith.addf %158, %99 : vector<16x16xf32>
      %cst_74 = arith.constant dense<0xFF800000> : vector<16xf32>
      %160 = vector.multi_reduction <maximumf>, %159, %cst_74 [1] : vector<16x16xf32> to vector<16xf32>
      %161 = vector.shape_cast %160 : vector<16xf32> to vector<16x1xf32>
      %162 = vector.broadcast %161 : vector<16x1xf32> to vector<16x16xf32>
      %163 = arith.subf %159, %162 : vector<16x16xf32>
      %164 = math.exp %163 : vector<16x16xf32>
      %cst_75 = arith.constant dense<0.000000e+00> : vector<16xf32>
      %165 = vector.multi_reduction <add>, %164, %cst_75 [1] : vector<16x16xf32> to vector<16xf32>
      %166 = vector.shape_cast %165 : vector<16xf32> to vector<16x1xf32>
      %167 = tpu.reciprocal %166 {approx = true} : vector<16x1xf32> -> vector<16x1xf32>
      %168 = vector.broadcast %167 : vector<16x1xf32> to vector<16x16xf32>
      %169 = arith.mulf %164, %168 : vector<16x16xf32>
      %170 = arith.truncf %169 : vector<16x16xf32> to vector<16x16xbf16>
      %cst_76 = arith.constant dense<0.000000e+00> : vector<16x32xf32>
      %171 = tpu.matmul %170, %155, %cst_76 {dimension_numbers = #tpu.dot_dimension_numbers<[1], [0], [0], [1], [0, 0, 1, 1], [], []>} : vector<16x16xbf16>, vector<16x32xbf16>, vector<16x32xf32> -> vector<16x32xf32>
      %172 = arith.truncf %171 : vector<16x32xf32> to vector<16x32xbf16>
      %173 = arith.index_cast %96 : i32 to index
      %c64_77 = arith.constant 64 : index
      %174 = vector.load %arg17[%173, %c64_77] : memref<32x128xbf16, #tpu.memory_space<vmem>>, vector<16x32xbf16>
      tpu.vector_store %arg17[%173, %c64_77], %172 {strides = array<i32>} : memref<32x128xbf16, #tpu.memory_space<vmem>>, vector<16x32xbf16>,
      %175 = arith.index_cast %96 : i32 to index
      %c96 = arith.constant 96 : index
      %176 = vector.load %arg16[%175, %c96] : memref<32x384xbf16, #tpu.memory_space<vmem>>, vector<16x32xbf16>
      %177 = arith.index_cast %96 : i32 to index
      %c224 = arith.constant 224 : index
      %178 = vector.load %arg16[%177, %c224] : memref<32x384xbf16, #tpu.memory_space<vmem>>, vector<16x32xbf16>
      %179 = arith.index_cast %96 : i32 to index
      %c352 = arith.constant 352 : index
      %180 = vector.load %arg16[%179, %c352] : memref<32x384xbf16, #tpu.memory_space<vmem>>, vector<16x32xbf16>
      %cst_78 = arith.constant dense<0.000000e+00> : vector<16x16xf32>
      %181 = tpu.matmul %176, %178, %cst_78 {dimension_numbers = #tpu.dot_dimension_numbers<[1], [1], [0], [0], [0, 0, 1, 0], [], []>} : vector<16x32xbf16>, vector<16x32xbf16>, vector<16x16xf32> -> vector<16x16xf32>
      %cst_79 = arith.constant 0.176776692 : f32
      %182 = vector.broadcast %cst_79 : f32 to vector<16x16xf32>
      %183 = arith.mulf %181, %182 : vector<16x16xf32>
      %184 = arith.addf %183, %99 : vector<16x16xf32>
      %cst_80 = arith.constant dense<0xFF800000> : vector<16xf32>
      %185 = vector.multi_reduction <maximumf>, %184, %cst_80 [1] : vector<16x16xf32> to vector<16xf32>
      %186 = vector.shape_cast %185 : vector<16xf32> to vector<16x1xf32>
      %187 = vector.broadcast %186 : vector<16x1xf32> to vector<16x16xf32>
      %188 = arith.subf %184, %187 : vector<16x16xf32>
      %189 = math.exp %188 : vector<16x16xf32>
      %cst_81 = arith.constant dense<0.000000e+00> : vector<16xf32>
      %190 = vector.multi_reduction <add>, %189, %cst_81 [1] : vector<16x16xf32> to vector<16xf32>
      %191 = vector.shape_cast %190 : vector<16xf32> to vector<16x1xf32>
      %192 = tpu.reciprocal %191 {approx = true} : vector<16x1xf32> -> vector<16x1xf32>
      %193 = vector.broadcast %192 : vector<16x1xf32> to vector<16x16xf32>
      %194 = arith.mulf %189, %193 : vector<16x16xf32>
      %195 = arith.truncf %194 : vector<16x16xf32> to vector<16x16xbf16>
      %cst_82 = arith.constant dense<0.000000e+00> : vector<16x32xf32>
      %196 = tpu.matmul %195, %180, %cst_82 {dimension_numbers = #tpu.dot_dimension_numbers<[1], [0], [0], [1], [0, 0, 1, 1], [], []>} : vector<16x16xbf16>, vector<16x32xbf16>, vector<16x32xf32> -> vector<16x32xf32>
      %197 = arith.truncf %196 : vector<16x32xf32> to vector<16x32xbf16>
      %198 = arith.index_cast %96 : i32 to index
      %c96_83 = arith.constant 96 : index
      %199 = vector.load %arg17[%198, %c96_83] : memref<32x128xbf16, #tpu.memory_space<vmem>>, vector<16x32xbf16>
      tpu.vector_store %arg17[%198, %c96_83], %197 {strides = array<i32>} : memref<32x128xbf16, #tpu.memory_space<vmem>>, vector<16x32xbf16>,
    }
    %c2_i32_17 = arith.constant 2 : i32
    %c0_18 = arith.constant 0 : index
    %c0_19 = arith.constant 0 : index
    %35 = vector.load %arg17[%c0_18, %c0_19] : memref<32x128xbf16, #tpu.memory_space<vmem>>, vector<32x128xbf16>
    %c0_20 = arith.constant 0 : index
    %c0_21 = arith.constant 0 : index
    %36 = vector.load %arg7[%c0_20, %c0_21] : memref<128x128xbf16, #tpu.memory_space<vmem>>, vector<128x128xbf16>
    %cst_22 = arith.constant dense<0.000000e+00> : vector<32x128xf32>
    %37 = tpu.matmul %35, %36, %cst_22 {dimension_numbers = #tpu.dot_dimension_numbers<[1], [0], [0], [1], [0, 0, 1, 1], [], []>} : vector<32x128xbf16>, vector<128x128xbf16>, vector<32x128xf32> -> vector<32x128xf32>
    %c0_23 = arith.constant 0 : index
    %c0_24 = arith.constant 0 : index
    %c0_25 = arith.constant 0 : index
    %38 = vector.load %arg1[%c0_23, %c0_24, %c0_25] : memref<2x16x128xf32, #tpu.memory_space<vmem>>, vector<2x16x128xf32>
    %39 = vector.shape_cast %38 : vector<2x16x128xf32> to vector<32x128xf32>
    %40 = arith.addf %39, %37 : vector<32x128xf32>
    %c0_26 = arith.constant 0 : index
    %c0_27 = arith.constant 0 : index
    %41 = vector.load %arg8[%c0_26, %c0_27] : memref<1x128xf32, #tpu.memory_space<vmem>>, vector<1x128xf32>
    %42 = vector.broadcast %41 : vector<1x128xf32> to vector<32x128xf32>
    %43 = arith.addf %40, %42 : vector<32x128xf32>
    %c0_28 = arith.constant 0 : index
    %c0_29 = arith.constant 0 : index
    %44 = vector.load %arg18[%c0_28, %c0_29] : memref<32x128xf32, #tpu.memory_space<vmem>>, vector<32x128xf32>
    tpu.vector_store %arg18[%c0_28, %c0_29], %43 {strides = array<i32>} : memref<32x128xf32, #tpu.memory_space<vmem>>, vector<32x128xf32>,
    %cst_30 = arith.constant dense<0.000000e+00> : vector<32xf32>
    %45 = vector.multi_reduction <add>, %43, %cst_30 [1] : vector<32x128xf32> to vector<32xf32>
    %46 = vector.shape_cast %45 : vector<32xf32> to vector<32x1xf32>
    %cst_31 = arith.constant 1.280000e+02 : f32
    %47 = vector.broadcast %cst_31 : f32 to vector<32x1xf32>
    %48 = arith.divf %46, %47 : vector<32x1xf32>
    %49 = vector.broadcast %48 : vector<32x1xf32> to vector<32x128xf32>
    %50 = arith.subf %43, %49 : vector<32x128xf32>
    %51 = arith.mulf %50, %50 : vector<32x128xf32>
    %cst_32 = arith.constant dense<0.000000e+00> : vector<32xf32>
    %52 = vector.multi_reduction <add>, %51, %cst_32 [1] : vector<32x128xf32> to vector<32xf32>
    %53 = vector.shape_cast %52 : vector<32xf32> to vector<32x1xf32>
    %cst_33 = arith.constant 1.280000e+02 : f32
    %54 = vector.broadcast %cst_33 : f32 to vector<32x1xf32>
    %55 = arith.divf %53, %54 : vector<32x1xf32>
    %56 = vector.broadcast %48 : vector<32x1xf32> to vector<32x128xf32>
    %57 = arith.subf %43, %56 : vector<32x128xf32>
    %cst_34 = arith.constant 9.99999974E-6 : f32
    %58 = vector.broadcast %cst_34 : f32 to vector<32x1xf32>
    %59 = arith.addf %55, %58 : vector<32x1xf32>
    %60 = math.rsqrt %59 : vector<32x1xf32>
    %61 = vector.broadcast %60 : vector<32x1xf32> to vector<32x128xf32>
    %62 = arith.mulf %57, %61 : vector<32x128xf32>
    %c0_35 = arith.constant 0 : index
    %c0_36 = arith.constant 0 : index
    %63 = vector.load %arg9[%c0_35, %c0_36] : memref<1x128xf32, #tpu.memory_space<vmem>>, vector<1x128xf32>
    %64 = vector.broadcast %63 : vector<1x128xf32> to vector<32x128xf32>
    %65 = arith.mulf %62, %64 : vector<32x128xf32>
    %c0_37 = arith.constant 0 : index
    %c0_38 = arith.constant 0 : index
    %66 = vector.load %arg10[%c0_37, %c0_38] : memref<1x128xf32, #tpu.memory_space<vmem>>, vector<1x128xf32>
    %67 = vector.broadcast %66 : vector<1x128xf32> to vector<32x128xf32>
    %68 = arith.addf %65, %67 : vector<32x128xf32>
    %69 = arith.truncf %68 : vector<32x128xf32> to vector<32x128xbf16>
    %cst_39 = arith.constant 0.000000e+00 : f32
    %70 = vector.broadcast %cst_39 : f32 to vector<32x128xf32>
    %c0_40 = arith.constant 0 : index
    %c0_41 = arith.constant 0 : index
    %71 = vector.load %arg11[%c0_40, %c0_41] : memref<128x512xbf16, #tpu.memory_space<vmem>>, vector<128x512xbf16>
    %cst_42 = arith.constant dense<0.000000e+00> : vector<32x512xf32>
    %72 = tpu.matmul %69, %71, %cst_42 {dimension_numbers = #tpu.dot_dimension_numbers<[1], [0], [0], [1], [0, 0, 1, 1], [], []>} : vector<32x128xbf16>, vector<128x512xbf16>, vector<32x512xf32> -> vector<32x512xf32>
    %c0_43 = arith.constant 0 : index
    %c0_44 = arith.constant 0 : index
    %73 = vector.load %arg12[%c0_43, %c0_44] : memref<1x512xf32, #tpu.memory_space<vmem>>, vector<1x512xf32>
    %74 = vector.broadcast %73 : vector<1x512xf32> to vector<32x512xf32>
    %75 = arith.addf %72, %74 : vector<32x512xf32>
    %cst_45 = arith.constant 1.702000e+00 : f32
    %76 = vector.broadcast %cst_45 : f32 to vector<32x512xf32>
    %77 = arith.mulf %76, %75 : vector<32x512xf32>
    %78 = arith.negf %77 : vector<32x512xf32>
    %79 = math.exp %78 : vector<32x512xf32>
    %cst_46 = arith.constant 1.000000e+00 : f32
    %80 = vector.broadcast %cst_46 : f32 to vector<32x512xf32>
    %81 = arith.addf %80, %79 : vector<32x512xf32>
    %82 = arith.divf %80, %81 : vector<32x512xf32>
    %83 = arith.mulf %75, %82 : vector<32x512xf32>
    %84 = arith.truncf %83 : vector<32x512xf32> to vector<32x512xbf16>
    %c0_47 = arith.constant 0 : index
    %c0_48 = arith.constant 0 : index
    %85 = vector.load %arg13[%c0_47, %c0_48] : memref<512x128xbf16, #tpu.memory_space<vmem>>, vector<512x128xbf16>
    %cst_49 = arith.constant dense<0.000000e+00> : vector<32x128xf32>
    %86 = tpu.matmul %84, %85, %cst_49 {dimension_numbers = #tpu.dot_dimension_numbers<[1], [0], [0], [1], [0, 0, 1, 1], [], []>} : vector<32x512xbf16>, vector<512x128xbf16>, vector<32x128xf32> -> vector<32x128xf32>
    %87 = arith.addf %70, %86 : vector<32x128xf32>
    %c0_50 = arith.constant 0 : index
    %c0_51 = arith.constant 0 : index
    %88 = vector.load %arg18[%c0_50, %c0_51] : memref<32x128xf32, #tpu.memory_space<vmem>>, vector<32x128xf32>
    %89 = arith.addf %88, %87 : vector<32x128xf32>
    %c0_52 = arith.constant 0 : index
    %c0_53 = arith.constant 0 : index
    %90 = vector.load %arg14[%c0_52, %c0_53] : memref<1x128xf32, #tpu.memory_space<vmem>>, vector<1x128xf32>
    %91 = vector.broadcast %90 : vector<1x128xf32> to vector<32x128xf32>
    %92 = arith.addf %89, %91 : vector<32x128xf32>
    %93 = vector.shape_cast %92 : vector<32x128xf32> to vector<2x16x128xf32>
    %c0_54 = arith.constant 0 : index
    %c0_55 = arith.constant 0 : index
    %c0_56 = arith.constant 0 : index
    %94 = vector.load %arg15[%c0_54, %c0_55, %c0_56] : memref<2x16x128xf32, #tpu.memory_space<vmem>>, vector<2x16x128xf32>
    tpu.vector_store %arg15[%c0_54, %c0_55, %c0_56], %93 {strides = array<i32>} : memref<2x16x128xf32, #tpu.memory_space<vmem>>, vector<2x16x128xf32>,
    return
  }
  func.func @transform_0(%arg0: i32) -> (i32, i32, i32) {
    %c0_i32 = arith.constant 0 : i32
    %c0_i32_0 = arith.constant 0 : i32
    %c0_i32_1 = arith.constant 0 : i32
    return %arg0, %c0_i32, %c0_i32_0 : i32, i32, i32
  }
  func.func @transform_1(%arg0: i32) -> (i32, i32, i32) {
    %c0_i32 = arith.constant 0 : i32
    %c0_i32_0 = arith.constant 0 : i32
    %c0_i32_1 = arith.constant 0 : i32
    return %arg0, %c0_i32, %c0_i32_0 : i32, i32, i32
  }
  func.func @transform_2(%arg0: i32) -> (i32, i32) {
    %c0_i32 = arith.constant 0 : i32
    %c0_i32_0 = arith.constant 0 : i32
    %c0_i32_1 = arith.constant 0 : i32
    return %c0_i32, %c0_i32_0 : i32, i32
  }
  func.func @transform_3(%arg0: i32) -> (i32, i32) {
    %c0_i32 = arith.constant 0 : i32
    %c0_i32_0 = arith.constant 0 : i32
    %c0_i32_1 = arith.constant 0 : i32
    return %c0_i32, %c0_i32_0 : i32, i32
  }
  func.func @transform_4(%arg0: i32) -> (i32, i32) {
    %c0_i32 = arith.constant 0 : i32
    %c0_i32_0 = arith.constant 0 : i32
    %c0_i32_1 = arith.constant 0 : i32
    return %c0_i32, %c0_i32_0 : i32, i32
  }
  func.func @transform_5(%arg0: i32) -> (i32, i32) {
    %c0_i32 = arith.constant 0 : i32
    %c0_i32_0 = arith.constant 0 : i32
    %c0_i32_1 = arith.constant 0 : i32
    return %c0_i32, %c0_i32_0 : i32, i32
  }
  func.func @transform_6(%arg0: i32) -> (i32, i32) {
    %c0_i32 = arith.constant 0 : i32
    %c0_i32_0 = arith.constant 0 : i32
    %c0_i32_1 = arith.constant 0 : i32
    return %c0_i32, %c0_i32_0 : i32, i32
  }
  func.func @transform_7(%arg0: i32) -> (i32, i32) {
    %c0_i32 = arith.constant 0 : i32
    %c0_i32_0 = arith.constant 0 : i32
    %c0_i32_1 = arith.constant 0 : i32
    return %c0_i32, %c0_i32_0 : i32, i32
  }
  func.func @transform_8(%arg0: i32) -> (i32, i32) {
    %c0_i32 = arith.constant 0 : i32
    %c0_i32_0 = arith.constant 0 : i32
    %c0_i32_1 = arith.constant 0 : i32
    return %c0_i32, %c0_i32_0 : i32, i32
  }
  func.func @transform_9(%arg0: i32) -> (i32, i32) {
    %c0_i32 = arith.constant 0 : i32
    %c0_i32_0 = arith.constant 0 : i32
    %c0_i32_1 = arith.constant 0 : i32
    return %c0_i32, %c0_i32_0 : i32, i32
  }
  func.func @transform_10(%arg0: i32) -> (i32, i32) {
    %c0_i32 = arith.constant 0 : i32
    %c0_i32_0 = arith.constant 0 : i32
    %c0_i32_1 = arith.constant 0 : i32
    return %c0_i32, %c0_i32_0 : i32, i32
  }
  func.func @transform_11(%arg0: i32) -> (i32, i32) {
    %c0_i32 = arith.constant 0 : i32
    %c0_i32_0 = arith.constant 0 : i32
    %c0_i32_1 = arith.constant 0 : i32
    return %c0_i32, %c0_i32_0 : i32, i32
  }
  func.func @transform_12(%arg0: i32) -> (i32, i32) {
    %c0_i32 = arith.constant 0 : i32
    %c0_i32_0 = arith.constant 0 : i32
    %c0_i32_1 = arith.constant 0 : i32
    return %c0_i32, %c0_i32_0 : i32, i32
  }
  func.func @transform_13(%arg0: i32) -> (i32, i32) {
    %c0_i32 = arith.constant 0 : i32
    %c0_i32_0 = arith.constant 0 : i32
    %c0_i32_1 = arith.constant 0 : i32
    return %c0_i32, %c0_i32_0 : i32, i32
  }
  func.func @transform_14(%arg0: i32) -> (i32, i32, i32) {
    %c0_i32 = arith.constant 0 : i32
    %c0_i32_0 = arith.constant 0 : i32
    %c0_i32_1 = arith.constant 0 : i32
    return %arg0, %c0_i32, %c0_i32_0 : i32, i32, i32
  }
}

module attributes {stable_mosaic.version = 11 : i64} {
  func.func @_resblock_kernel(%arg0: i32, %arg1: memref<2x16x128xf32, #tpu.memory_space<vmem>>, %arg2: memref<2x16x16xf32, #tpu.memory_space<vmem>>, %arg3: memref<1x128xf32, #tpu.memory_space<vmem>>, %arg4: memref<1x128xf32, #tpu.memory_space<vmem>>, %arg5: memref<128x384xbf16, #tpu.memory_space<vmem>>, %arg6: memref<1x384xf32, #tpu.memory_space<vmem>>, %arg7: memref<128x128xbf16, #tpu.memory_space<vmem>>, %arg8: memref<1x128xf32, #tpu.memory_space<vmem>>, %arg9: memref<1x128xf32, #tpu.memory_space<vmem>>, %arg10: memref<1x128xf32, #tpu.memory_space<vmem>>, %arg11: memref<128x512xbf16, #tpu.memory_space<vmem>>, %arg12: memref<1x512xf32, #tpu.memory_space<vmem>>, %arg13: memref<512x128xbf16, #tpu.memory_space<vmem>>, %arg14: memref<1x128xf32, #tpu.memory_space<vmem>>, %arg15: memref<2x16x128xf32, #tpu.memory_space<vmem>>, %arg16: memref<32x384xbf16, #tpu.memory_space<vmem>>, %arg17: memref<32x128xbf16, #tpu.memory_space<vmem>>, %arg18: memref<32x128xf32, #tpu.memory_space<vmem>>) attributes {dimension_semantics = [#tpu.dimension_semantics<parallel>], iteration_bounds = array<i64: 2>, scalar_prefetch = 0 : i64, scratch_operands = 3 : i64, tpu.core_type = #tpu.core_type<tc>, window_params = [{transform_indices = @transform_0, window_bounds = array<i64: 2, 16, 128>}, {transform_indices = @transform_1, window_bounds = array<i64: 2, 16, 16>}, {pipeline_mode = #tpu.pipeline_mode<synchronous>, transform_indices = @transform_2, window_bounds = array<i64: 1, 128>}, {pipeline_mode = #tpu.pipeline_mode<synchronous>, transform_indices = @transform_3, window_bounds = array<i64: 1, 128>}, {pipeline_mode = #tpu.pipeline_mode<synchronous>, transform_indices = @transform_4, window_bounds = array<i64: 128, 384>}, {pipeline_mode = #tpu.pipeline_mode<synchronous>, transform_indices = @transform_5, window_bounds = array<i64: 1, 384>}, {pipeline_mode = #tpu.pipeline_mode<synchronous>, transform_indices = @transform_6, window_bounds = array<i64: 128, 128>}, {pipeline_mode = #tpu.pipeline_mode<synchronous>, transform_indices = @transform_7, window_bounds = array<i64: 1, 128>}, {pipeline_mode = #tpu.pipeline_mode<synchronous>, transform_indices = @transform_8, window_bounds = array<i64: 1, 128>}, {pipeline_mode = #tpu.pipeline_mode<synchronous>, transform_indices = @transform_9, window_bounds = array<i64: 1, 128>}, {pipeline_mode = #tpu.pipeline_mode<synchronous>, transform_indices = @transform_10, window_bounds = array<i64: 128, 512>}, {pipeline_mode = #tpu.pipeline_mode<synchronous>, transform_indices = @transform_11, window_bounds = array<i64: 1, 512>}, {pipeline_mode = #tpu.pipeline_mode<synchronous>, transform_indices = @transform_12, window_bounds = array<i64: 512, 128>}, {pipeline_mode = #tpu.pipeline_mode<synchronous>, transform_indices = @transform_13, window_bounds = array<i64: 1, 128>}, {transform_indices = @transform_14, window_bounds = array<i64: 2, 16, 128>}]} {
    %c0 = arith.constant 0 : index
    %c0_0 = arith.constant 0 : index
    %c0_1 = arith.constant 0 : index
    %0 = vector.load %arg1[%c0, %c0_0, %c0_1] : memref<2x16x128xf32, #tpu.memory_space<vmem>>, vector<2x16x128xf32>
    %1 = vector.shape_cast %0 : vector<2x16x128xf32> to vector<32x128xf32>
    %cst = arith.constant dense<0.000000e+00> : vector<32xf32>
    %2 = vector.multi_reduction <add>, %1, %cst [1] : vector<32x128xf32> to vector<32xf32>
    %3 = vector.shape_cast %2 : vector<32xf32> to vector<32x1xf32>
    %cst_2 = arith.constant 1.280000e+02 : f32
    %4 = vector.broadcast %cst_2 : f32 to vector<32x1xf32>
    %5 = arith.divf %3, %4 : vector<32x1xf32>
    %6 = vector.broadcast %5 : vector<32x1xf32> to vector<32x128xf32>
    %7 = arith.subf %1, %6 : vector<32x128xf32>
    %8 = arith.mulf %7, %7 : vector<32x128xf32>
    %cst_3 = arith.constant dense<0.000000e+00> : vector<32xf32>
    %9 = vector.multi_reduction <add>, %8, %cst_3 [1] : vector<32x128xf32> to vector<32xf32>
    %10 = vector.shape_cast %9 : vector<32xf32> to vector<32x1xf32>
    %cst_4 = arith.constant 1.280000e+02 : f32
    %11 = vector.broadcast %cst_4 : f32 to vector<32x1xf32>
    %12 = arith.divf %10, %11 : vector<32x1xf32>
    %13 = vector.broadcast %5 : vector<32x1xf32> to vector<32x128xf32>
    %14 = arith.subf %1, %13 : vector<32x128xf32>
    %cst_5 = arith.constant 9.99999974E-6 : f32
    %15 = vector.broadcast %cst_5 : f32 to vector<32x1xf32>
    %16 = arith.addf %12, %15 : vector<32x1xf32>
    %17 = math.rsqrt %16 : vector<32x1xf32>
    %18 = vector.broadcast %17 : vector<32x1xf32> to vector<32x128xf32>
    %19 = arith.mulf %14, %18 : vector<32x128xf32>
    %c0_6 = arith.constant 0 : index
    %c0_7 = arith.constant 0 : index
    %20 = vector.load %arg3[%c0_6, %c0_7] : memref<1x128xf32, #tpu.memory_space<vmem>>, vector<1x128xf32>
    %21 = vector.broadcast %20 : vector<1x128xf32> to vector<32x128xf32>
    %22 = arith.mulf %19, %21 : vector<32x128xf32>
    %c0_8 = arith.constant 0 : index
    %c0_9 = arith.constant 0 : index
    %23 = vector.load %arg4[%c0_8, %c0_9] : memref<1x128xf32, #tpu.memory_space<vmem>>, vector<1x128xf32>
    %24 = vector.broadcast %23 : vector<1x128xf32> to vector<32x128xf32>
    %25 = arith.addf %22, %24 : vector<32x128xf32>
    %26 = arith.truncf %25 : vector<32x128xf32> to vector<32x128xbf16>
    %c0_10 = arith.constant 0 : index
    %c0_11 = arith.constant 0 : index
    %27 = vector.load %arg5[%c0_10, %c0_11] : memref<128x384xbf16, #tpu.memory_space<vmem>>, vector<128x384xbf16>
    %cst_12 = arith.constant dense<0.000000e+00> : vector<32x384xf32>
    %28 = tpu.matmul %26, %27, %cst_12 {dimension_numbers = #tpu.dot_dimension_numbers<[1], [0], [0], [1], [0, 0, 1, 1], [], []>} : vector<32x128xbf16>, vector<128x384xbf16>, vector<32x384xf32> -> vector<32x384xf32>
    %c0_13 = arith.constant 0 : index
    %c0_14 = arith.constant 0 : index
    %29 = vector.load %arg6[%c0_13, %c0_14] : memref<1x384xf32, #tpu.memory_space<vmem>>, vector<1x384xf32>
    %30 = vector.broadcast %29 : vector<1x384xf32> to vector<32x384xf32>
    %31 = arith.addf %28, %30 : vector<32x384xf32>
    %32 = arith.truncf %31 : vector<32x384xf32> to vector<32x384xbf16>
    %c0_15 = arith.constant 0 : index
    %c0_16 = arith.constant 0 : index
    %33 = vector.load %arg16[%c0_15, %c0_16] : memref<32x384xbf16, #tpu.memory_space<vmem>>, vector<32x384xbf16>
    tpu.vector_store %arg16[%c0_15, %c0_16], %32 {strides = array<i32>} : memref<32x384xbf16, #tpu.memory_space<vmem>>, vector<32x384xbf16>,
    %c0_i32 = arith.constant 0 : i32
    %c2_i32 = arith.constant 2 : i32
    %34 = arith.addi %c0_i32, %c2_i32 : i32
    %c1_i32 = arith.constant 1 : i32
    scf.for %arg19 = %c0_i32 to %34 step %c1_i32  : i32 {
      %c16_i32 = arith.constant 16 : i32
      %95 = arith.muli %arg19, %c16_i32 : i32
      %96 = tpu.assume_multiple %95, 8 : i32
      %97 = arith.index_cast %arg19 : i32 to index
      %c0_57 = arith.constant 0 : index
      %c0_58 = arith.constant 0 : index
      %98 = vector.load %arg2[%97, %c0_57, %c0_58] : memref<2x16x16xf32, #tpu.memory_space<vmem>>, vector<1x16x16xf32>
      %99 = vector.shape_cast %98 : vector<1x16x16xf32> to vector<16x16xf32>
      %100 = arith.index_cast %96 : i32 to index
      %c0_59 = arith.constant 0 : index
      %101 = vector.load %arg16[%100, %c0_59] : memref<32x384xbf16, #tpu.memory_space<vmem>>, vector<16x32xbf16>
      %102 = arith.index_cast %96 : i32 to index
      %c128 = arith.constant 128 : index
      %103 = vector.load %arg16[%102, %c128] : memref<32x384xbf16, #tpu.memory_space<vmem>>, vector<16x32xbf16>
      %104 = arith.index_cast %96 : i32 to index
      %c256 = arith.constant 256 : index
      %105 = vector.load %arg16[%104, %c256] : memref<32x384xbf16, #tpu.memory_space<vmem>>, vector<16x32xbf16>
      %cst_60 = arith.constant dense<0.000000e+00> : vector<16x16xf32>
      %106 = tpu.matmul %101, %103, %cst_60 {dimension_numbers = #tpu.dot_dimension_numbers<[1], [1], [0], [0], [0, 0, 1, 0], [], []>} : vector<16x32xbf16>, vector<16x32xbf16>, vector<16x16xf32> -> vector<16x16xf32>
      %cst_61 = arith.constant 0.176776692 : f32
      %107 = vector.broadcast %cst_61 : f32 to vector<16x16xf32>
      %108 = arith.mulf %106, %107 : vector<16x16xf32>
      %109 = arith.addf %108, %99 : vector<16x16xf32>
      %cst_62 = arith.constant dense<0xFF800000> : vector<16xf32>
      %110 = vector.multi_reduction <maximumf>, %109, %cst_62 [1] : vector<16x16xf32> to vector<16xf32>
      %111 = vector.shape_cast %110 : vector<16xf32> to vector<16x1xf32>
      %112 = vector.broadcast %111 : vector<16x1xf32> to vector<16x16xf32>
      %113 = arith.subf %109, %112 : vector<16x16xf32>
      %114 = math.exp %113 : vector<16x16xf32>
      %cst_63 = arith.constant dense<0.000000e+00> : vector<16xf32>
      %115 = vector.multi_reduction <add>, %114, %cst_63 [1] : vector<16x16xf32> to vector<16xf32>
      %116 = vector.shape_cast %115 : vector<16xf32> to vector<16x1xf32>
      %117 = tpu.reciprocal %116 {approx = true} : vector<16x1xf32> -> vector<16x1xf32>
      %118 = vector.broadcast %117 : vector<16x1xf32> to vector<16x16xf32>
      %119 = arith.mulf %114, %118 : vector<16x16xf32>
      %120 = arith.truncf %119 : vector<16x16xf32> to vector<16x16xbf16>
      %cst_64 = arith.constant dense<0.000000e+00> : vector<16x32xf32>
      %121 = tpu.matmul %120, %105, %cst_64 {dimension_numbers = #tpu.dot_dimension_numbers<[1], [0], [0], [1], [0, 0, 1, 1], [], []>} : vector<16x16xbf16>, vector<16x32xbf16>, vector<16x32xf32> -> vector<16x32xf32>
      %122 = arith.truncf %121 : vector<16x32xf32> to vector<16x32xbf16>
      %123 = arith.index_cast %96 : i32 to index
      %c0_65 = arith.constant 0 : index
      %124 = vector.load %arg17[%123, %c0_65] : memref<32x128xbf16, #tpu.memory_space<vmem>>, vector<16x32xbf16>
      tpu.vector_store %arg17[%123, %c0_65], %122 {strides = array<i32>} : memref<32x128xbf16, #tpu.memory_space<vmem>>, vector<16x32xbf16>,
      %125 = arith.index_cast %96 : i32 to index
      %c32 = arith.constant 32 : index
      %126 = vector.load %arg16[%125, %c32] : memref<32x384xbf16, #tpu.memory_space<vmem>>, vector<16x32xbf16>
      %127 = arith.index_cast %96 : i32 to index
      %c160 = arith.constant 160 : index
      %128 = vector.load %arg16[%127, %c160] : memref<32x384xbf16, #tpu.memory_space<vmem>>, vector<16x32xbf16>
      %129 = arith.index_cast %96 : i32 to index
      %c288 = arith.constant 288 : index
      %130 = vector.load %arg16[%129, %c288] : memref<32x384xbf16, #tpu.memory_space<vmem>>, vector<16x32xbf16>
      %cst_66 = arith.constant dense<0.000000e+00> : vector<16x16xf32>
      %131 = tpu.matmul %126, %128, %cst_66 {dimension_numbers = #tpu.dot_dimension_numbers<[1], [1], [0], [0], [0, 0, 1, 0], [], []>} : vector<16x32xbf16>, vector<16x32xbf16>, vector<16x16xf32> -> vector<16x16xf32>
      %cst_67 = arith.constant 0.176776692 : f32
      %132 = vector.broadcast %cst_67 : f32 to vector<16x16xf32>
      %133 = arith.mulf %131, %132 : vector<16x16xf32>
      %134 = arith.addf %133, %99 : vector<16x16xf32>
      %cst_68 = arith.constant dense<0xFF800000> : vector<16xf32>
      %135 = vector.multi_reduction <maximumf>, %134, %cst_68 [1] : vector<16x16xf32> to vector<16xf32>
      %136 = vector.shape_cast %135 : vector<16xf32> to vector<16x1xf32>
      %137 = vector.broadcast %136 : vector<16x1xf32> to vector<16x16xf32>
      %138 = arith.subf %134, %137 : vector<16x16xf32>
      %139 = math.exp %138 : vector<16x16xf32>
      %cst_69 = arith.constant dense<0.000000e+00> : vector<16xf32>
      %140 = vector.multi_reduction <add>, %139, %cst_69 [1] : vector<16x16xf32> to vector<16xf32>
      %141 = vector.shape_cast %140 : vector<16xf32> to vector<16x1xf32>
      %142 = tpu.reciprocal %141 {approx = true} : vector<16x1xf32> -> vector<16x1xf32>
      %143 = vector.broadcast %142 : vector<16x1xf32> to vector<16x16xf32>
      %144 = arith.mulf %139, %143 : vector<16x16xf32>
      %145 = arith.truncf %144 : vector<16x16xf32> to vector<16x16xbf16>
      %cst_70 = arith.constant dense<0.000000e+00> : vector<16x32xf32>
      %146 = tpu.matmul %145, %130, %cst_70 {dimension_numbers = #tpu.dot_dimension_numbers<[1], [0], [0], [1], [0, 0, 1, 1], [], []>} : vector<16x16xbf16>, vector<16x32xbf16>, vector<16x32xf32> -> vector<16x32xf32>
      %147 = arith.truncf %146 : vector<16x32xf32> to vector<16x32xbf16>
      %148 = arith.index_cast %96 : i32 to index
      %c32_71 = arith.constant 32 : index
      %149 = vector.load %arg17[%148, %c32_71] : memref<32x128xbf16, #tpu.memory_space<vmem>>, vector<16x32xbf16>
      tpu.vector_store %arg17[%148, %c32_71], %147 {strides = array<i32>} : memref<32x128xbf16, #tpu.memory_space<vmem>>, vector<16x32xbf16>,
      %150 = arith.index_cast %96 : i32 to index
      %c64 = arith.constant 64 : index
      %151 = vector.load %arg16[%150, %c64] : memref<32x384xbf16, #tpu.memory_space<vmem>>, vector<16x32xbf16>
      %152 = arith.index_cast %96 : i32 to index
      %c192 = arith.constant 192 : index
      %153 = vector.load %arg16[%152, %c192] : memref<32x384xbf16, #tpu.memory_space<vmem>>, vector<16x32xbf16>
      %154 = arith.index_cast %96 : i32 to index
      %c320 = arith.constant 320 : index
      %155 = vector.load %arg16[%154, %c320] : memref<32x384xbf16, #tpu.memory_space<vmem>>, vector<16x32xbf16>
      %cst_72 = arith.constant dense<0.000000e+00> : vector<16x16xf32>
      %156 = tpu.matmul %151, %153, %cst_72 {dimension_numbers = #tpu.dot_dimension_numbers<[1], [1], [0], [0], [0, 0, 1, 0], [], []>} : vector<16x32xbf16>, vector<16x32xbf16>, vector<16x16xf32> -> vector<16x16xf32>
      %cst_73 = arith.constant 0.176776692 : f32
      %157 = vector.broadcast %cst_73 : f32 to vector<16x16xf32>
      %158 = arith.mulf %156, %157 : vector<16x16xf32>
      %159 = arith.addf %158, %99 : vector<16x16xf32>
      %cst_74 = arith.constant dense<0xFF800000> : vector<16xf32>
      %160 = vector.multi_reduction <maximumf>, %159, %cst_74 [1] : vector<16x16xf32> to vector<16xf32>
      %161 = vector.shape_cast %160 : vector<16xf32> to vector<16x1xf32>
      %162 = vector.broadcast %161 : vector<16x1xf32> to vector<16x16xf32>
      %163 = arith.subf %159, %162 : vector<16x16xf32>
      %164 = math.exp %163 : vector<16x16xf32>
      %cst_75 = arith.constant dense<0.000000e+00> : vector<16xf32>
      %165 = vector.multi_reduction <add>, %164, %cst_75 [1] : vector<16x16xf32> to vector<16xf32>
      %166 = vector.shape_cast %165 : vector<16xf32> to vector<16x1xf32>
      %167 = tpu.reciprocal %166 {approx = true} : vector<16x1xf32> -> vector<16x1xf32>
      %168 = vector.broadcast %167 : vector<16x1xf32> to vector<16x16xf32>
      %169 = arith.mulf %164, %168 : vector<16x16xf32>
      %170 = arith.truncf %169 : vector<16x16xf32> to vector<16x16xbf16>
      %cst_76 = arith.constant dense<0.000000e+00> : vector<16x32xf32>
      %171 = tpu.matmul %170, %155, %cst_76 {dimension_numbers = #tpu.dot_dimension_numbers<[1], [0], [0], [1], [0, 0, 1, 1], [], []>} : vector<16x16xbf16>, vector<16x32xbf16>, vector<16x32xf32> -> vector<16x32xf32>
      %172 = arith.truncf %171 : vector<16x32xf32> to vector<16x32xbf16>
      %173 = arith.index_cast %96 : i32 to index
      %c64_77 = arith.constant 64 : index
      %174 = vector.load %arg17[%173, %c64_77] : memref<32x128xbf16, #tpu.memory_space<vmem>>, vector<16x32xbf16>
      tpu.vector_store %arg17[%173, %c64_77], %172 {strides = array<i32>} : memref<32x128xbf16, #tpu.memory_space<vmem>>, vector<16x32xbf16>,
      %175 = arith.index_cast %96 : i32 to index
      %c96 = arith.constant 96 : index
      %176 = vector.load %arg16[%175, %c96] : memref<32x384xbf16, #tpu.memory_space<vmem>>, vector<16x32xbf16>
      %177 = arith.index_cast %96 : i32 to index
      %c224 = arith.constant 224 : index
      %178 = vector.load %arg16[%177, %c224] : memref<32x384xbf16, #tpu.memory_space<vmem>>, vector<16x32xbf16>
      %179 = arith.index_cast %96 : i32 to index
      %c352 = arith.constant 352 : index
      %180 = vector.load %arg16[%179, %c352] : memref<32x384xbf16, #tpu.memory_space<vmem>>, vector<16x32xbf16>
      %cst_78 = arith.constant dense<0.000000e+00> : vector<16x16xf32>
      %181 = tpu.matmul %176, %178, %cst_78 {dimension_numbers = #tpu.dot_dimension_numbers<[1], [1], [0], [0], [0, 0, 1, 0], [], []>} : vector<16x32xbf16>, vector<16x32xbf16>, vector<16x16xf32> -> vector<16x16xf32>
      %cst_79 = arith.constant 0.176776692 : f32
      %182 = vector.broadcast %cst_79 : f32 to vector<16x16xf32>
      %183 = arith.mulf %181, %182 : vector<16x16xf32>
      %184 = arith.addf %183, %99 : vector<16x16xf32>
      %cst_80 = arith.constant dense<0xFF800000> : vector<16xf32>
      %185 = vector.multi_reduction <maximumf>, %184, %cst_80 [1] : vector<16x16xf32> to vector<16xf32>
      %186 = vector.shape_cast %185 : vector<16xf32> to vector<16x1xf32>
      %187 = vector.broadcast %186 : vector<16x1xf32> to vector<16x16xf32>
      %188 = arith.subf %184, %187 : vector<16x16xf32>
      %189 = math.exp %188 : vector<16x16xf32>
      %cst_81 = arith.constant dense<0.000000e+00> : vector<16xf32>
      %190 = vector.multi_reduction <add>, %189, %cst_81 [1] : vector<16x16xf32> to vector<16xf32>
      %191 = vector.shape_cast %190 : vector<16xf32> to vector<16x1xf32>
      %192 = tpu.reciprocal %191 {approx = true} : vector<16x1xf32> -> vector<16x1xf32>
      %193 = vector.broadcast %192 : vector<16x1xf32> to vector<16x16xf32>
      %194 = arith.mulf %189, %193 : vector<16x16xf32>
      %195 = arith.truncf %194 : vector<16x16xf32> to vector<16x16xbf16>
      %cst_82 = arith.constant dense<0.000000e+00> : vector<16x32xf32>
      %196 = tpu.matmul %195, %180, %cst_82 {dimension_numbers = #tpu.dot_dimension_numbers<[1], [0], [0], [1], [0, 0, 1, 1], [], []>} : vector<16x16xbf16>, vector<16x32xbf16>, vector<16x32xf32> -> vector<16x32xf32>
      %197 = arith.truncf %196 : vector<16x32xf32> to vector<16x32xbf16>
      %198 = arith.index_cast %96 : i32 to index
      %c96_83 = arith.constant 96 : index
      %199 = vector.load %arg17[%198, %c96_83] : memref<32x128xbf16, #tpu.memory_space<vmem>>, vector<16x32xbf16>
      tpu.vector_store %arg17[%198, %c96_83], %197 {strides = array<i32>} : memref<32x128xbf16, #tpu.memory_space<vmem>>, vector<16x32xbf16>,
    }
    %c2_i32_17 = arith.constant 2 : i32
    %c0_18 = arith.constant 0 : index
    %c0_19 = arith.constant 0 : index
    %35 = vector.load %arg17[%c0_18, %c0_19] : memref<32x128xbf16, #tpu.memory_space<vmem>>, vector<32x128xbf16>
    %c0_20 = arith.constant 0 : index
    %c0_21 = arith.constant 0 : index
    %36 = vector.load %arg7[%c0_20, %c0_21] : memref<128x128xbf16, #tpu.memory_space<vmem>>, vector<128x128xbf16>
    %cst_22 = arith.constant dense<0.000000e+00> : vector<32x128xf32>
    %37 = tpu.matmul %35, %36, %cst_22 {dimension_numbers = #tpu.dot_dimension_numbers<[1], [0], [0], [1], [0, 0, 1, 1], [], []>} : vector<32x128xbf16>, vector<128x128xbf16>, vector<32x128xf32> -> vector<32x128xf32>
    %c0_23 = arith.constant 0 : index
    %c0_24 = arith.constant 0 : index
    %c0_25 = arith.constant 0 : index
    %38 = vector.load %arg1[%c0_23, %c0_24, %c0_25] : memref<2x16x128xf32, #tpu.memory_space<vmem>>, vector<2x16x128xf32>
    %39 = vector.shape_cast %38 : vector<2x16x128xf32> to vector<32x128xf32>
    %40 = arith.addf %39, %37 : vector<32x128xf32>
    %c0_26 = arith.constant 0 : index
    %c0_27 = arith.constant 0 : index
    %41 = vector.load %arg8[%c0_26, %c0_27] : memref<1x128xf32, #tpu.memory_space<vmem>>, vector<1x128xf32>
    %42 = vector.broadcast %41 : vector<1x128xf32> to vector<32x128xf32>
    %43 = arith.addf %40, %42 : vector<32x128xf32>
    %c0_28 = arith.constant 0 : index
    %c0_29 = arith.constant 0 : index
    %44 = vector.load %arg18[%c0_28, %c0_29] : memref<32x128xf32, #tpu.memory_space<vmem>>, vector<32x128xf32>
    tpu.vector_store %arg18[%c0_28, %c0_29], %43 {strides = array<i32>} : memref<32x128xf32, #tpu.memory_space<vmem>>, vector<32x128xf32>,
    %cst_30 = arith.constant dense<0.000000e+00> : vector<32xf32>
    %45 = vector.multi_reduction <add>, %43, %cst_30 [1] : vector<32x128xf32> to vector<32xf32>
    %46 = vector.shape_cast %45 : vector<32xf32> to vector<32x1xf32>
    %cst_31 = arith.constant 1.280000e+02 : f32
    %47 = vector.broadcast %cst_31 : f32 to vector<32x1xf32>
    %48 = arith.divf %46, %47 : vector<32x1xf32>
    %49 = vector.broadcast %48 : vector<32x1xf32> to vector<32x128xf32>
    %50 = arith.subf %43, %49 : vector<32x128xf32>
    %51 = arith.mulf %50, %50 : vector<32x128xf32>
    %cst_32 = arith.constant dense<0.000000e+00> : vector<32xf32>
    %52 = vector.multi_reduction <add>, %51, %cst_32 [1] : vector<32x128xf32> to vector<32xf32>
    %53 = vector.shape_cast %52 : vector<32xf32> to vector<32x1xf32>
    %cst_33 = arith.constant 1.280000e+02 : f32
    %54 = vector.broadcast %cst_33 : f32 to vector<32x1xf32>
    %55 = arith.divf %53, %54 : vector<32x1xf32>
    %56 = vector.broadcast %48 : vector<32x1xf32> to vector<32x128xf32>
    %57 = arith.subf %43, %56 : vector<32x128xf32>
    %cst_34 = arith.constant 9.99999974E-6 : f32
    %58 = vector.broadcast %cst_34 : f32 to vector<32x1xf32>
    %59 = arith.addf %55, %58 : vector<32x1xf32>
    %60 = math.rsqrt %59 : vector<32x1xf32>
    %61 = vector.broadcast %60 : vector<32x1xf32> to vector<32x128xf32>
    %62 = arith.mulf %57, %61 : vector<32x128xf32>
    %c0_35 = arith.constant 0 : index
    %c0_36 = arith.constant 0 : index
    %63 = vector.load %arg9[%c0_35, %c0_36] : memref<1x128xf32, #tpu.memory_space<vmem>>, vector<1x128xf32>
    %64 = vector.broadcast %63 : vector<1x128xf32> to vector<32x128xf32>
    %65 = arith.mulf %62, %64 : vector<32x128xf32>
    %c0_37 = arith.constant 0 : index
    %c0_38 = arith.constant 0 : index
    %66 = vector.load %arg10[%c0_37, %c0_38] : memref<1x128xf32, #tpu.memory_space<vmem>>, vector<1x128xf32>
    %67 = vector.broadcast %66 : vector<1x128xf32> to vector<32x128xf32>
    %68 = arith.addf %65, %67 : vector<32x128xf32>
    %69 = arith.truncf %68 : vector<32x128xf32> to vector<32x128xbf16>
    %cst_39 = arith.constant 0.000000e+00 : f32
    %70 = vector.broadcast %cst_39 : f32 to vector<32x128xf32>
    %c0_40 = arith.constant 0 : index
    %c0_41 = arith.constant 0 : index
    %71 = vector.load %arg11[%c0_40, %c0_41] : memref<128x512xbf16, #tpu.memory_space<vmem>>, vector<128x512xbf16>
    %cst_42 = arith.constant dense<0.000000e+00> : vector<32x512xf32>
    %72 = tpu.matmul %69, %71, %cst_42 {dimension_numbers = #tpu.dot_dimension_numbers<[1], [0], [0], [1], [0, 0, 1, 1], [], []>} : vector<32x128xbf16>, vector<128x512xbf16>, vector<32x512xf32> -> vector<32x512xf32>
    %c0_43 = arith.constant 0 : index
    %c0_44 = arith.constant 0 : index
    %73 = vector.load %arg12[%c0_43, %c0_44] : memref<1x512xf32, #tpu.memory_space<vmem>>, vector<1x512xf32>
    %74 = vector.broadcast %73 : vector<1x512xf32> to vector<32x512xf32>
    %75 = arith.addf %72, %74 : vector<32x512xf32>
    %cst_45 = arith.constant 1.702000e+00 : f32
    %76 = vector.broadcast %cst_45 : f32 to vector<32x512xf32>
    %77 = arith.mulf %76, %75 : vector<32x512xf32>
    %78 = arith.negf %77 : vector<32x512xf32>
    %79 = math.exp %78 : vector<32x512xf32>
    %cst_46 = arith.constant 1.000000e+00 : f32
    %80 = vector.broadcast %cst_46 : f32 to vector<32x512xf32>
    %81 = arith.addf %80, %79 : vector<32x512xf32>
    %82 = arith.divf %80, %81 : vector<32x512xf32>
    %83 = arith.mulf %75, %82 : vector<32x512xf32>
    %84 = arith.truncf %83 : vector<32x512xf32> to vector<32x512xbf16>
    %c0_47 = arith.constant 0 : index
    %c0_48 = arith.constant 0 : index
    %85 = vector.load %arg13[%c0_47, %c0_48] : memref<512x128xbf16, #tpu.memory_space<vmem>>, vector<512x128xbf16>
    %cst_49 = arith.constant dense<0.000000e+00> : vector<32x128xf32>
    %86 = tpu.matmul %84, %85, %cst_49 {dimension_numbers = #tpu.dot_dimension_numbers<[1], [0], [0], [1], [0, 0, 1, 1], [], []>} : vector<32x512xbf16>, vector<512x128xbf16>, vector<32x128xf32> -> vector<32x128xf32>
    %87 = arith.addf %70, %86 : vector<32x128xf32>
    %c0_50 = arith.constant 0 : index
    %c0_51 = arith.constant 0 : index
    %88 = vector.load %arg18[%c0_50, %c0_51] : memref<32x128xf32, #tpu.memory_space<vmem>>, vector<32x128xf32>
    %89 = arith.addf %88, %87 : vector<32x128xf32>
    %c0_52 = arith.constant 0 : index
    %c0_53 = arith.constant 0 : index
    %90 = vector.load %arg14[%c0_52, %c0_53] : memref<1x128xf32, #tpu.memory_space<vmem>>, vector<1x128xf32>
    %91 = vector.broadcast %90 : vector<1x128xf32> to vector<32x128xf32>
    %92 = arith.addf %89, %91 : vector<32x128xf32>
    %93 = vector.shape_cast %92 : vector<32x128xf32> to vector<2x16x128xf32>
    %c0_54 = arith.constant 0 : index
    %c0_55 = arith.constant 0 : index
    %c0_56 = arith.constant 0 : index
    %94 = vector.load %arg15[%c0_54, %c0_55, %c0_56] : memref<2x16x128xf32, #tpu.memory_space<vmem>>, vector<2x16x128xf32>
    tpu.vector_store %arg15[%c0_54, %c0_55, %c0_56], %93 {strides = array<i32>} : memref<2x16x128xf32, #tpu.memory_space<vmem>>, vector<2x16x128xf32>,
    return
  }
  func.func @transform_0(%arg0: i32) -> (i32, i32, i32) {
    %c0_i32 = arith.constant 0 : i32
    %c0_i32_0 = arith.constant 0 : i32
    %c0_i32_1 = arith.constant 0 : i32
    return %arg0, %c0_i32, %c0_i32_0 : i32, i32, i32
  }
  func.func @transform_1(%arg0: i32) -> (i32, i32, i32) {
    %c0_i32 = arith.constant 0 : i32
    %c0_i32_0 = arith.constant 0 : i32
    %c0_i32_1 = arith.constant 0 : i32
    return %arg0, %c0_i32, %c0_i32_0 : i32, i32, i32
  }
  func.func @transform_2(%arg0: i32) -> (i32, i32) {
    %c0_i32 = arith.constant 0 : i32
    %c0_i32_0 = arith.constant 0 : i32
    %c0_i32_1 = arith.constant 0 : i32
    return %c0_i32, %c0_i32_0 : i32, i32
  }
  func.func @transform_3(%arg0: i32) -> (i32, i32) {
    %c0_i32 = arith.constant 0 : i32
    %c0_i32_0 = arith.constant 0 : i32
    %c0_i32_1 = arith.constant 0 : i32
    return %c0_i32, %c0_i32_0 : i32, i32
  }
  func.func @transform_4(%arg0: i32) -> (i32, i32) {
    %c0_i32 = arith.constant 0 : i32
    %c0_i32_0 = arith.constant 0 : i32
    %c0_i32_1 = arith.constant 0 : i32
    return %c0_i32, %c0_i32_0 : i32, i32
  }
  func.func @transform_5(%arg0: i32) -> (i32, i32) {
    %c0_i32 = arith.constant 0 : i32
    %c0_i32_0 = arith.constant 0 : i32
    %c0_i32_1 = arith.constant 0 : i32
    return %c0_i32, %c0_i32_0 : i32, i32
  }
  func.func @transform_6(%arg0: i32) -> (i32, i32) {
    %c0_i32 = arith.constant 0 : i32
    %c0_i32_0 = arith.constant 0 : i32
    %c0_i32_1 = arith.constant 0 : i32
    return %c0_i32, %c0_i32_0 : i32, i32
  }
  func.func @transform_7(%arg0: i32) -> (i32, i32) {
    %c0_i32 = arith.constant 0 : i32
    %c0_i32_0 = arith.constant 0 : i32
    %c0_i32_1 = arith.constant 0 : i32
    return %c0_i32, %c0_i32_0 : i32, i32
  }
  func.func @transform_8(%arg0: i32) -> (i32, i32) {
    %c0_i32 = arith.constant 0 : i32
    %c0_i32_0 = arith.constant 0 : i32
    %c0_i32_1 = arith.constant 0 : i32
    return %c0_i32, %c0_i32_0 : i32, i32
  }
  func.func @transform_9(%arg0: i32) -> (i32, i32) {
    %c0_i32 = arith.constant 0 : i32
    %c0_i32_0 = arith.constant 0 : i32
    %c0_i32_1 = arith.constant 0 : i32
    return %c0_i32, %c0_i32_0 : i32, i32
  }
  func.func @transform_10(%arg0: i32) -> (i32, i32) {
    %c0_i32 = arith.constant 0 : i32
    %c0_i32_0 = arith.constant 0 : i32
    %c0_i32_1 = arith.constant 0 : i32
    return %c0_i32, %c0_i32_0 : i32, i32
  }
  func.func @transform_11(%arg0: i32) -> (i32, i32) {
    %c0_i32 = arith.constant 0 : i32
    %c0_i32_0 = arith.constant 0 : i32
    %c0_i32_1 = arith.constant 0 : i32
    return %c0_i32, %c0_i32_0 : i32, i32
  }
  func.func @transform_12(%arg0: i32) -> (i32, i32) {
    %c0_i32 = arith.constant 0 : i32
    %c0_i32_0 = arith.constant 0 : i32
    %c0_i32_1 = arith.constant 0 : i32
    return %c0_i32, %c0_i32_0 : i32, i32
  }
  func.func @transform_13(%arg0: i32) -> (i32, i32) {
    %c0_i32 = arith.constant 0 : i32
    %c0_i32_0 = arith.constant 0 : i32
    %c0_i32_1 = arith.constant 0 : i32
    return %c0_i32, %c0_i32_0 : i32, i32
  }
  func.func @transform_14(%arg0: i32) -> (i32, i32, i32) {
    %c0_i32 = arith.constant 0 : i32
    %c0_i32_0 = arith.constant 0 : i32
    %c0_i32_1 = arith.constant 0 : i32
    return %arg0, %c0_i32, %c0_i32_0 : i32, i32, i32
  }
}

module attributes {stable_mosaic.version = 11 : i64} {
  func.func @_final_kernel(%arg0: i32, %arg1: memref<4x128xf32, #tpu.memory_space<vmem>>, %arg2: memref<1x128xf32, #tpu.memory_space<vmem>>, %arg3: memref<1x128xf32, #tpu.memory_space<vmem>>, %arg4: memref<128x64xbf16, #tpu.memory_space<vmem>>, %arg5: memref<4x64xf32, #tpu.memory_space<vmem>>) attributes {dimension_semantics = [#tpu.dimension_semantics<arbitrary>], iteration_bounds = array<i64: 1>, scalar_prefetch = 0 : i64, scratch_operands = 0 : i64, tpu.core_type = #tpu.core_type<tc>, window_params = [{pipeline_mode = #tpu.pipeline_mode<synchronous>, transform_indices = @transform_0, window_bounds = array<i64: 4, 128>}, {pipeline_mode = #tpu.pipeline_mode<synchronous>, transform_indices = @transform_1, window_bounds = array<i64: 1, 128>}, {pipeline_mode = #tpu.pipeline_mode<synchronous>, transform_indices = @transform_2, window_bounds = array<i64: 1, 128>}, {pipeline_mode = #tpu.pipeline_mode<synchronous>, transform_indices = @transform_3, window_bounds = array<i64: 128, 64>}, {pipeline_mode = #tpu.pipeline_mode<synchronous>, transform_indices = @transform_4, window_bounds = array<i64: 4, 64>}]} {
    %c0 = arith.constant 0 : index
    %c0_0 = arith.constant 0 : index
    %0 = vector.load %arg1[%c0, %c0_0] : memref<4x128xf32, #tpu.memory_space<vmem>>, vector<4x128xf32>
    %cst = arith.constant dense<0.000000e+00> : vector<4xf32>
    %1 = vector.multi_reduction <add>, %0, %cst [1] : vector<4x128xf32> to vector<4xf32>
    %2 = vector.shape_cast %1 : vector<4xf32> to vector<4x1xf32>
    %cst_1 = arith.constant 1.280000e+02 : f32
    %3 = vector.broadcast %cst_1 : f32 to vector<4x1xf32>
    %4 = arith.divf %2, %3 : vector<4x1xf32>
    %5 = vector.broadcast %4 : vector<4x1xf32> to vector<4x128xf32>
    %6 = arith.subf %0, %5 : vector<4x128xf32>
    %7 = arith.mulf %6, %6 : vector<4x128xf32>
    %cst_2 = arith.constant dense<0.000000e+00> : vector<4xf32>
    %8 = vector.multi_reduction <add>, %7, %cst_2 [1] : vector<4x128xf32> to vector<4xf32>
    %9 = vector.shape_cast %8 : vector<4xf32> to vector<4x1xf32>
    %cst_3 = arith.constant 1.280000e+02 : f32
    %10 = vector.broadcast %cst_3 : f32 to vector<4x1xf32>
    %11 = arith.divf %9, %10 : vector<4x1xf32>
    %12 = vector.broadcast %4 : vector<4x1xf32> to vector<4x128xf32>
    %13 = arith.subf %0, %12 : vector<4x128xf32>
    %cst_4 = arith.constant 9.99999974E-6 : f32
    %14 = vector.broadcast %cst_4 : f32 to vector<4x1xf32>
    %15 = arith.addf %11, %14 : vector<4x1xf32>
    %16 = math.rsqrt %15 : vector<4x1xf32>
    %17 = vector.broadcast %16 : vector<4x1xf32> to vector<4x128xf32>
    %18 = arith.mulf %13, %17 : vector<4x128xf32>
    %c0_5 = arith.constant 0 : index
    %c0_6 = arith.constant 0 : index
    %19 = vector.load %arg2[%c0_5, %c0_6] : memref<1x128xf32, #tpu.memory_space<vmem>>, vector<1x128xf32>
    %20 = vector.broadcast %19 : vector<1x128xf32> to vector<4x128xf32>
    %21 = arith.mulf %18, %20 : vector<4x128xf32>
    %c0_7 = arith.constant 0 : index
    %c0_8 = arith.constant 0 : index
    %22 = vector.load %arg3[%c0_7, %c0_8] : memref<1x128xf32, #tpu.memory_space<vmem>>, vector<1x128xf32>
    %23 = vector.broadcast %22 : vector<1x128xf32> to vector<4x128xf32>
    %24 = arith.addf %21, %23 : vector<4x128xf32>
    %25 = arith.truncf %24 : vector<4x128xf32> to vector<4x128xbf16>
    %c0_9 = arith.constant 0 : index
    %c0_10 = arith.constant 0 : index
    %26 = vector.load %arg4[%c0_9, %c0_10] : memref<128x64xbf16, #tpu.memory_space<vmem>>, vector<128x64xbf16>
    %cst_11 = arith.constant dense<0.000000e+00> : vector<4x64xf32>
    %27 = tpu.matmul %25, %26, %cst_11 {dimension_numbers = #tpu.dot_dimension_numbers<[1], [0], [0], [1], [0, 0, 1, 1], [], []>} : vector<4x128xbf16>, vector<128x64xbf16>, vector<4x64xf32> -> vector<4x64xf32>
    %c0_12 = arith.constant 0 : index
    %c0_13 = arith.constant 0 : index
    %28 = vector.load %arg5[%c0_12, %c0_13] : memref<4x64xf32, #tpu.memory_space<vmem>>, vector<4x64xf32>
    tpu.vector_store %arg5[%c0_12, %c0_13], %27 {strides = array<i32>} : memref<4x64xf32, #tpu.memory_space<vmem>>, vector<4x64xf32>,
    return
  }
  func.func @transform_0(%arg0: i32) -> (i32, i32) {
    %c0_i32 = arith.constant 0 : i32
    %c0_i32_0 = arith.constant 0 : i32
    %c0_i32_1 = arith.constant 0 : i32
    return %c0_i32, %c0_i32_0 : i32, i32
  }
  func.func @transform_1(%arg0: i32) -> (i32, i32) {
    %c0_i32 = arith.constant 0 : i32
    %c0_i32_0 = arith.constant 0 : i32
    %c0_i32_1 = arith.constant 0 : i32
    return %c0_i32, %c0_i32_0 : i32, i32
  }
  func.func @transform_2(%arg0: i32) -> (i32, i32) {
    %c0_i32 = arith.constant 0 : i32
    %c0_i32_0 = arith.constant 0 : i32
    %c0_i32_1 = arith.constant 0 : i32
    return %c0_i32, %c0_i32_0 : i32, i32
  }
  func.func @transform_3(%arg0: i32) -> (i32, i32) {
    %c0_i32 = arith.constant 0 : i32
    %c0_i32_0 = arith.constant 0 : i32
    %c0_i32_1 = arith.constant 0 : i32
    return %c0_i32, %c0_i32_0 : i32, i32
  }
  func.func @transform_4(%arg0: i32) -> (i32, i32) {
    %c0_i32 = arith.constant 0 : i32
    %c0_i32_0 = arith.constant 0 : i32
    %c0_i32_1 = arith.constant 0 : i32
    return %c0_i32, %c0_i32_0 : i32, i32
  }
}

</mosaic_0001>

<llo_original>
// kernel: text_encoder_forward.7
$region0: #{text_encoder_forward.7}
  #allocation0 [shape = 'u32[]', space=smem, size = 0x4, offset = 0x4, fixed_abs, tag = 'smem constant byte address 0x4 - core index']
  #allocation1 [shape = 'u32[144,128]{1,0:T(1,128)}', space=vmem, size = 0x12000, scoped, tag = 'internal scratch']
  %s0 = inlined_call_operand.vmem [shape: f32[4,128], index: 0, kind: input, shape index: {}]
  %s1 = inlined_call_operand.vmem [shape: f32[1,128], index: 1, kind: input, shape index: {}]
  %s2 = inlined_call_operand.vmem [shape: f32[1,128], index: 2, kind: input, shape index: {}]
  %s3 = inlined_call_operand.vmem [shape: bf16[128,64], index: 3, kind: input, shape index: {}]
  %s4 = inlined_call_operand.hbm [shape: f32[4,64], index: 4, kind: output, shape index: {}]
  %s5 = sld [smem:[#allocation0]]
  $region26: #{text_encoder_forward.7} parent=0
    _
  %s7 = ssub.s32 1, %s5
  %s8 = scalar_select 0, %s7, %s5
  $region1: #{text_encoder_forward.7} parent=0
    #allocation2 [shape = 'u8[2048]{0}', space=vmem, size = 0x800, scoped, tag = 'output window, operand 0, single buffered']
    #allocation3 [shape = 's32[1]{0}', space=sflag, size = 0x4, scoped, tag = 'scoped memory for text_encoder_forward.7']
    %9 = vsyncpa [#allocation3], 0
    // Predicated region
    $region2: #{text_encoder_forward.7} parent=1 // pred_check
      _
    $region3: #{text_encoder_forward.7} parent=1 // pred_check_branch
      %11 = sbr.rel (0) target = $region5
    $region4: #{text_encoder_forward.7} parent=1 // pred_region
      _
    $region5: #{text_encoder_forward.7} parent=1 // pred_fallthru
      _
    // Predicated region
    $region6: #{text_encoder_forward.7} parent=1 // pred_check
      _
    $region7: #{text_encoder_forward.7} parent=1 // pred_check_branch
      %13 = sbr.rel (0) target = $region9
    $region8: #{text_encoder_forward.7} parent=1 // pred_region
      _
    $region9: #{text_encoder_forward.7} parent=1 // pred_fallthru
      _
    // Predicated region
    $region10: #{text_encoder_forward.7} parent=1 // pred_check
      _
    $region11: #{text_encoder_forward.7} parent=1 // pred_check_branch
      %15 = sbr.rel (0) target = $region13
    $region12: #{text_encoder_forward.7} parent=1 // pred_region
      _
    $region13: #{text_encoder_forward.7} parent=1 // pred_fallthru
      _
    // Predicated region
    $region14: #{text_encoder_forward.7} parent=1 // pred_check
      _
    $region15: #{text_encoder_forward.7} parent=1 // pred_check_branch
      %17 = sbr.rel (0) target = $region17
    $region16: #{text_encoder_forward.7} parent=1 // pred_region
      _
    $region17: #{text_encoder_forward.7} parent=1 // pred_fallthru
      _
    %v19 = vld [vmem:[%s0] sm:$0xf]
    %vm20 = vcmask 1043456
    %v21 = vsel %vm20, %v19, 0.0
    %22 = vadd.xlane.f32.xlu0 %v21
    %v23 = vpop.xlane.xlu0 %22
    %v24 = vrcp.pop 128.0
    %v25 = vmul.f32 %v23, %v24
    %v26 = vsub.f32 %v19, %v25
    %v27 = vmul.f32 %v26, %v26
    %v28 = vsel %vm20, %v27, 0.0
    %29 = vadd.xlane.f32.xlu0 %v28
    %v30 = vpop.xlane.xlu0 %29
    %v31 = vmul.f32 %v30, %v24
    %v32 = vadd.f32 %v31, 1e-05
    %v33 = vrsqrt.pop %v32
    %v34 = vmul.f32 %v26, %v33
    %v35 = vld [vmem:[%s1] sm:$0x1]
    %v37 = vlaneseq
    %v38 = vshrl.u32 %v37, 7
    %v39 = vsub.s32 0, %v38
    %v40 = vrot.slane %v35, %v39
    %v42 = vmul.f32 %v34, %v40
    %v43 = vld [vmem:[%s2] sm:$0x1]
    %v45 = vlaneseq
    %v46 = vshrl.u32 %v45, 7
    %v47 = vsub.s32 0, %v46
    %v48 = vrot.slane %v43, %v47
    %v50 = vadd.f32 %v42, %v48
    %v51 = vpack.c.bf16 %v50, %v50
    %v52 = vld [vmem:[%s3] sm:$0xf]
    %v53 = vld [vmem:[%s3 + $0x4] sm:$0xf]
    %v54 = vld [vmem:[%s3 + $0x8] sm:$0xf]
    %v55 = vld [vmem:[%s3 + $0xc] sm:$0xf]
    %v56 = vld [vmem:[%s3 + $0x10] sm:$0xf]
    %v57 = vld [vmem:[%s3 + $0x14] sm:$0xf]
    %v58 = vld [vmem:[%s3 + $0x18] sm:$0xf]
    %v59 = vld [vmem:[%s3 + $0x1c] sm:$0xf]
    %v60 = vld [vmem:[%s3 + $0x20] sm:$0xf]
    %v61 = vld [vmem:[%s3 + $0x24] sm:$0xf]
    %v62 = vld [vmem:[%s3 + $0x28] sm:$0xf]
    %v63 = vld [vmem:[%s3 + $0x2c] sm:$0xf]
    %v64 = vld [vmem:[%s3 + $0x30] sm:$0xf]
    %v65 = vld [vmem:[%s3 + $0x34] sm:$0xf]
    %v66 = vld [vmem:[%s3 + $0x38] sm:$0xf]
    %v67 = vld [vmem:[%s3 + $0x3c] sm:$0xf]
    %v84 = vunpack.c.l.b16 %v52
    %v85 = vunpack.c.l.b16 %v53
    %v86 = vunpack.c.l.b16 %v54
    %v87 = vunpack.c.l.b16 %v55
    %v88 = vunpack.c.l.b16 %v56
    %v89 = vunpack.c.l.b16 %v57
    %v90 = vunpack.c.l.b16 %v58
    %v91 = vunpack.c.l.b16 %v59
    %v92 = vunpack.c.l.b16 %v60
    %v93 = vunpack.c.l.b16 %v61
    %v94 = vunpack.c.l.b16 %v62
    %v95 = vunpack.c.l.b16 %v63
    %v96 = vunpack.c.l.b16 %v64
    %v97 = vunpack.c.l.b16 %v65
    %v98 = vunpack.c.l.b16 %v66
    %v99 = vunpack.c.l.b16 %v67
    %v100 = vpack.c.b16 %v85, %v84
    %v101 = vpack.c.b16 %v87, %v86
    %v102 = vpack.c.b16 %v89, %v88
    %v103 = vpack.c.b16 %v91, %v90
    %v104 = vpack.c.b16 %v93, %v92
    %v105 = vpack.c.b16 %v95, %v94
    %v106 = vpack.c.b16 %v97, %v96
    %v107 = vpack.c.b16 %v99, %v98
    %116 = vmatprep.subr.bf16.mxu0 0
    %117 = vmatpush1.bf16.msra.mxu0 %v107
    %118 = vmatprep.subr.bf16.mxu0 0
    %119 = vmatpush1.bf16.msra.mxu0 %v106
    %120 = vmatprep.subr.bf16.mxu0 0
    %121 = vmatpush1.bf16.msra.mxu0 %v105
    %122 = vmatprep.subr.bf16.mxu0 0
    %123 = vmatpush1.bf16.msra.mxu0 %v104
    %124 = vmatprep.subr.bf16.mxu0 0
    %125 = vmatpush1.bf16.msra.mxu0 %v103
    %126 = vmatprep.subr.bf16.mxu0 0
    %127 = vmatpush1.bf16.msra.mxu0 %v102
    %128 = vmatprep.subr.bf16.mxu0 0
    %129 = vmatpush1.bf16.msra.mxu0 %v101
    %130 = vmatprep.subr.bf16.mxu0 0
    %131 = vmatpush1.bf16.msra.mxu0 %v100
    %132 = vmatprep.subr.bf16.mxu0 0
    %133 = vmatpush2.bf16.msra.mxu0 0
    %134 = vmatprep.subr.bf16.mxu0 0
    %135 = vmatpush2.bf16.msra.mxu0 0
    %136 = vmatprep.subr.bf16.mxu0 0
    %137 = vmatpush2.bf16.msra.mxu0 0
    %138 = vmatprep.subr.bf16.mxu0 0
    %139 = vmatpush2.bf16.msra.mxu0 0
    %140 = vmatprep.subr.bf16.mxu0 0
    %141 = vmatpush2.bf16.msra.mxu0 0
    %142 = vmatprep.subr.bf16.mxu0 0
    %143 = vmatpush2.bf16.msra.mxu0 0
    %144 = vmatprep.subr.bf16.mxu0 0
    %145 = vmatpush2.bf16.msra.mxu0 0
    %146 = vmatprep.subr.bf16.mxu0 0
    %147 = vmatpush2.bf16.msra.mxu0 0
    %148 = vmatprep.mubr.bf16.mxu0 0
    %149 = vmatmul.mubr.bf16.gmra.mxu0 %v51
    %v150 = vpop.f32.mrf.mxu0
    %v151 = vadd.f32 0.0, %v150
    %v152 = vpop.f32.mrf.mxu0
    %v153 = vpop.f32.mrf.mxu0
    %v154 = vpop.f32.mrf.mxu0
    %155 = vdwg.mxu0
    %vm156 = vcmask 519168
    %157 = vst.msk [vmem:[#allocation2] sm:$0xf] %vm156, %v151
    // Predicated region
    $region18: #{text_encoder_forward.7} parent=1 // pred_check
      _
    $region19: #{text_encoder_forward.7} parent=1 // pred_check_branch
      %159 = sbr.rel (0) target = $region21
    $region20: #{text_encoder_forward.7} parent=1 // pred_region
      %s161 = ssub.s32 64, 64
      %162 = vsyncadd [#allocation3], %s161
      %s164 = sshll.u32 [#allocation2], 4
      %s165 = int_to_ptr.vmem [resolvable:$true] %s164
      %167 = dma.vmem_to_hbm [thread:$0]  %s165, 64, %s4, [#allocation3]
    $region21: #{text_encoder_forward.7} parent=1 // pred_fallthru
      _
    // Predicated region
    $region22: #{text_encoder_forward.7} parent=1 // pred_check
      _
    $region23: #{text_encoder_forward.7} parent=1 // pred_check_branch
      %169 = sbr.rel (0) target = $region25
    $region24: #{text_encoder_forward.7} parent=1 // pred_region
      %170 = dma.done [#allocation3], 64
    $region25: #{text_encoder_forward.7} parent=1 // pred_fallthru
      _
    %171 = vsyncpa [#allocation3], 1

// kernel: text_encoder_forward.4
$region0: #{text_encoder_forward.4}
  #allocation0 [shape = 'u32[]', space=smem, size = 0x4, offset = 0x4, fixed_abs, tag = 'smem constant byte address 0x4 - core index']
  #allocation1 [shape = 'u32[144,128]{1,0:T(1,128)}', space=vmem, size = 0x12000, scoped, tag = 'internal scratch']
  #allocation2 [shape = 'bf16[32,384]{1,0:T(8,128)(2,1)}', space=vmem, size = 0x6000, scoped, tag = 'scratch operand']
  #allocation3 [shape = 'bf16[32,128]{1,0:T(8,128)(2,1)}', space=vmem, size = 0x2000, scoped, tag = 'scratch operand']
  #allocation4 [shape = 'f32[32,128]{1,0:T(8,128)}', space=vmem, size = 0x4000, scoped, tag = 'scratch operand']
  %s0 = inlined_call_operand.vmem [shape: f32[4,16,128], index: 0, kind: input, shape index: {}]
  %s1 = inlined_call_operand.vmem [shape: f32[4,16,16], index: 1, kind: input, shape index: {}]
  %s2 = inlined_call_operand.hbm [shape: f32[1,128], index: 2, kind: input, shape index: {}]
  %s3 = inlined_call_operand.hbm [shape: f32[1,128], index: 3, kind: input, shape index: {}]
  %s4 = inlined_call_operand.hbm [shape: bf16[128,384], index: 4, kind: input, shape index: {}]
  %s5 = inlined_call_operand.vmem [shape: f32[1,384], index: 5, kind: input, shape index: {}]
  %s6 = inlined_call_operand.vmem [shape: bf16[128,128], index: 6, kind: input, shape index: {}]
  %s7 = inlined_call_operand.vmem [shape: f32[1,128], index: 7, kind: input, shape index: {}]
  %s8 = inlined_call_operand.hbm [shape: f32[1,128], index: 8, kind: input, shape index: {}]
  %s9 = inlined_call_operand.hbm [shape: f32[1,128], index: 9, kind: input, shape index: {}]
  %s10 = inlined_call_operand.vmem [shape: bf16[128,512], index: 10, kind: input, shape index: {}]
  %s11 = inlined_call_operand.vmem [shape: f32[1,512], index: 11, kind: input, shape index: {}]
  %s12 = inlined_call_operand.vmem [shape: bf16[512,128], index: 12, kind: input, shape index: {}]
  %s13 = inlined_call_operand.hbm [shape: f32[1,128], index: 13, kind: input, shape index: {}]
  %s14 = inlined_call_operand.vmem [shape: f32[4,16,128], index: 14, kind: output, shape index: {}]
  %s15 = sld [smem:[#allocation0]]
  $region120: #{text_encoder_forward.4} parent=0
    _
  %s17 = ssub.s32 1, %s15
  %s18 = scalar_select 0, %s17, %s15
  $region1: #{text_encoder_forward.4} parent=0
    #allocation5 [shape = 'u8[512]{0}', space=vmem, size = 0x400, scoped, tag = 'input window, operand 2, single buffered']
    #allocation6 [shape = 's32[2]{0}', space=sflag, size = 0x8, scoped, tag = 'scoped memory for text_encoder_forward.4']
    #allocation7 [shape = 'u8[512]{0}', space=vmem, size = 0x400, scoped, tag = 'input window, operand 3, single buffered']
    #allocation8 [shape = 's32[1]{0}', space=sflag, size = 0x4, scoped, tag = 'scoped memory for text_encoder_forward.4']
    #allocation9 [shape = 'u8[98304]{0}', space=vmem, size = 0x18000, scoped, tag = 'input window, operand 4, single buffered']
    #allocation10 [shape = 'u8[512]{0}', space=vmem, size = 0x400, scoped, tag = 'input window, operand 8, single buffered']
    #allocation11 [shape = 's32[1]{0}', space=sflag, size = 0x4, scoped, tag = 'scoped memory for text_encoder_forward.4']
    #allocation12 [shape = 'u8[512]{0}', space=vmem, size = 0x400, scoped, tag = 'input window, operand 9, single buffered']
    #allocation13 [shape = 'u8[512]{0}', space=vmem, size = 0x400, scoped, tag = 'input window, operand 13, single buffered']
    #allocation14 [shape = 's32[1]{0}', space=sflag, size = 0x4, scoped, tag = 'scoped memory for text_encoder_forward.4']
    %19 = vsyncpa [#allocation6], 0
    %20 = vsyncpa [#allocation8], 0
    %21 = vsyncpa [#allocation11], 0
    %22 = vsyncpa [#allocation14], 0
    loop: start=0, step=1, limit=4
    $region2: #{text_encoder_forward.4} parent=1 // loop_pre_header
      _
    $region3: #{text_encoder_forward.4} parent=1 // loop_header
      %s24 = sphi 0, %s28
      %p25 = scmp.ge.s32.totalorder %s24, 4
      %s34 = sphi 0, %s36
      %s37 = sphi 0, %s34
      %s38 = sphi 0, %s37
      %s54 = sphi 0, %s38
      %s60 = sphi 0, %s62
      %s63 = sphi 0, %s60
      %s64 = sphi 0, %s63
      %s80 = sphi 0, %s64
      %s84 = sphi 0, %s84
      %s86 = sphi 0, %s84
      %s87 = sphi 0, %s86
      %s101 = sphi 0, %s87
      %s105 = sphi 0, %s105
      %s107 = sphi 0, %s105
      %s108 = sphi 0, %s107
      %s122 = sphi 0, %s108
      %s126 = sphi 0, %s126
      %s128 = sphi 0, %s126
      %s129 = sphi 0, %s128
      %s143 = sphi 0, %s129
      %s147 = sphi 0, %s147
      %s149 = sphi 0, %s147
      %s150 = sphi 0, %s149
      %s164 = sphi 0, %s150
      %s168 = sphi 0, %s168
      %s170 = sphi 0, %s168
      %s171 = sphi 0, %s170
      %s185 = sphi 0, %s171
      %s189 = sphi 0, %s189
      %s191 = sphi 0, %s189
      %s192 = sphi 0, %s191
      %s206 = sphi 0, %s192
      %s210 = sphi 0, %s210
      %s212 = sphi 0, %s210
      %s213 = sphi 0, %s212
      %s227 = sphi 0, %s213
      %s231 = sphi 0, %s231
      %s233 = sphi 0, %s231
      %s234 = sphi 0, %s233
      %s248 = sphi 0, %s234
      %s252 = sphi 0, %s252
      %s254 = sphi 0, %s252
      %s255 = sphi 0, %s254
      %s269 = sphi 0, %s255
      %s273 = sphi 0, %s273
      %s275 = sphi 0, %s273
      %s276 = sphi 0, %s275
      %s290 = sphi 0, %s276
      %s294 = sphi 0, %s294
      %s296 = sphi 0, %s294
      %s297 = sphi 0, %s296
      %s311 = sphi 0, %s297
      %s315 = sphi 0, %s315
      %s317 = sphi 0, %s315
      %s318 = sphi 0, %s317
      %s332 = sphi 0, %s318
      %s338 = sphi 0, %s340
      %s341 = sphi 0, %s338
      %s342 = sphi 0, %s341
      %s358 = sphi 0, %s342
    $region4: #{text_encoder_forward.4} parent=1 // loop_header_branch
      %27 = sbr.rel (%p25) target = $region8
    $region5: #{text_encoder_forward.4} parent=1 // loop_body
      %s29 = ssub.s32 %s24, 1
      %s30 = ssub.s32 %s24, 2
      %s31 = sadd.s32 %s24, 1
      %s32 = ssub.s32 %s24, %s31
      %p33 = scmp.eq.s32.totalorder %s32, 0
      %s35 = sadd.s32 %s34, 1
      %s36 = scalar_select %p33, %s34, %s35
      %p39 = pneg %p33
      %p40 = scmp.eq.s32.totalorder %s24, 1
      %p41 = por %p39, %p40
      %p42 = scmp.ne.s32.totalorder %s34, %s37
      %p43 = scmp.eq.s32.totalorder %s24, 0
      %p44 = por %p42, %p43
      %p45 = scmp.ne.s32.totalorder %s34, %s37
      %p46 = scmp.eq.s32.totalorder %s29, 1
      %p47 = por %p45, %p46
      %p48 = scmp.ne.s32.totalorder %s37, %s38
      %p49 = scmp.eq.s32.totalorder %s29, 0
      %p50 = por %p48, %p49
      %p51 = scmp.ne.s32.totalorder %s37, %s38
      %p52 = scmp.eq.s32.totalorder %s30, 1
      %p53 = por %p51, %p52
      %p55 = scmp.ne.s32.totalorder %s38, %s54
      %p56 = scmp.eq.s32.totalorder %s30, 0
      %p57 = por %p55, %p56
      %s58 = ssub.s32 %s24, %s31
      %p59 = scmp.eq.s32.totalorder %s58, 0
      %s61 = sadd.s32 %s60, 1
      %s62 = scalar_select %p59, %s60, %s61
      %p65 = pneg %p59
      %p66 = scmp.eq.s32.totalorder %s24, 1
      %p67 = por %p65, %p66
      %p68 = scmp.ne.s32.totalorder %s60, %s63
      %p69 = scmp.eq.s32.totalorder %s24, 0
      %p70 = por %p68, %p69
      %p71 = scmp.ne.s32.totalorder %s60, %s63
      %p72 = scmp.eq.s32.totalorder %s29, 1
      %p73 = por %p71, %p72
      %p74 = scmp.ne.s32.totalorder %s63, %s64
      %p75 = scmp.eq.s32.totalorder %s29, 0
      %p76 = por %p74, %p75
      %p77 = scmp.ne.s32.totalorder %s63, %s64
      %p78 = scmp.eq.s32.totalorder %s30, 1
      %p79 = por %p77, %p78
      %p81 = scmp.ne.s32.totalorder %s64, %s80
      %p82 = scmp.eq.s32.totalorder %s30, 0
      %p83 = por %p81, %p82
      %s85 = sadd.s32 %s84, 1
      %p88 = scmp.eq.s32.totalorder %s24, 1
      %p89 = scmp.ne.s32.totalorder %s84, %s86
      %p90 = scmp.eq.s32.totalorder %s24, 0
      %p91 = por %p89, %p90
      %p92 = scmp.ne.s32.totalorder %s84, %s86
      %p93 = scmp.eq.s32.totalorder %s29, 1
      %p94 = por %p92, %p93
      %p95 = scmp.ne.s32.totalorder %s86, %s87
      %p96 = scmp.eq.s32.totalorder %s29, 0
      %p97 = por %p95, %p96
      %p98 = scmp.ne.s32.totalorder %s86, %s87
      %p99 = scmp.eq.s32.totalorder %s30, 1
      %p100 = por %p98, %p99
      %p102 = scmp.ne.s32.totalorder %s87, %s101
      %p103 = scmp.eq.s32.totalorder %s30, 0
      %p104 = por %p102, %p103
      %s106 = sadd.s32 %s105, 1
      %p109 = scmp.eq.s32.totalorder %s24, 1
      %p110 = scmp.ne.s32.totalorder %s105, %s107
      %p111 = scmp.eq.s32.totalorder %s24, 0
      %p112 = por %p110, %p111
      %p113 = scmp.ne.s32.totalorder %s105, %s107
      %p114 = scmp.eq.s32.totalorder %s29, 1
      %p115 = por %p113, %p114
      %p116 = scmp.ne.s32.totalorder %s107, %s108
      %p117 = scmp.eq.s32.totalorder %s29, 0
      %p118 = por %p116, %p117
      %p119 = scmp.ne.s32.totalorder %s107, %s108
      %p120 = scmp.eq.s32.totalorder %s30, 1
      %p121 = por %p119, %p120
      %p123 = scmp.ne.s32.totalorder %s108, %s122
      %p124 = scmp.eq.s32.totalorder %s30, 0
      %p125 = por %p123, %p124
      %s127 = sadd.s32 %s126, 1
      %p130 = scmp.eq.s32.totalorder %s24, 1
      %p131 = scmp.ne.s32.totalorder %s126, %s128
      %p132 = scmp.eq.s32.totalorder %s24, 0
      %p133 = por %p131, %p132
      %p134 = scmp.ne.s32.totalorder %s126, %s128
      %p135 = scmp.eq.s32.totalorder %s29, 1
      %p136 = por %p134, %p135
      %p137 = scmp.ne.s32.totalorder %s128, %s129
      %p138 = scmp.eq.s32.totalorder %s29, 0
      %p139 = por %p137, %p138
      %p140 = scmp.ne.s32.totalorder %s128, %s129
      %p141 = scmp.eq.s32.totalorder %s30, 1
      %p142 = por %p140, %p141
      %p144 = scmp.ne.s32.totalorder %s129, %s143
      %p145 = scmp.eq.s32.totalorder %s30, 0
      %p146 = por %p144, %p145
      %s148 = sadd.s32 %s147, 1
      %p151 = scmp.eq.s32.totalorder %s24, 1
      %p152 = scmp.ne.s32.totalorder %s147, %s149
      %p153 = scmp.eq.s32.totalorder %s24, 0
      %p154 = por %p152, %p153
      %p155 = scmp.ne.s32.totalorder %s147, %s149
      %p156 = scmp.eq.s32.totalorder %s29, 1
      %p157 = por %p155, %p156
      %p158 = scmp.ne.s32.totalorder %s149, %s150
      %p159 = scmp.eq.s32.totalorder %s29, 0
      %p160 = por %p158, %p159
      %p161 = scmp.ne.s32.totalorder %s149, %s150
      %p162 = scmp.eq.s32.totalorder %s30, 1
      %p163 = por %p161, %p162
      %p165 = scmp.ne.s32.totalorder %s150, %s164
      %p166 = scmp.eq.s32.totalorder %s30, 0
      %p167 = por %p165, %p166
      %s169 = sadd.s32 %s168, 1
      %p172 = scmp.eq.s32.totalorder %s24, 1
      %p173 = scmp.ne.s32.totalorder %s168, %s170
      %p174 = scmp.eq.s32.totalorder %s24, 0
      %p175 = por %p173, %p174
      %p176 = scmp.ne.s32.totalorder %s168, %s170
      %p177 = scmp.eq.s32.totalorder %s29, 1
      %p178 = por %p176, %p177
      %p179 = scmp.ne.s32.totalorder %s170, %s171
      %p180 = scmp.eq.s32.totalorder %s29, 0
      %p181 = por %p179, %p180
      %p182 = scmp.ne.s32.totalorder %s170, %s171
      %p183 = scmp.eq.s32.totalorder %s30, 1
      %p184 = por %p182, %p183
      %p186 = scmp.ne.s32.totalorder %s171, %s185
      %p187 = scmp.eq.s32.totalorder %s30, 0
      %p188 = por %p186, %p187
      %s190 = sadd.s32 %s189, 1
      %p193 = scmp.eq.s32.totalorder %s24, 1
      %p194 = scmp.ne.s32.totalorder %s189, %s191
      %p195 = scmp.eq.s32.totalorder %s24, 0
      %p196 = por %p194, %p195
      %p197 = scmp.ne.s32.totalorder %s189, %s191
      %p198 = scmp.eq.s32.totalorder %s29, 1
      %p199 = por %p197, %p198
      %p200 = scmp.ne.s32.totalorder %s191, %s192
      %p201 = scmp.eq.s32.totalorder %s29, 0
      %p202 = por %p200, %p201
      %p203 = scmp.ne.s32.totalorder %s191, %s192
      %p204 = scmp.eq.s32.totalorder %s30, 1
      %p205 = por %p203, %p204
      %p207 = scmp.ne.s32.totalorder %s192, %s206
      %p208 = scmp.eq.s32.totalorder %s30, 0
      %p209 = por %p207, %p208
      %s211 = sadd.s32 %s210, 1
      %p214 = scmp.eq.s32.totalorder %s24, 1
      %p215 = scmp.ne.s32.totalorder %s210, %s212
      %p216 = scmp.eq.s32.totalorder %s24, 0
      %p217 = por %p215, %p216
      %p218 = scmp.ne.s32.totalorder %s210, %s212
      %p219 = scmp.eq.s32.totalorder %s29, 1
      %p220 = por %p218, %p219
      %p221 = scmp.ne.s32.totalorder %s212, %s213
      %p222 = scmp.eq.s32.totalorder %s29, 0
      %p223 = por %p221, %p222
      %p224 = scmp.ne.s32.totalorder %s212, %s213
      %p225 = scmp.eq.s32.totalorder %s30, 1
      %p226 = por %p224, %p225
      %p228 = scmp.ne.s32.totalorder %s213, %s227
      %p229 = scmp.eq.s32.totalorder %s30, 0
      %p230 = por %p228, %p229
      %s232 = sadd.s32 %s231, 1
      %p235 = scmp.eq.s32.totalorder %s24, 1
      %p236 = scmp.ne.s32.totalorder %s231, %s233
      %p237 = scmp.eq.s32.totalorder %s24, 0
      %p238 = por %p236, %p237
      %p239 = scmp.ne.s32.totalorder %s231, %s233
      %p240 = scmp.eq.s32.totalorder %s29, 1
      %p241 = por %p239, %p240
      %p242 = scmp.ne.s32.totalorder %s233, %s234
      %p243 = scmp.eq.s32.totalorder %s29, 0
      %p244 = por %p242, %p243
      %p245 = scmp.ne.s32.totalorder %s233, %s234
      %p246 = scmp.eq.s32.totalorder %s30, 1
      %p247 = por %p245, %p246
      %p249 = scmp.ne.s32.totalorder %s234, %s248
      %p250 = scmp.eq.s32.totalorder %s30, 0
      %p251 = por %p249, %p250
      %s253 = sadd.s32 %s252, 1
      %p256 = scmp.eq.s32.totalorder %s24, 1
      %p257 = scmp.ne.s32.totalorder %s252, %s254
      %p258 = scmp.eq.s32.totalorder %s24, 0
      %p259 = por %p257, %p258
      %p260 = scmp.ne.s32.totalorder %s252, %s254
      %p261 = scmp.eq.s32.totalorder %s29, 1
      %p262 = por %p260, %p261
      %p263 = scmp.ne.s32.totalorder %s254, %s255
      %p264 = scmp.eq.s32.totalorder %s29, 0
      %p265 = por %p263, %p264
      %p266 = scmp.ne.s32.totalorder %s254, %s255
      %p267 = scmp.eq.s32.totalorder %s30, 1
      %p268 = por %p266, %p267
      %p270 = scmp.ne.s32.totalorder %s255, %s269
      %p271 = scmp.eq.s32.totalorder %s30, 0
      %p272 = por %p270, %p271
      %s274 = sadd.s32 %s273, 1
      %p277 = scmp.eq.s32.totalorder %s24, 1
      %p278 = scmp.ne.s32.totalorder %s273, %s275
      %p279 = scmp.eq.s32.totalorder %s24, 0
      %p280 = por %p278, %p279
      %p281 = scmp.ne.s32.totalorder %s273, %s275
      %p282 = scmp.eq.s32.totalorder %s29, 1
      %p283 = por %p281, %p282
      %p284 = scmp.ne.s32.totalorder %s275, %s276
      %p285 = scmp.eq.s32.totalorder %s29, 0
      %p286 = por %p284, %p285
      %p287 = scmp.ne.s32.totalorder %s275, %s276
      %p288 = scmp.eq.s32.totalorder %s30, 1
      %p289 = por %p287, %p288
      %p291 = scmp.ne.s32.totalorder %s276, %s290
      %p292 = scmp.eq.s32.totalorder %s30, 0
      %p293 = por %p291, %p292
      %s295 = sadd.s32 %s294, 1
      %p298 = scmp.eq.s32.totalorder %s24, 1
      %p299 = scmp.ne.s32.totalorder %s294, %s296
      %p300 = scmp.eq.s32.totalorder %s24, 0
      %p301 = por %p299, %p300
      %p302 = scmp.ne.s32.totalorder %s294, %s296
      %p303 = scmp.eq.s32.totalorder %s29, 1
      %p304 = por %p302, %p303
      %p305 = scmp.ne.s32.totalorder %s296, %s297
      %p306 = scmp.eq.s32.totalorder %s29, 0
      %p307 = por %p305, %p306
      %p308 = scmp.ne.s32.totalorder %s296, %s297
      %p309 = scmp.eq.s32.totalorder %s30, 1
      %p310 = por %p308, %p309
      %p312 = scmp.ne.s32.totalorder %s297, %s311
      %p313 = scmp.eq.s32.totalorder %s30, 0
      %p314 = por %p312, %p313
      %s316 = sadd.s32 %s315, 1
      %p319 = scmp.eq.s32.totalorder %s24, 1
      %p320 = scmp.ne.s32.totalorder %s315, %s317
      %p321 = scmp.eq.s32.totalorder %s24, 0
      %p322 = por %p320, %p321
      %p323 = scmp.ne.s32.totalorder %s315, %s317
      %p324 = scmp.eq.s32.totalorder %s29, 1
      %p325 = por %p323, %p324
      %p326 = scmp.ne.s32.totalorder %s317, %s318
      %p327 = scmp.eq.s32.totalorder %s29, 0
      %p328 = por %p326, %p327
      %p329 = scmp.ne.s32.totalorder %s317, %s318
      %p330 = scmp.eq.s32.totalorder %s30, 1
      %p331 = por %p329, %p330
      %p333 = scmp.ne.s32.totalorder %s318, %s332
      %p334 = scmp.eq.s32.totalorder %s30, 0
      %p335 = por %p333, %p334
      %s336 = ssub.s32 %s24, %s31
      %p337 = scmp.eq.s32.totalorder %s336, 0
      %s339 = sadd.s32 %s338, 1
      %s340 = scalar_select %p337, %s338, %s339
      %p343 = pneg %p337
      %p344 = scmp.eq.s32.totalorder %s24, 1
      %p345 = por %p343, %p344
      %p346 = scmp.ne.s32.totalorder %s338, %s341
      %p347 = scmp.eq.s32.totalorder %s24, 0
      %p348 = por %p346, %p347
      %p349 = scmp.ne.s32.totalorder %s338, %s341
      %p350 = scmp.eq.s32.totalorder %s29, 1
      %p351 = por %p349, %p350
      %p352 = scmp.ne.s32.totalorder %s341, %s342
      %p353 = scmp.eq.s32.totalorder %s29, 0
      %p354 = por %p352, %p353
      %p355 = scmp.ne.s32.totalorder %s341, %s342
      %p356 = scmp.eq.s32.totalorder %s30, 1
      %p357 = por %p355, %p356
      %p359 = scmp.ne.s32.totalorder %s342, %s358
      %p360 = scmp.eq.s32.totalorder %s30, 0
      %p361 = por %p359, %p360
      %p362 = scmp.le.s32.totalorder 1, %s24
      %p363 = scmp.lt.s32.totalorder %s24, 3
      %p364 = pnand %p362, %p363
      %p365 = pneg %p364
      // Predicated region
      $region9: #{text_encoder_forward.4} parent=5 // pred_check
        _
      $region10: #{text_encoder_forward.4} parent=5 // pred_check_branch
        %367 = sbr.rel (%p364) target = $region12
      $region11: #{text_encoder_forward.4} parent=5 // pred_region
        %s368 = ssub.s32 %s24, 1
        // Predicated region
        $region13: #{text_encoder_forward.4} parent=11 // pred_check
          %p369 = pneg %p97
        $region14: #{text_encoder_forward.4} parent=11 // pred_check_branch
          %371 = sbr.rel (%p369) target = $region16
        $region15: #{text_encoder_forward.4} parent=11 // pred_region
          %s373 = ssub.s32 16, 16
          %374 = vsyncadd [#allocation6], %s373
          %s376 = sshll.u32 [#allocation5], 4
          %s377 = int_to_ptr.vmem [resolvable:$true] %s376
          %379 = dma.hbm_to_vmem [thread:$0]  %s2, 16, %s377, [#allocation6]
        $region16: #{text_encoder_forward.4} parent=11 // pred_fallthru
          _
        // Predicated region
        $region17: #{text_encoder_forward.4} parent=11 // pred_check
          %p380 = pneg %p118
        $region18: #{text_encoder_forward.4} parent=11 // pred_check_branch
          %382 = sbr.rel (%p380) target = $region20
        $region19: #{text_encoder_forward.4} parent=11 // pred_region
          %s384 = ssub.s32 16, 16
          %385 = vsyncadd [#allocation8], %s384
          %s387 = sshll.u32 [#allocation7], 4
          %s388 = int_to_ptr.vmem [resolvable:$true] %s387
          %390 = dma.hbm_to_vmem [thread:$0]  %s3, 16, %s388, [#allocation8]
        $region20: #{text_encoder_forward.4} parent=11 // pred_fallthru
          _
        // Predicated region
        $region21: #{text_encoder_forward.4} parent=11 // pred_check
          %p391 = pneg %p139
        $region22: #{text_encoder_forward.4} parent=11 // pred_check_branch
          %393 = sbr.rel (%p391) target = $region24
        $region23: #{text_encoder_forward.4} parent=11 // pred_region
          %s395 = ssub.s32 3072, 3072
          %396 = vsyncadd [#allocation8], %s395
          %s397 = sshll.u32 [#allocation9], 4
          %s398 = int_to_ptr.vmem [resolvable:$true] %s397
          %403 = dma.hbm_to_vmem [thread:$0]  %s4, 3072, %s398, [#allocation8], 192, 192, 12
        $region24: #{text_encoder_forward.4} parent=11 // pred_fallthru
          _
        // Predicated region
        $region25: #{text_encoder_forward.4} parent=11 // pred_check
          %p404 = pneg %p160
        $region26: #{text_encoder_forward.4} parent=11 // pred_check_branch
          %406 = sbr.rel (%p404) target = $region28
        $region27: #{text_encoder_forward.4} parent=11 // pred_region
          _
        $region28: #{text_encoder_forward.4} parent=11 // pred_fallthru
          _
        // Predicated region
        $region29: #{text_encoder_forward.4} parent=11 // pred_check
          %p407 = pneg %p181
        $region30: #{text_encoder_forward.4} parent=11 // pred_check_branch
          %409 = sbr.rel (%p407) target = $region32
        $region31: #{text_encoder_forward.4} parent=11 // pred_region
          _
        $region32: #{text_encoder_forward.4} parent=11 // pred_fallthru
          _
        // Predicated region
        $region33: #{text_encoder_forward.4} parent=11 // pred_check
          %p410 = pneg %p202
        $region34: #{text_encoder_forward.4} parent=11 // pred_check_branch
          %412 = sbr.rel (%p410) target = $region36
        $region35: #{text_encoder_forward.4} parent=11 // pred_region
          _
        $region36: #{text_encoder_forward.4} parent=11 // pred_fallthru
          _
        // Predicated region
        $region37: #{text_encoder_forward.4} parent=11 // pred_check
          %p413 = pneg %p223
        $region38: #{text_encoder_forward.4} parent=11 // pred_check_branch
          %415 = sbr.rel (%p413) target = $region40
        $region39: #{text_encoder_forward.4} parent=11 // pred_region
          %s417 = ssub.s32 16, 16
          %418 = vsyncadd [#allocation11], %s417
          %s420 = sshll.u32 [#allocation10], 4
          %s421 = int_to_ptr.vmem [resolvable:$true] %s420
          %423 = dma.hbm_to_vmem [thread:$0]  %s8, 16, %s421, [#allocation11]
        $region40: #{text_encoder_forward.4} parent=11 // pred_fallthru
          _
        // Predicated region
        $region41: #{text_encoder_forward.4} parent=11 // pred_check
          %p424 = pneg %p244
        $region42: #{text_encoder_forward.4} parent=11 // pred_check_branch
          %426 = sbr.rel (%p424) target = $region44
        $region43: #{text_encoder_forward.4} parent=11 // pred_region
          %s428 = ssub.s32 16, 16
          %429 = vsyncadd [#allocation11], %s428
          %s431 = sshll.u32 [#allocation12], 4
          %s432 = int_to_ptr.vmem [resolvable:$true] %s431
          %434 = dma.hbm_to_vmem [thread:$0]  %s9, 16, %s432, [#allocation11]
        $region44: #{text_encoder_forward.4} parent=11 // pred_fallthru
          _
        // Predicated region
        $region45: #{text_encoder_forward.4} parent=11 // pred_check
          %p435 = pneg %p265
        $region46: #{text_encoder_forward.4} parent=11 // pred_check_branch
          %437 = sbr.rel (%p435) target = $region48
        $region47: #{text_encoder_forward.4} parent=11 // pred_region
          _
        $region48: #{text_encoder_forward.4} parent=11 // pred_fallthru
          _
        // Predicated region
        $region49: #{text_encoder_forward.4} parent=11 // pred_check
          %p438 = pneg %p286
        $region50: #{text_encoder_forward.4} parent=11 // pred_check_branch
          %440 = sbr.rel (%p438) target = $region52
        $region51: #{text_encoder_forward.4} parent=11 // pred_region
          _
        $region52: #{text_encoder_forward.4} parent=11 // pred_fallthru
          _
        // Predicated region
        $region53: #{text_encoder_forward.4} parent=11 // pred_check
          %p441 = pneg %p307
        $region54: #{text_encoder_forward.4} parent=11 // pred_check_branch
          %443 = sbr.rel (%p441) target = $region56
        $region55: #{text_encoder_forward.4} parent=11 // pred_region
          _
        $region56: #{text_encoder_forward.4} parent=11 // pred_fallthru
          _
        // Predicated region
        $region57: #{text_encoder_forward.4} parent=11 // pred_check
          %p444 = pneg %p328
        $region58: #{text_encoder_forward.4} parent=11 // pred_check_branch
          %446 = sbr.rel (%p444) target = $region60
        $region59: #{text_encoder_forward.4} parent=11 // pred_region
          %s448 = ssub.s32 16, 16
          %449 = vsyncadd [#allocation14], %s448
          %s451 = sshll.u32 [#allocation13], 4
          %s452 = int_to_ptr.vmem [resolvable:$true] %s451
          %454 = dma.hbm_to_vmem [thread:$0]  %s13, 16, %s452, [#allocation14]
        $region60: #{text_encoder_forward.4} parent=11 // pred_fallthru
          _
      $region12: #{text_encoder_forward.4} parent=5 // pred_fallthru
        _
      %p455 = scmp.lt.s32.totalorder %s24, 2
      // Predicated region
      $region61: #{text_encoder_forward.4} parent=5 // pred_check
        %p456 = pneg %p455
      $region62: #{text_encoder_forward.4} parent=5 // pred_check_branch
        %458 = sbr.rel (%p456) target = $region64
      $region63: #{text_encoder_forward.4} parent=5 // pred_region
        // Predicated region
        $region65: #{text_encoder_forward.4} parent=63 // pred_check
          %p459 = pneg %p44
        $region66: #{text_encoder_forward.4} parent=63 // pred_check_branch
          %461 = sbr.rel (%p459) target = $region68
        $region67: #{text_encoder_forward.4} parent=63 // pred_region
          %s462 = smul.u32 2, %s24
          %p463 = scmp.lt.s32.totalorder %s462, 3
          %s464 = scalar_select %p463, %s462, 3
          %s465 = smul.addr %s464, 2
          %s466 = smul.addr %s465, 8
          %s467 = scalar_lea.vmem %s0, %s466
          %s468 = smul.u32 2, %s24
        $region68: #{text_encoder_forward.4} parent=63 // pred_fallthru
          _
        // Predicated region
        $region69: #{text_encoder_forward.4} parent=63 // pred_check
          %p469 = pneg %p70
        $region70: #{text_encoder_forward.4} parent=63 // pred_check_branch
          %471 = sbr.rel (%p469) target = $region72
        $region71: #{text_encoder_forward.4} parent=63 // pred_region
          %s472 = smul.u32 2, %s24
          %p473 = scmp.lt.s32.totalorder %s472, 3
          %s474 = scalar_select %p473, %s472, 3
          %s475 = smul.addr %s474, 2
          %s476 = smul.addr %s475, 8
          %s477 = scalar_lea.vmem %s1, %s476
          %s478 = smul.u32 2, %s24
        $region72: #{text_encoder_forward.4} parent=63 // pred_fallthru
          _
      $region64: #{text_encoder_forward.4} parent=5 // pred_fallthru
        _
      %p479 = scmp.le.s32.totalorder 1, %s24
      %p480 = scmp.lt.s32.totalorder %s24, 3
      %p481 = pnand %p479, %p480
      %p482 = pneg %p481
      // Predicated region
      $region73: #{text_encoder_forward.4} parent=5 // pred_check
        _
      $region74: #{text_encoder_forward.4} parent=5 // pred_check_branch
        %484 = sbr.rel (%p481) target = $region76
      $region75: #{text_encoder_forward.4} parent=5 // pred_region
        %s485 = ssub.s32 %s24, 1
        // Predicated region
        $region77: #{text_encoder_forward.4} parent=75 // pred_check
          %p486 = pneg %p97
        $region78: #{text_encoder_forward.4} parent=75 // pred_check_branch
          %488 = sbr.rel (%p486) target = $region80
        $region79: #{text_encoder_forward.4} parent=75 // pred_region
          %489 = dma.done [#allocation6], 16
        $region80: #{text_encoder_forward.4} parent=75 // pred_fallthru
          _
        // Predicated region
        $region81: #{text_encoder_forward.4} parent=75 // pred_check
          %p490 = pneg %p118
        $region82: #{text_encoder_forward.4} parent=75 // pred_check_branch
          %492 = sbr.rel (%p490) target = $region84
        $region83: #{text_encoder_forward.4} parent=75 // pred_region
          %493 = dma.done [#allocation8], 16
        $region84: #{text_encoder_forward.4} parent=75 // pred_fallthru
          _
        // Predicated region
        $region85: #{text_encoder_forward.4} parent=75 // pred_check
          %p494 = pneg %p139
        $region86: #{text_encoder_forward.4} parent=75 // pred_check_branch
          %496 = sbr.rel (%p494) target = $region88
        $region87: #{text_encoder_forward.4} parent=75 // pred_region
          %497 = dma.done [#allocation8], 3072
        $region88: #{text_encoder_forward.4} parent=75 // pred_fallthru
          _
        // Predicated region
        $region89: #{text_encoder_forward.4} parent=75 // pred_check
          %p498 = pneg %p223
        $region90: #{text_encoder_forward.4} parent=75 // pred_check_branch
          %500 = sbr.rel (%p498) target = $region92
        $region91: #{text_encoder_forward.4} parent=75 // pred_region
          %501 = dma.done [#allocation11], 16
        $region92: #{text_encoder_forward.4} parent=75 // pred_fallthru
          _
        // Predicated region
        $region93: #{text_encoder_forward.4} parent=75 // pred_check
          %p502 = pneg %p244
        $region94: #{text_encoder_forward.4} parent=75 // pred_check_branch
          %504 = sbr.rel (%p502) target = $region96
        $region95: #{text_encoder_forward.4} parent=75 // pred_region
          %505 = dma.done [#allocation11], 16
        $region96: #{text_encoder_forward.4} parent=75 // pred_fallthru
          _
        // Predicated region
        $region97: #{text_encoder_forward.4} parent=75 // pred_check
          %p506 = pneg %p328
        $region98: #{text_encoder_forward.4} parent=75 // pred_check_branch
          %508 = sbr.rel (%p506) target = $region100
        $region99: #{text_encoder_forward.4} parent=75 // pred_region
          %509 = dma.done [#allocation14], 16
        $region100: #{text_encoder_forward.4} parent=75 // pred_fallthru
          _
        %s510 = smul.u32 2, %s29
        %p511 = scmp.lt.s32.totalorder %s510, 3
        %s512 = scalar_select %p511, %s510, 3
        %s513 = smul.addr %s512, 2
        %s514 = smul.addr %s513, 8
        %s515 = scalar_lea.vmem %s0, %s514
        %p516 = pneg %p50
        %p517 = pneg %p47
        %s518 = smul.u32 2, %s29
        %p519 = scmp.lt.s32.totalorder %s518, 3
        %s520 = scalar_select %p519, %s518, 3
        %s521 = smul.addr %s520, 2
        %s522 = smul.addr %s521, 8
        %s523 = scalar_lea.vmem %s1, %s522
        %p524 = pneg %p76
        %p525 = pneg %p73
        %p526 = pneg %p97
        %p527 = pneg %p94
        %p528 = pneg %p118
        %p529 = pneg %p115
        %p530 = pneg %p139
        %p531 = pneg %p136
        %p532 = pneg %p160
        %p533 = pneg %p157
        %p534 = pneg %p181
        %p535 = pneg %p178
        %p536 = pneg %p202
        %p537 = pneg %p199
        %p538 = pneg %p223
        %p539 = pneg %p220
        %p540 = pneg %p244
        %p541 = pneg %p241
        %p542 = pneg %p265
        %p543 = pneg %p262
        %p544 = pneg %p286
        %p545 = pneg %p283
        %p546 = pneg %p307
        %p547 = pneg %p304
        %p548 = pneg %p328
        %p549 = pneg %p325
        %p550 = pneg %p354
        %p551 = pneg %p351
        %s552 = smul.u32 2, %s29
        %p553 = scmp.lt.s32.totalorder %s552, 3
        %s554 = scalar_select %p553, %s552, 3
        %s555 = smul.addr %s554, 2
        %s556 = smul.addr %s555, 8
        %s557 = scalar_lea.vmem %s14, %s556
        %s558 = smul.u32 2, %s29
        %p559 = scmp.lt.s32.totalorder %s558, 3
        %s560 = scalar_select %p559, %s558, 3
        %s561 = smul.addr %s560, 2
        %s562 = smul.addr %s561, 8
        %s563 = scalar_lea.vmem %s0, %s562
        %s564 = smul.u32 2, %s29
        %s565 = smul.u32 2, %s29
        %p566 = scmp.lt.s32.totalorder %s565, 3
        %s567 = scalar_select %p566, %s565, 3
        %s568 = smul.addr %s567, 2
        %s569 = smul.addr %s568, 8
        %s570 = scalar_lea.vmem %s1, %s569
        %s571 = smul.u32 2, %s29
        %s572 = smul.u32 2, %s29
        %p573 = scmp.lt.s32.totalorder %s572, 3
        %s574 = scalar_select %p573, %s572, 3
        %s575 = smul.addr %s574, 2
        %s576 = smul.addr %s575, 8
        %s577 = scalar_lea.vmem %s14, %s576
        %s578 = smul.u32 2, %s29
        %v580 = vld [vmem:[%s563] sm:$0xff]
        %v581 = vld [vmem:[%s563 + $0x8] sm:$0xff]
        %v582 = vld [vmem:[%s563 + $0x10] sm:$0xff]
        %v583 = vld [vmem:[%s563 + $0x18] sm:$0xff]
        %584 = vadd.xlane.f32.xlu0 %v580
        %v585 = vpop.xlane.xlu0 %584
        %586 = vadd.xlane.f32.xlu0 %v581
        %v587 = vpop.xlane.xlu0 %586
        %588 = vadd.xlane.f32.xlu0 %v582
        %v589 = vpop.xlane.xlu0 %588
        %590 = vadd.xlane.f32.xlu0 %v583
        %v591 = vpop.xlane.xlu0 %590
        %v592 = vrcp.pop 128.0
        %v593 = vmul.f32 %v585, %v592
        %v594 = vmul.f32 %v587, %v592
        %v595 = vmul.f32 %v589, %v592
        %v596 = vmul.f32 %v591, %v592
        %v597 = vsub.f32 %v580, %v593
        %v598 = vsub.f32 %v581, %v594
        %v599 = vsub.f32 %v582, %v595
        %v600 = vsub.f32 %v583, %v596
        %v601 = vmul.f32 %v597, %v597
        %v602 = vmul.f32 %v598, %v598
        %v603 = vmul.f32 %v599, %v599
        %v604 = vmul.f32 %v600, %v600
        %605 = vadd.xlane.f32.xlu0 %v601
        %v606 = vpop.xlane.xlu0 %605
        %607 = vadd.xlane.f32.xlu0 %v602
        %v608 = vpop.xlane.xlu0 %607
        %609 = vadd.xlane.f32.xlu0 %v603
        %v610 = vpop.xlane.xlu0 %609
        %611 = vadd.xlane.f32.xlu0 %v604
        %v612 = vpop.xlane.xlu0 %611
        %v613 = vmul.f32 %v606, %v592
        %v614 = vmul.f32 %v608, %v592
        %v615 = vmul.f32 %v610, %v592
        %v616 = vmul.f32 %v612, %v592
        %v617 = vadd.f32 %v613, 1e-05
        %v618 = vadd.f32 %v614, 1e-05
        %v619 = vadd.f32 %v615, 1e-05
        %v620 = vadd.f32 %v616, 1e-05
        %v621 = vrsqrt.pop %v617
        %v622 = vrsqrt.pop %v618
        %v623 = vrsqrt.pop %v619
        %v624 = vrsqrt.pop %v620
        %v625 = vmul.f32 %v597, %v621
        %v626 = vmul.f32 %v598, %v622
        %v627 = vmul.f32 %v599, %v623
        %v628 = vmul.f32 %v600, %v624
        %v629 = vld [vmem:[#allocation5] sm:$0x1]
        %v631 = vlaneseq
        %v632 = vshrl.u32 %v631, 7
        %v633 = vsub.s32 0, %v632
        %v634 = vrot.slane %v629, %v633
        %v636 = vmul.f32 %v625, %v634
        %v637 = vmul.f32 %v626, %v634
        %v638 = vmul.f32 %v627, %v634
        %v639 = vmul.f32 %v628, %v634
        %v640 = vld [vmem:[#allocation7] sm:$0x1]
        %v642 = vlaneseq
        %v643 = vshrl.u32 %v642, 7
        %v644 = vsub.s32 0, %v643
        %v645 = vrot.slane %v640, %v644
        %v647 = vadd.f32 %v636, %v645
        %v648 = vadd.f32 %v637, %v645
        %v649 = vadd.f32 %v638, %v645
        %v650 = vadd.f32 %v639, %v645
        %v651 = vpack.c.bf16 %v648, %v647
        %v652 = vpack.c.bf16 %v650, %v649
        %v653 = vld [vmem:[#allocation9] sm:$0xff]
        %v654 = vld [vmem:[#allocation9 + $0x8] sm:$0xf]
        %v655 = vld [vmem:[#allocation9 + $0xc] sm:$0xff]
        %v656 = vld [vmem:[#allocation9 + $0x14] sm:$0xf]
        %v657 = vld [vmem:[#allocation9 + $0x18] sm:$0xff]
        %v658 = vld [vmem:[#allocation9 + $0x20] sm:$0xf]
        %v659 = vld [vmem:[#allocation9 + $0x24] sm:$0xff]
        %v660 = vld [vmem:[#allocation9 + $0x2c] sm:$0xf]
        %v661 = vld [vmem:[#allocation9 + $0x30] sm:$0xff]
        %v662 = vld [vmem:[#allocation9 + $0x38] sm:$0xf]
        %v663 = vld [vmem:[#allocation9 + $0x3c] sm:$0xff]
        %v664 = vld [vmem:[#allocation9 + $0x44] sm:$0xf]
        %v665 = vld [vmem:[#allocation9 + $0x48] sm:$0xff]
        %v666 = vld [vmem:[#allocation9 + $0x50] sm:$0xf]
        %v667 = vld [vmem:[#allocation9 + $0x54] sm:$0xff]
        %v668 = vld [vmem:[#allocation9 + $0x5c] sm:$0xf]
        %v669 = vld [vmem:[#allocation9 + $0x60] sm:$0xff]
        %v670 = vld [vmem:[#allocation9 + $0x68] sm:$0xf]
        %v671 = vld [vmem:[#allocation9 + $0x6c] sm:$0xff]
        %v672 = vld [vmem:[#allocation9 + $0x74] sm:$0xf]
        %v673 = vld [vmem:[#allocation9 + $0x78] sm:$0xff]
        %v674 = vld [vmem:[#allocation9 + $0x80] sm:$0xf]
        %v675 = vld [vmem:[#allocation9 + $0x84] sm:$0xff]
        %v676 = vld [vmem:[#allocation9 + $0x8c] sm:$0xf]
        %v677 = vld [vmem:[#allocation9 + $0x90] sm:$0xff]
        %v678 = vld [vmem:[#allocation9 + $0x98] sm:$0xf]
        %v679 = vld [vmem:[#allocation9 + $0x9c] sm:$0xff]
        %v680 = vld [vmem:[#allocation9 + $0xa4] sm:$0xf]
        %v681 = vld [vmem:[#allocation9 + $0xa8] sm:$0xff]
        %v682 = vld [vmem:[#allocation9 + $0xb0] sm:$0xf]
        %v683 = vld [vmem:[#allocation9 + $0xb4] sm:$0xff]
        %v684 = vld [vmem:[#allocation9 + $0xbc] sm:$0xf]
        %v685 = vld [vmem:[%s5] sm:$0x7]
        %v687 = vlaneseq
        %v688 = vshrl.u32 %v687, 7
        %v689 = vsub.s32 0, %v688
        %v690 = vrot.slane %v685, %v689
        %v691 = vlaneseq
        %v692 = vshrl.u32 %v691, 7
        %v693 = vsub.s32 1, %v692
        %v694 = vrot.slane %v685, %v693
        %v695 = vlaneseq
        %v696 = vshrl.u32 %v695, 7
        %v697 = vsub.s32 2, %v696
        %v698 = vrot.slane %v685, %v697
        %v734 = vunpack.c.l.b16 %v653
        %v735 = vunpack.c.h.b16 %v653
        %v736 = vunpack.c.l.b16 %v654
        %v737 = vunpack.c.l.b16 %v655
        %v738 = vunpack.c.h.b16 %v655
        %v739 = vunpack.c.l.b16 %v656
        %v740 = vunpack.c.l.b16 %v657
        %v741 = vunpack.c.h.b16 %v657
        %v742 = vunpack.c.l.b16 %v658
        %v743 = vunpack.c.l.b16 %v659
        %v744 = vunpack.c.h.b16 %v659
        %v745 = vunpack.c.l.b16 %v660
        %v746 = vunpack.c.l.b16 %v661
        %v747 = vunpack.c.h.b16 %v661
        %v748 = vunpack.c.l.b16 %v662
        %v749 = vunpack.c.l.b16 %v663
        %v750 = vunpack.c.h.b16 %v663
        %v751 = vunpack.c.l.b16 %v664
        %v752 = vunpack.c.l.b16 %v665
        %v753 = vunpack.c.h.b16 %v665
        %v754 = vunpack.c.l.b16 %v666
        %v755 = vunpack.c.l.b16 %v667
        %v756 = vunpack.c.h.b16 %v667
        %v757 = vunpack.c.l.b16 %v668
        %v758 = vunpack.c.l.b16 %v669
        %v759 = vunpack.c.h.b16 %v669
        %v760 = vunpack.c.l.b16 %v670
        %v761 = vunpack.c.l.b16 %v671
        %v762 = vunpack.c.h.b16 %v671
        %v763 = vunpack.c.l.b16 %v672
        %v764 = vunpack.c.l.b16 %v673
        %v765 = vunpack.c.h.b16 %v673
        %v766 = vunpack.c.l.b16 %v674
        %v767 = vunpack.c.l.b16 %v675
        %v768 = vunpack.c.h.b16 %v675
        %v769 = vunpack.c.l.b16 %v676
        %v770 = vunpack.c.l.b16 %v677
        %v771 = vunpack.c.h.b16 %v677
        %v772 = vunpack.c.l.b16 %v678
        %v773 = vunpack.c.l.b16 %v679
        %v774 = vunpack.c.h.b16 %v679
        %v775 = vunpack.c.l.b16 %v680
        %v776 = vunpack.c.l.b16 %v681
        %v777 = vunpack.c.h.b16 %v681
        %v778 = vunpack.c.l.b16 %v682
        %v779 = vunpack.c.l.b16 %v683
        %v780 = vunpack.c.h.b16 %v683
        %v781 = vunpack.c.l.b16 %v684
        %v782 = vpack.c.b16 %v737, %v734
        %v783 = vpack.c.b16 %v738, %v735
        %v784 = vpack.c.b16 %v739, %v736
        %v785 = vpack.c.b16 %v743, %v740
        %v786 = vpack.c.b16 %v744, %v741
        %v787 = vpack.c.b16 %v745, %v742
        %v788 = vpack.c.b16 %v749, %v746
        %v789 = vpack.c.b16 %v750, %v747
        %v790 = vpack.c.b16 %v751, %v748
        %v791 = vpack.c.b16 %v755, %v752
        %v792 = vpack.c.b16 %v756, %v753
        %v793 = vpack.c.b16 %v757, %v754
        %v794 = vpack.c.b16 %v761, %v758
        %v795 = vpack.c.b16 %v762, %v759
        %v796 = vpack.c.b16 %v763, %v760
        %v797 = vpack.c.b16 %v767, %v764
        %v798 = vpack.c.b16 %v768, %v765
        %v799 = vpack.c.b16 %v769, %v766
        %v800 = vpack.c.b16 %v773, %v770
        %v801 = vpack.c.b16 %v774, %v771
        %v802 = vpack.c.b16 %v775, %v772
        %v803 = vpack.c.b16 %v779, %v776
        %v804 = vpack.c.b16 %v780, %v777
        %v805 = vpack.c.b16 %v781, %v778
        %830 = vmatprep.subr.bf16.mxu0 %v804
        %831 = vmatpush1.bf16.msra.mxu0 %v803
        %832 = vmatprep.subr.bf16.mxu0 %v801
        %833 = vmatpush1.bf16.msra.mxu0 %v800
        %834 = vmatprep.subr.bf16.mxu0 %v798
        %835 = vmatpush1.bf16.msra.mxu0 %v797
        %836 = vmatprep.subr.bf16.mxu0 %v795
        %837 = vmatpush1.bf16.msra.mxu0 %v794
        %838 = vmatprep.subr.bf16.mxu0 %v792
        %839 = vmatpush1.bf16.msra.mxu0 %v791
        %840 = vmatprep.subr.bf16.mxu0 %v789
        %841 = vmatpush1.bf16.msra.mxu0 %v788
        %842 = vmatprep.subr.bf16.mxu0 %v786
        %843 = vmatpush1.bf16.msra.mxu0 %v785
        %844 = vmatprep.subr.bf16.mxu0 %v783
        %845 = vmatpush1.bf16.msra.mxu0 %v782
        %846 = vmatprep.subr.bf16.mxu0 0
        %847 = vmatpush2.bf16.msra.mxu0 0
        %848 = vmatprep.subr.bf16.mxu0 0
        %849 = vmatpush2.bf16.msra.mxu0 0
        %850 = vmatprep.subr.bf16.mxu0 0
        %851 = vmatpush2.bf16.msra.mxu0 0
        %852 = vmatprep.subr.bf16.mxu0 0
        %853 = vmatpush2.bf16.msra.mxu0 0
        %854 = vmatprep.subr.bf16.mxu0 0
        %855 = vmatpush2.bf16.msra.mxu0 0
        %856 = vmatprep.subr.bf16.mxu0 0
        %857 = vmatpush2.bf16.msra.mxu0 0
        %858 = vmatprep.subr.bf16.mxu0 0
        %859 = vmatpush2.bf16.msra.mxu0 0
        %860 = vmatprep.subr.bf16.mxu0 0
        %861 = vmatpush2.bf16.msra.mxu0 0
        %862 = vmatprep.mubr.bf16.mxu0 0
        %863 = vmatmul.mubr.bf16.gmra.mxu0 %v651
        %v864 = vpop.f32.mrf.mxu0
        %v865 = vadd.f32 %v690, %v864
        %v866 = vpop.f32.mrf.mxu0
        %v867 = vadd.f32 %v694, %v866
        %v868 = vpop.f32.mrf.mxu0
        %v869 = vadd.f32 %v690, %v868
        %v870 = vpop.f32.mrf.mxu0
        %v871 = vadd.f32 %v694, %v870
        %872 = vmatprep.mubr.bf16.mxu0 0
        %873 = vmatmul.mubr.bf16.gmra.mxu0 %v652
        %v874 = vpop.f32.mrf.mxu0
        %v875 = vadd.f32 %v690, %v874
        %v876 = vpop.f32.mrf.mxu0
        %v877 = vadd.f32 %v694, %v876
        %v878 = vpop.f32.mrf.mxu0
        %v879 = vadd.f32 %v690, %v878
        %v880 = vpop.f32.mrf.mxu0
        %v881 = vadd.f32 %v694, %v880
        %882 = vdwg.mxu0
        %883 = vmatprep.subr.bf16.mxu0 0
        %884 = vmatpush1.bf16.msra.mxu0 %v805
        %885 = vmatprep.subr.bf16.mxu0 0
        %886 = vmatpush1.bf16.msra.mxu0 %v802
        %887 = vmatprep.subr.bf16.mxu0 0
        %888 = vmatpush1.bf16.msra.mxu0 %v799
        %889 = vmatprep.subr.bf16.mxu0 0
        %890 = vmatpush1.bf16.msra.mxu0 %v796
        %891 = vmatprep.subr.bf16.mxu0 0
        %892 = vmatpush1.bf16.msra.mxu0 %v793
        %893 = vmatprep.subr.bf16.mxu0 0
        %894 = vmatpush1.bf16.msra.mxu0 %v790
        %895 = vmatprep.subr.bf16.mxu0 0
        %896 = vmatpush1.bf16.msra.mxu0 %v787
        %897 = vmatprep.subr.bf16.mxu0 0
        %898 = vmatpush1.bf16.msra.mxu0 %v784
        %899 = vmatprep.subr.bf16.mxu0 0
        %900 = vmatpush2.bf16.msra.mxu0 0
        %901 = vmatprep.subr.bf16.mxu0 0
        %902 = vmatpush2.bf16.msra.mxu0 0
        %903 = vmatprep.subr.bf16.mxu0 0
        %904 = vmatpush2.bf16.msra.mxu0 0
        %905 = vmatprep.subr.bf16.mxu0 0
        %906 = vmatpush2.bf16.msra.mxu0 0
        %907 = vmatprep.subr.bf16.mxu0 0
        %908 = vmatpush2.bf16.msra.mxu0 0
        %909 = vmatprep.subr.bf16.mxu0 0
        %910 = vmatpush2.bf16.msra.mxu0 0
        %911 = vmatprep.subr.bf16.mxu0 0
        %912 = vmatpush2.bf16.msra.mxu0 0
        %913 = vmatprep.subr.bf16.mxu0 0
        %914 = vmatpush2.bf16.msra.mxu0 0
        %915 = vmatprep.mubr.bf16.mxu0 0
        %916 = vmatmul.mubr.bf16.gmra.mxu0 %v651
        %v917 = vpop.f32.mrf.mxu0
        %v918 = vadd.f32 %v698, %v917
        %v919 = vpop.f32.mrf.mxu0
        %v920 = vpop.f32.mrf.mxu0
        %v921 = vadd.f32 %v698, %v920
        %v922 = vpop.f32.mrf.mxu0
        %923 = vmatprep.mubr.bf16.mxu0 0
        %924 = vmatmul.mubr.bf16.gmra.mxu0 %v652
        %v925 = vpop.f32.mrf.mxu0
        %v926 = vadd.f32 %v698, %v925
        %v927 = vpop.f32.mrf.mxu0
        %v928 = vpop.f32.mrf.mxu0
        %v929 = vadd.f32 %v698, %v928
        %v930 = vpop.f32.mrf.mxu0
        %931 = vdwg.mxu0
        %v932 = vpack.c.bf16 %v869, %v865
        %v933 = vpack.c.bf16 %v871, %v867
        %v934 = vpack.c.bf16 %v921, %v918
        %v935 = vpack.c.bf16 %v879, %v875
        %v936 = vpack.c.bf16 %v881, %v877
        %v937 = vpack.c.bf16 %v929, %v926
        %v944 = vunpack.c.l.b16 %v932
        %v945 = vunpack.c.l.b16 %v933
        %v946 = vunpack.c.l.b16 %v934
        %v947 = vunpack.c.h.b16 %v932
        %v948 = vunpack.c.h.b16 %v933
        %v949 = vunpack.c.h.b16 %v934
        %v950 = vunpack.c.l.b16 %v935
        %v951 = vunpack.c.l.b16 %v936
        %v952 = vunpack.c.l.b16 %v937
        %v953 = vunpack.c.h.b16 %v935
        %v954 = vunpack.c.h.b16 %v936
        %v955 = vunpack.c.h.b16 %v937
        %v956 = vpack.c.b16 %v945, %v944
        %v957 = vpack.c.b16 %v946, %v946
        %v958 = vpack.c.b16 %v948, %v947
        %v959 = vpack.c.b16 %v949, %v949
        %v960 = vpack.c.b16 %v951, %v950
        %v961 = vpack.c.b16 %v952, %v952
        %v962 = vpack.c.b16 %v954, %v953
        %v963 = vpack.c.b16 %v955, %v955
        %972 = vst [vmem:[#allocation2] sm:$0xff] %v956
        %973 = vst [vmem:[#allocation2 + $0x8] sm:$0xf] %v957
        %974 = vst [vmem:[#allocation2 + $0xc] sm:$0xff] %v958
        %975 = vst [vmem:[#allocation2 + $0x14] sm:$0xf] %v959
        %976 = vst [vmem:[#allocation2 + $0x18] sm:$0xff] %v960
        %977 = vst [vmem:[#allocation2 + $0x20] sm:$0xf] %v961
        %978 = vst [vmem:[#allocation2 + $0x24] sm:$0xff] %v962
        %979 = vst [vmem:[#allocation2 + $0x2c] sm:$0xf] %v963
        loop: start=0, step=1, limit=2
        $region101: #{text_encoder_forward.4} parent=75 // loop_pre_header
          _
        $region102: #{text_encoder_forward.4} parent=75 // loop_header
          %s981 = sphi 0, %s985
          %p982 = scmp.ge.s32.totalorder %s981, 2
        $region103: #{text_encoder_forward.4} parent=75 // loop_header_branch
          %984 = sbr.rel (%p982) target = $region107
        $region104: #{text_encoder_forward.4} parent=75 // loop_body
          %s986 = smul.u32 %s981, 16
          %s987 = scalar_lea.vmem %s570, %s986
          %v988 = vld [vmem:[%s987] sm:$0xff]
          %v989 = vld [vmem:[%s987 + $0x8] sm:$0xff]
          %s990 = sshra.s32 %s986, 3
          %s991 = sand.u32 %s986, 7
          %s992 = smul.u32 %s990, 3
          %s993 = smul.addr %s992, 4
          %s994 = scalar_lea.vmem [#allocation2], %s993
          %v995 = vld [vmem:[%s994] sm:$0xf]
          %v996 = vld [vmem:[%s994 + $0xc] sm:$0xf]
          %v997 = vld [vmem:[%s994 + $0x4] sm:$0xf]
          %v998 = vld [vmem:[%s994 + $0x10] sm:$0xf]
          %v999 = vld [vmem:[%s994 + $0x8] sm:$0xf]
          %v1000 = vld [vmem:[%s994 + $0x14] sm:$0xf]
          %v1003 = vunpack.c.l.b16 %v995
          %v1004 = vunpack.c.l.b16 %v996
          %v1005 = vpack.c.b16 %v1004, %v1003
          %v1008 = vunpack.c.l.b16 %v997
          %v1009 = vunpack.c.l.b16 %v998
          %v1010 = vpack.c.b16 %v1009, %v1008
          %vm1011 = vcmask 261120
          %v1013 = vsel %vm1011, %v1005, 0
          %v1016 = vsel %vm1011, %v1010, 0
          %1018 = vmatprep.subr.bf16.mxu0 0
          %1019 = vmatpush1.bf16.xpose.msra.mxu0 0
          %1020 = vmatprep.subr.bf16.mxu0 0
          %1021 = vmatpush1.bf16.xpose.msra.mxu0 0
          %1022 = vmatprep.subr.bf16.mxu0 0
          %1023 = vmatpush1.bf16.xpose.msra.mxu0 0
          %1024 = vmatprep.subr.bf16.mxu0 0
          %1025 = vmatpush1.bf16.xpose.msra.mxu0 0
          %1026 = vmatprep.subr.bf16.mxu0 0
          %1027 = vmatpush1.bf16.xpose.msra.mxu0 0
          %1028 = vmatprep.subr.bf16.mxu0 0
          %1029 = vmatpush1.bf16.xpose.msra.mxu0 0
          %1030 = vmatprep.subr.bf16.mxu0 0
          %1031 = vmatpush1.bf16.xpose.msra.mxu0 0
          %1032 = vmatprep.subr.bf16.mxu0 0
          %1033 = vmatpush1.bf16.xpose.msra.mxu0 %v1016
          %1034 = vmatprep.subr.bf16.mxu0 0
          %1035 = vmatpush2.bf16.xpose.msra.mxu0 0
          %1036 = vmatprep.subr.bf16.mxu0 0
          %1037 = vmatpush2.bf16.xpose.msra.mxu0 0
          %1038 = vmatprep.subr.bf16.mxu0 0
          %1039 = vmatpush2.bf16.xpose.msra.mxu0 0
          %1040 = vmatprep.subr.bf16.mxu0 0
          %1041 = vmatpush2.bf16.xpose.msra.mxu0 0
          %1042 = vmatprep.subr.bf16.mxu0 0
          %1043 = vmatpush2.bf16.xpose.msra.mxu0 0
          %1044 = vmatprep.subr.bf16.mxu0 0
          %1045 = vmatpush2.bf16.xpose.msra.mxu0 0
          %1046 = vmatprep.subr.bf16.mxu0 0
          %1047 = vmatpush2.bf16.xpose.msra.mxu0 0
          %1048 = vmatprep.subr.bf16.mxu0 0
          %1049 = vmatpush2.bf16.xpose.msra.mxu0 0
          %1050 = vmatprep.mubr.bf16.mxu0 0
          %1051 = vmatmul.mubr.bf16.gmra.mxu0 %v1013
          %v1052 = vpop.f32.mrf.mxu0
          %v1053 = vadd.f32 0.0, %v1052
          %v1054 = vpop.f32.mrf.mxu0
          %v1055 = vpop.f32.mrf.mxu0
          %v1056 = vadd.f32 0.0, %v1055
          %v1057 = vpop.f32.mrf.mxu0
          %1058 = vdwg.mxu0
          %v1059 = vmul.f32 %v1053, 0.17677669
          %v1060 = vmul.f32 %v1056, 0.17677669
          %v1061 = vadd.f32 %v1059, %v988
          %v1062 = vadd.f32 %v1060, %v989
          %vm1063 = vcmask 130048
          %v1064 = vsel %vm1063, %v1061, -inf
          %1065 = vmax.xlane.f32.xlu0 %v1064
          %v1066 = vpop.xlane.xlu0 %1065
          %v1067 = vsel %vm1063, %v1062, -inf
          %1068 = vmax.xlane.f32.xlu0 %v1067
          %v1069 = vpop.xlane.xlu0 %1068
          %v1070 = vsub.f32 %v1061, %v1066
          %v1071 = vsub.f32 %v1062, %v1069
          %v1072 = vmul.f32 %v1070, 1.442695
          %v1073 = vpow.pop %v1072
          %v1074 = vmul.f32 %v1071, 1.442695
          %v1075 = vpow.pop %v1074
          %v1076 = vsel %vm1063, %v1073, 0.0
          %1077 = vadd.xlane.f32.xlu0 %v1076
          %v1078 = vpop.xlane.xlu0 %1077
          %v1079 = vsel %vm1063, %v1075, 0.0
          %1080 = vadd.xlane.f32.xlu0 %v1079
          %v1081 = vpop.xlane.xlu0 %1080
          %v1082 = vrcp.pop %v1078
          %v1083 = vrcp.pop %v1081
          %v1084 = vmul.f32 %v1073, %v1082
          %v1085 = vmul.f32 %v1075, %v1083
          %v1086 = vpack.c.bf16 %v1085, %v1084
          %v1089 = vunpack.c.l.b16 %v999
          %v1090 = vunpack.c.l.b16 %v1000
          %v1091 = vpack.c.b16 %v1090, %v1089
          %v1094 = vsel %vm1063, %v1086, 0
          %1096 = vmatprep.subr.bf16.mxu0 0
          %1097 = vmatpush1.bf16.msra.mxu0 0
          %1098 = vmatprep.subr.bf16.mxu0 0
          %1099 = vmatpush1.bf16.msra.mxu0 0
          %1100 = vmatprep.subr.bf16.mxu0 0
          %1101 = vmatpush1.bf16.msra.mxu0 0
          %1102 = vmatprep.subr.bf16.mxu0 0
          %1103 = vmatpush1.bf16.msra.mxu0 0
          %1104 = vmatprep.subr.bf16.mxu0 0
          %1105 = vmatpush1.bf16.msra.mxu0 0
          %1106 = vmatprep.subr.bf16.mxu0 0
          %1107 = vmatpush1.bf16.msra.mxu0 0
          %1108 = vmatprep.subr.bf16.mxu0 0
          %1109 = vmatpush1.bf16.msra.mxu0 0
          %1110 = vmatprep.subr.bf16.mxu0 0
          %1111 = vmatpush1.bf16.msra.mxu0 %v1091
          %1112 = vmatprep.subr.bf16.mxu0 0
          %1113 = vmatpush2.bf16.msra.mxu0 0
          %1114 = vmatprep.subr.bf16.mxu0 0
          %1115 = vmatpush2.bf16.msra.mxu0 0
          %1116 = vmatprep.subr.bf16.mxu0 0
          %1117 = vmatpush2.bf16.msra.mxu0 0
          %1118 = vmatprep.subr.bf16.mxu0 0
          %1119 = vmatpush2.bf16.msra.mxu0 0
          %1120 = vmatprep.subr.bf16.mxu0 0
          %1121 = vmatpush2.bf16.msra.mxu0 0
          %1122 = vmatprep.subr.bf16.mxu0 0
          %1123 = vmatpush2.bf16.msra.mxu0 0
          %1124 = vmatprep.subr.bf16.mxu0 0
          %1125 = vmatpush2.bf16.msra.mxu0 0
          %1126 = vmatprep.subr.bf16.mxu0 0
          %1127 = vmatpush2.bf16.msra.mxu0 0
          %1128 = vmatprep.mubr.bf16.mxu0 0
          %1129 = vmatmul.mubr.bf16.gmra.mxu0 %v1094
          %v1130 = vpop.f32.mrf.mxu0
          %v1131 = vadd.f32 0.0, %v1130
          %v1132 = vpop.f32.mrf.mxu0
          %v1133 = vpop.f32.mrf.mxu0
          %v1134 = vadd.f32 0.0, %v1133
          %v1135 = vpop.f32.mrf.mxu0
          %1136 = vdwg.mxu0
          %v1137 = vpack.c.bf16 %v1134, %v1131
          %v1139 = vunpack.c.l.b16 %v1137
          %v1140 = vunpack.c.h.b16 %v1137
          %v1141 = vpack.c.b16 %v1139, %v1139
          %v1142 = vpack.c.b16 %v1140, %v1140
          %s1145 = smul.addr %s990, 4
          %s1146 = scalar_lea.vmem [#allocation3], %s1145
          %vm1147 = vcmask 257024
          %1148 = vst.msk [vmem:[%s1146] sm:$0xf] %vm1147, %v1141
          %1149 = vst.msk [vmem:[%s1146 + $0x4] sm:$0xf] %vm1147, %v1142
          %v1150 = vld [vmem:[%s994] sm:$0xf]
          %v1151 = vld [vmem:[%s994 + $0xc] sm:$0xf]
          %v1152 = vld [vmem:[%s994 + $0x4] sm:$0xf]
          %v1153 = vld [vmem:[%s994 + $0x10] sm:$0xf]
          %v1154 = vld [vmem:[%s994 + $0x8] sm:$0xf]
          %v1155 = vld [vmem:[%s994 + $0x14] sm:$0xf]
          %v1158 = vunpack.c.l.b16 %v1150
          %v1159 = vunpack.c.l.b16 %v1151
          %v1160 = vpack.c.b16 %v1159, %v1158
          %1161 = vrot.lane.b32.xlu0 %v1160, 96
          %v1162 = vpop.permute.xlu0 %1161
          %v1165 = vunpack.c.l.b16 %v1152
          %v1166 = vunpack.c.l.b16 %v1153
          %v1167 = vpack.c.b16 %v1166, %v1165
          %1168 = vrot.lane.b32.xlu0 %v1167, 96
          %v1169 = vpop.permute.xlu0 %1168
          %v1171 = vsel %vm1011, %v1162, 0
          %v1174 = vsel %vm1011, %v1169, 0
          %1176 = vmatprep.subr.bf16.mxu0 0
          %1177 = vmatpush1.bf16.xpose.msra.mxu0 0
          %1178 = vmatprep.subr.bf16.mxu0 0
          %1179 = vmatpush1.bf16.xpose.msra.mxu0 0
          %1180 = vmatprep.subr.bf16.mxu0 0
          %1181 = vmatpush1.bf16.xpose.msra.mxu0 0
          %1182 = vmatprep.subr.bf16.mxu0 0
          %1183 = vmatpush1.bf16.xpose.msra.mxu0 0
          %1184 = vmatprep.subr.bf16.mxu0 0
          %1185 = vmatpush1.bf16.xpose.msra.mxu0 0
          %1186 = vmatprep.subr.bf16.mxu0 0
          %1187 = vmatpush1.bf16.xpose.msra.mxu0 0
          %1188 = vmatprep.subr.bf16.mxu0 0
          %1189 = vmatpush1.bf16.xpose.msra.mxu0 0
          %1190 = vmatprep.subr.bf16.mxu0 0
          %1191 = vmatpush1.bf16.xpose.msra.mxu0 %v1174
          %1192 = vmatprep.subr.bf16.mxu0 0
          %1193 = vmatpush2.bf16.xpose.msra.mxu0 0
          %1194 = vmatprep.subr.bf16.mxu0 0
          %1195 = vmatpush2.bf16.xpose.msra.mxu0 0
          %1196 = vmatprep.subr.bf16.mxu0 0
          %1197 = vmatpush2.bf16.xpose.msra.mxu0 0
          %1198 = vmatprep.subr.bf16.mxu0 0
          %1199 = vmatpush2.bf16.xpose.msra.mxu0 0
          %1200 = vmatprep.subr.bf16.mxu0 0
          %1201 = vmatpush2.bf16.xpose.msra.mxu0 0
          %1202 = vmatprep.subr.bf16.mxu0 0
          %1203 = vmatpush2.bf16.xpose.msra.mxu0 0
          %1204 = vmatprep.subr.bf16.mxu0 0
          %1205 = vmatpush2.bf16.xpose.msra.mxu0 0
          %1206 = vmatprep.subr.bf16.mxu0 0
          %1207 = vmatpush2.bf16.xpose.msra.mxu0 0
          %1208 = vmatprep.mubr.bf16.mxu0 0
          %1209 = vmatmul.mubr.bf16.gmra.mxu0 %v1171
          %v1210 = vpop.f32.mrf.mxu0
          %v1211 = vadd.f32 0.0, %v1210
          %v1212 = vpop.f32.mrf.mxu0
          %v1213 = vpop.f32.mrf.mxu0
          %v1214 = vadd.f32 0.0, %v1213
          %v1215 = vpop.f32.mrf.mxu0
          %1216 = vdwg.mxu0
          %v1217 = vmul.f32 %v1211, 0.17677669
          %v1218 = vmul.f32 %v1214, 0.17677669
          %v1219 = vadd.f32 %v1217, %v988
          %v1220 = vadd.f32 %v1218, %v989
          %v1221 = vsel %vm1063, %v1219, -inf
          %1222 = vmax.xlane.f32.xlu0 %v1221
          %v1223 = vpop.xlane.xlu0 %1222
          %v1224 = vsel %vm1063, %v1220, -inf
          %1225 = vmax.xlane.f32.xlu0 %v1224
          %v1226 = vpop.xlane.xlu0 %1225
          %v1227 = vsub.f32 %v1219, %v1223
          %v1228 = vsub.f32 %v1220, %v1226
          %v1229 = vmul.f32 %v1227, 1.442695
          %v1230 = vpow.pop %v1229
          %v1231 = vmul.f32 %v1228, 1.442695
          %v1232 = vpow.pop %v1231
          %v1233 = vsel %vm1063, %v1230, 0.0
          %1234 = vadd.xlane.f32.xlu0 %v1233
          %v1235 = vpop.xlane.xlu0 %1234
          %v1236 = vsel %vm1063, %v1232, 0.0
          %1237 = vadd.xlane.f32.xlu0 %v1236
          %v1238 = vpop.xlane.xlu0 %1237
          %v1239 = vrcp.pop %v1235
          %v1240 = vrcp.pop %v1238
          %v1241 = vmul.f32 %v1230, %v1239
          %v1242 = vmul.f32 %v1232, %v1240
          %v1243 = vpack.c.bf16 %v1242, %v1241
          %v1246 = vunpack.c.l.b16 %v1154
          %v1247 = vunpack.c.l.b16 %v1155
          %v1248 = vpack.c.b16 %v1247, %v1246
          %1249 = vrot.lane.b32.xlu0 %v1248, 96
          %v1250 = vpop.permute.xlu0 %1249
          %v1253 = vsel %vm1063, %v1243, 0
          %1255 = vmatprep.subr.bf16.mxu0 0
          %1256 = vmatpush1.bf16.msra.mxu0 0
          %1257 = vmatprep.subr.bf16.mxu0 0
          %1258 = vmatpush1.bf16.msra.mxu0 0
          %1259 = vmatprep.subr.bf16.mxu0 0
          %1260 = vmatpush1.bf16.msra.mxu0 0
          %1261 = vmatprep.subr.bf16.mxu0 0
          %1262 = vmatpush1.bf16.msra.mxu0 0
          %1263 = vmatprep.subr.bf16.mxu0 0
          %1264 = vmatpush1.bf16.msra.mxu0 0
          %1265 = vmatprep.subr.bf16.mxu0 0
          %1266 = vmatpush1.bf16.msra.mxu0 0
          %1267 = vmatprep.subr.bf16.mxu0 0
          %1268 = vmatpush1.bf16.msra.mxu0 0
          %1269 = vmatprep.subr.bf16.mxu0 0
          %1270 = vmatpush1.bf16.msra.mxu0 %v1250
          %1271 = vmatprep.subr.bf16.mxu0 0
          %1272 = vmatpush2.bf16.msra.mxu0 0
          %1273 = vmatprep.subr.bf16.mxu0 0
          %1274 = vmatpush2.bf16.msra.mxu0 0
          %1275 = vmatprep.subr.bf16.mxu0 0
          %1276 = vmatpush2.bf16.msra.mxu0 0
          %1277 = vmatprep.subr.bf16.mxu0 0
          %1278 = vmatpush2.bf16.msra.mxu0 0
          %1279 = vmatprep.subr.bf16.mxu0 0
          %1280 = vmatpush2.bf16.msra.mxu0 0
          %1281 = vmatprep.subr.bf16.mxu0 0
          %1282 = vmatpush2.bf16.msra.mxu0 0
          %1283 = vmatprep.subr.bf16.mxu0 0
          %1284 = vmatpush2.bf16.msra.mxu0 0
          %1285 = vmatprep.subr.bf16.mxu0 0
          %1286 = vmatpush2.bf16.msra.mxu0 0
          %1287 = vmatprep.mubr.bf16.mxu0 0
          %1288 = vmatmul.mubr.bf16.gmra.mxu0 %v1253
          %v1289 = vpop.f32.mrf.mxu0
          %v1290 = vadd.f32 0.0, %v1289
          %v1291 = vpop.f32.mrf.mxu0
          %v1292 = vpop.f32.mrf.mxu0
          %v1293 = vadd.f32 0.0, %v1292
          %v1294 = vpop.f32.mrf.mxu0
          %1295 = vdwg.mxu0
          %v1296 = vpack.c.bf16 %v1293, %v1290
          %v1298 = vunpack.c.l.b16 %v1296
          %v1299 = vunpack.c.h.b16 %v1296
          %v1300 = vpack.c.b16 %v1298, %v1298
          %v1301 = vpack.c.b16 %v1299, %v1299
          %1302 = vrot.lane.b32.xlu0 %v1300, 32
          %v1303 = vpop.permute.xlu0 %1302
          %1304 = vrot.lane.b32.xlu0 %v1301, 32
          %v1305 = vpop.permute.xlu0 %1304
          %vm1308 = vcmask 519424
          %1309 = vst.msk [vmem:[%s1146] sm:$0xf] %vm1308, %v1303
          %1310 = vst.msk [vmem:[%s1146 + $0x4] sm:$0xf] %vm1308, %v1305
          %v1311 = vld [vmem:[%s994] sm:$0xf]
          %v1312 = vld [vmem:[%s994 + $0xc] sm:$0xf]
          %v1313 = vld [vmem:[%s994 + $0x4] sm:$0xf]
          %v1314 = vld [vmem:[%s994 + $0x10] sm:$0xf]
          %v1315 = vld [vmem:[%s994 + $0x8] sm:$0xf]
          %v1316 = vld [vmem:[%s994 + $0x14] sm:$0xf]
          %v1319 = vunpack.c.l.b16 %v1311
          %v1320 = vunpack.c.l.b16 %v1312
          %v1321 = vpack.c.b16 %v1320, %v1319
          %1322 = vrot.lane.b32.xlu0 %v1321, 64
          %v1323 = vpop.permute.xlu0 %1322
          %v1326 = vunpack.c.l.b16 %v1313
          %v1327 = vunpack.c.l.b16 %v1314
          %v1328 = vpack.c.b16 %v1327, %v1326
          %1329 = vrot.lane.b32.xlu0 %v1328, 64
          %v1330 = vpop.permute.xlu0 %1329
          %v1332 = vsel %vm1011, %v1323, 0
          %v1335 = vsel %vm1011, %v1330, 0
          %1337 = vmatprep.subr.bf16.mxu0 0
          %1338 = vmatpush1.bf16.xpose.msra.mxu0 0
          %1339 = vmatprep.subr.bf16.mxu0 0
          %1340 = vmatpush1.bf16.xpose.msra.mxu0 0
          %1341 = vmatprep.subr.bf16.mxu0 0
          %1342 = vmatpush1.bf16.xpose.msra.mxu0 0
          %1343 = vmatprep.subr.bf16.mxu0 0
          %1344 = vmatpush1.bf16.xpose.msra.mxu0 0
          %1345 = vmatprep.subr.bf16.mxu0 0
          %1346 = vmatpush1.bf16.xpose.msra.mxu0 0
          %1347 = vmatprep.subr.bf16.mxu0 0
          %1348 = vmatpush1.bf16.xpose.msra.mxu0 0
          %1349 = vmatprep.subr.bf16.mxu0 0
          %1350 = vmatpush1.bf16.xpose.msra.mxu0 0
          %1351 = vmatprep.subr.bf16.mxu0 0
          %1352 = vmatpush1.bf16.xpose.msra.mxu0 %v1335
          %1353 = vmatprep.subr.bf16.mxu0 0
          %1354 = vmatpush2.bf16.xpose.msra.mxu0 0
          %1355 = vmatprep.subr.bf16.mxu0 0
          %1356 = vmatpush2.bf16.xpose.msra.mxu0 0
          %1357 = vmatprep.subr.bf16.mxu0 0
          %1358 = vmatpush2.bf16.xpose.msra.mxu0 0
          %1359 = vmatprep.subr.bf16.mxu0 0
          %1360 = vmatpush2.bf16.xpose.msra.mxu0 0
          %1361 = vmatprep.subr.bf16.mxu0 0
          %1362 = vmatpush2.bf16.xpose.msra.mxu0 0
          %1363 = vmatprep.subr.bf16.mxu0 0
          %1364 = vmatpush2.bf16.xpose.msra.mxu0 0
          %1365 = vmatprep.subr.bf16.mxu0 0
          %1366 = vmatpush2.bf16.xpose.msra.mxu0 0
          %1367 = vmatprep.subr.bf16.mxu0 0
          %1368 = vmatpush2.bf16.xpose.msra.mxu0 0
          %1369 = vmatprep.mubr.bf16.mxu0 0
          %1370 = vmatmul.mubr.bf16.gmra.mxu0 %v1332
          %v1371 = vpop.f32.mrf.mxu0
          %v1372 = vadd.f32 0.0, %v1371
          %v1373 = vpop.f32.mrf.mxu0
          %v1374 = vpop.f32.mrf.mxu0
          %v1375 = vadd.f32 0.0, %v1374
          %v1376 = vpop.f32.mrf.mxu0
          %1377 = vdwg.mxu0
          %v1378 = vmul.f32 %v1372, 0.17677669
          %v1379 = vmul.f32 %v1375, 0.17677669
          %v1380 = vadd.f32 %v1378, %v988
          %v1381 = vadd.f32 %v1379, %v989
          %v1382 = vsel %vm1063, %v1380, -inf
          %1383 = vmax.xlane.f32.xlu0 %v1382
          %v1384 = vpop.xlane.xlu0 %1383
          %v1385 = vsel %vm1063, %v1381, -inf
          %1386 = vmax.xlane.f32.xlu0 %v1385
          %v1387 = vpop.xlane.xlu0 %1386
          %v1388 = vsub.f32 %v1380, %v1384
          %v1389 = vsub.f32 %v1381, %v1387
          %v1390 = vmul.f32 %v1388, 1.442695
          %v1391 = vpow.pop %v1390
          %v1392 = vmul.f32 %v1389, 1.442695
          %v1393 = vpow.pop %v1392
          %v1394 = vsel %vm1063, %v1391, 0.0
          %1395 = vadd.xlane.f32.xlu0 %v1394
          %v1396 = vpop.xlane.xlu0 %1395
          %v1397 = vsel %vm1063, %v1393, 0.0
          %1398 = vadd.xlane.f32.xlu0 %v1397
          %v1399 = vpop.xlane.xlu0 %1398
          %v1400 = vrcp.pop %v1396
          %v1401 = vrcp.pop %v1399
          %v1402 = vmul.f32 %v1391, %v1400
          %v1403 = vmul.f32 %v1393, %v1401
          %v1404 = vpack.c.bf16 %v1403, %v1402
          %v1407 = vunpack.c.l.b16 %v1315
          %v1408 = vunpack.c.l.b16 %v1316
          %v1409 = vpack.c.b16 %v1408, %v1407
          %1410 = vrot.lane.b32.xlu0 %v1409, 64
          %v1411 = vpop.permute.xlu0 %1410
          %v1414 = vsel %vm1063, %v1404, 0
          %1416 = vmatprep.subr.bf16.mxu0 0
          %1417 = vmatpush1.bf16.msra.mxu0 0
          %1418 = vmatprep.subr.bf16.mxu0 0
          %1419 = vmatpush1.bf16.msra.mxu0 0
          %1420 = vmatprep.subr.bf16.mxu0 0
          %1421 = vmatpush1.bf16.msra.mxu0 0
          %1422 = vmatprep.subr.bf16.mxu0 0
          %1423 = vmatpush1.bf16.msra.mxu0 0
          %1424 = vmatprep.subr.bf16.mxu0 0
          %1425 = vmatpush1.bf16.msra.mxu0 0
          %1426 = vmatprep.subr.bf16.mxu0 0
          %1427 = vmatpush1.bf16.msra.mxu0 0
          %1428 = vmatprep.subr.bf16.mxu0 0
          %1429 = vmatpush1.bf16.msra.mxu0 0
          %1430 = vmatprep.subr.bf16.mxu0 0
          %1431 = vmatpush1.bf16.msra.mxu0 %v1411
          %1432 = vmatprep.subr.bf16.mxu0 0
          %1433 = vmatpush2.bf16.msra.mxu0 0
          %1434 = vmatprep.subr.bf16.mxu0 0
          %1435 = vmatpush2.bf16.msra.mxu0 0
          %1436 = vmatprep.subr.bf16.mxu0 0
          %1437 = vmatpush2.bf16.msra.mxu0 0
          %1438 = vmatprep.subr.bf16.mxu0 0
          %1439 = vmatpush2.bf16.msra.mxu0 0
          %1440 = vmatprep.subr.bf16.mxu0 0
          %1441 = vmatpush2.bf16.msra.mxu0 0
          %1442 = vmatprep.subr.bf16.mxu0 0
          %1443 = vmatpush2.bf16.msra.mxu0 0
          %1444 = vmatprep.subr.bf16.mxu0 0
          %1445 = vmatpush2.bf16.msra.mxu0 0
          %1446 = vmatprep.subr.bf16.mxu0 0
          %1447 = vmatpush2.bf16.msra.mxu0 0
          %1448 = vmatprep.mubr.bf16.mxu0 0
          %1449 = vmatmul.mubr.bf16.gmra.mxu0 %v1414
          %v1450 = vpop.f32.mrf.mxu0
          %v1451 = vadd.f32 0.0, %v1450
          %v1452 = vpop.f32.mrf.mxu0
          %v1453 = vpop.f32.mrf.mxu0
          %v1454 = vadd.f32 0.0, %v1453
          %v1455 = vpop.f32.mrf.mxu0
          %1456 = vdwg.mxu0
          %v1457 = vpack.c.bf16 %v1454, %v1451
          %v1459 = vunpack.c.l.b16 %v1457
          %v1460 = vunpack.c.h.b16 %v1457
          %v1461 = vpack.c.b16 %v1459, %v1459
          %v1462 = vpack.c.b16 %v1460, %v1460
          %1463 = vrot.lane.b32.xlu0 %v1461, 64
          %v1464 = vpop.permute.xlu0 %1463
          %1465 = vrot.lane.b32.xlu0 %v1462, 64
          %v1466 = vpop.permute.xlu0 %1465
          %vm1469 = vcmask 781824
          %1470 = vst.msk [vmem:[%s1146] sm:$0xf] %vm1469, %v1464
          %1471 = vst.msk [vmem:[%s1146 + $0x4] sm:$0xf] %vm1469, %v1466
          %v1472 = vld [vmem:[%s994] sm:$0xf]
          %v1473 = vld [vmem:[%s994 + $0xc] sm:$0xf]
          %v1474 = vld [vmem:[%s994 + $0x4] sm:$0xf]
          %v1475 = vld [vmem:[%s994 + $0x10] sm:$0xf]
          %v1476 = vld [vmem:[%s994 + $0x8] sm:$0xf]
          %v1477 = vld [vmem:[%s994 + $0x14] sm:$0xf]
          %v1480 = vunpack.c.l.b16 %v1472
          %v1481 = vunpack.c.l.b16 %v1473
          %v1482 = vpack.c.b16 %v1481, %v1480
          %1483 = vrot.lane.b32.xlu0 %v1482, 32
          %v1484 = vpop.permute.xlu0 %1483
          %v1487 = vunpack.c.l.b16 %v1474
          %v1488 = vunpack.c.l.b16 %v1475
          %v1489 = vpack.c.b16 %v1488, %v1487
          %1490 = vrot.lane.b32.xlu0 %v1489, 32
          %v1491 = vpop.permute.xlu0 %1490
          %v1493 = vsel %vm1011, %v1484, 0
          %v1496 = vsel %vm1011, %v1491, 0
          %1498 = vmatprep.subr.bf16.mxu0 0
          %1499 = vmatpush1.bf16.xpose.msra.mxu0 0
          %1500 = vmatprep.subr.bf16.mxu0 0
          %1501 = vmatpush1.bf16.xpose.msra.mxu0 0
          %1502 = vmatprep.subr.bf16.mxu0 0
          %1503 = vmatpush1.bf16.xpose.msra.mxu0 0
          %1504 = vmatprep.subr.bf16.mxu0 0
          %1505 = vmatpush1.bf16.xpose.msra.mxu0 0
          %1506 = vmatprep.subr.bf16.mxu0 0
          %1507 = vmatpush1.bf16.xpose.msra.mxu0 0
          %1508 = vmatprep.subr.bf16.mxu0 0
          %1509 = vmatpush1.bf16.xpose.msra.mxu0 0
          %1510 = vmatprep.subr.bf16.mxu0 0
          %1511 = vmatpush1.bf16.xpose.msra.mxu0 0
          %1512 = vmatprep.subr.bf16.mxu0 0
          %1513 = vmatpush1.bf16.xpose.msra.mxu0 %v1496
          %1514 = vmatprep.subr.bf16.mxu0 0
          %1515 = vmatpush2.bf16.xpose.msra.mxu0 0
          %1516 = vmatprep.subr.bf16.mxu0 0
          %1517 = vmatpush2.bf16.xpose.msra.mxu0 0
          %1518 = vmatprep.subr.bf16.mxu0 0
          %1519 = vmatpush2.bf16.xpose.msra.mxu0 0
          %1520 = vmatprep.subr.bf16.mxu0 0
          %1521 = vmatpush2.bf16.xpose.msra.mxu0 0
          %1522 = vmatprep.subr.bf16.mxu0 0
          %1523 = vmatpush2.bf16.xpose.msra.mxu0 0
          %1524 = vmatprep.subr.bf16.mxu0 0
          %1525 = vmatpush2.bf16.xpose.msra.mxu0 0
          %1526 = vmatprep.subr.bf16.mxu0 0
          %1527 = vmatpush2.bf16.xpose.msra.mxu0 0
          %1528 = vmatprep.subr.bf16.mxu0 0
          %1529 = vmatpush2.bf16.xpose.msra.mxu0 0
          %1530 = vmatprep.mubr.bf16.mxu0 0
          %1531 = vmatmul.mubr.bf16.gmra.mxu0 %v1493
          %v1532 = vpop.f32.mrf.mxu0
          %v1533 = vadd.f32 0.0, %v1532
          %v1534 = vpop.f32.mrf.mxu0
          %v1535 = vpop.f32.mrf.mxu0
          %v1536 = vadd.f32 0.0, %v1535
          %v1537 = vpop.f32.mrf.mxu0
          %1538 = vdwg.mxu0
          %v1539 = vmul.f32 %v1533, 0.17677669
          %v1540 = vmul.f32 %v1536, 0.17677669
          %v1541 = vadd.f32 %v1539, %v988
          %v1542 = vadd.f32 %v1540, %v989
          %v1543 = vsel %vm1063, %v1541, -inf
          %1544 = vmax.xlane.f32.xlu0 %v1543
          %v1545 = vpop.xlane.xlu0 %1544
          %v1546 = vsel %vm1063, %v1542, -inf
          %1547 = vmax.xlane.f32.xlu0 %v1546
          %v1548 = vpop.xlane.xlu0 %1547
          %v1549 = vsub.f32 %v1541, %v1545
          %v1550 = vsub.f32 %v1542, %v1548
          %v1551 = vmul.f32 %v1549, 1.442695
          %v1552 = vpow.pop %v1551
          %v1553 = vmul.f32 %v1550, 1.442695
          %v1554 = vpow.pop %v1553
          %v1555 = vsel %vm1063, %v1552, 0.0
          %1556 = vadd.xlane.f32.xlu0 %v1555
          %v1557 = vpop.xlane.xlu0 %1556
          %v1558 = vsel %vm1063, %v1554, 0.0
          %1559 = vadd.xlane.f32.xlu0 %v1558
          %v1560 = vpop.xlane.xlu0 %1559
          %v1561 = vrcp.pop %v1557
          %v1562 = vrcp.pop %v1560
          %v1563 = vmul.f32 %v1552, %v1561
          %v1564 = vmul.f32 %v1554, %v1562
          %v1565 = vpack.c.bf16 %v1564, %v1563
          %v1568 = vunpack.c.l.b16 %v1476
          %v1569 = vunpack.c.l.b16 %v1477
          %v1570 = vpack.c.b16 %v1569, %v1568
          %1571 = vrot.lane.b32.xlu0 %v1570, 32
          %v1572 = vpop.permute.xlu0 %1571
          %v1575 = vsel %vm1063, %v1565, 0
          %1577 = vmatprep.subr.bf16.mxu0 0
          %1578 = vmatpush1.bf16.msra.mxu0 0
          %1579 = vmatprep.subr.bf16.mxu0 0
          %1580 = vmatpush1.bf16.msra.mxu0 0
          %1581 = vmatprep.subr.bf16.mxu0 0
          %1582 = vmatpush1.bf16.msra.mxu0 0
          %1583 = vmatprep.subr.bf16.mxu0 0
          %1584 = vmatpush1.bf16.msra.mxu0 0
          %1585 = vmatprep.subr.bf16.mxu0 0
          %1586 = vmatpush1.bf16.msra.mxu0 0
          %1587 = vmatprep.subr.bf16.mxu0 0
          %1588 = vmatpush1.bf16.msra.mxu0 0
          %1589 = vmatprep.subr.bf16.mxu0 0
          %1590 = vmatpush1.bf16.msra.mxu0 0
          %1591 = vmatprep.subr.bf16.mxu0 0
          %1592 = vmatpush1.bf16.msra.mxu0 %v1572
          %1593 = vmatprep.subr.bf16.mxu0 0
          %1594 = vmatpush2.bf16.msra.mxu0 0
          %1595 = vmatprep.subr.bf16.mxu0 0
          %1596 = vmatpush2.bf16.msra.mxu0 0
          %1597 = vmatprep.subr.bf16.mxu0 0
          %1598 = vmatpush2.bf16.msra.mxu0 0
          %1599 = vmatprep.subr.bf16.mxu0 0
          %1600 = vmatpush2.bf16.msra.mxu0 0
          %1601 = vmatprep.subr.bf16.mxu0 0
          %1602 = vmatpush2.bf16.msra.mxu0 0
          %1603 = vmatprep.subr.bf16.mxu0 0
          %1604 = vmatpush2.bf16.msra.mxu0 0
          %1605 = vmatprep.subr.bf16.mxu0 0
          %1606 = vmatpush2.bf16.msra.mxu0 0
          %1607 = vmatprep.subr.bf16.mxu0 0
          %1608 = vmatpush2.bf16.msra.mxu0 0
          %1609 = vmatprep.mubr.bf16.mxu0 0
          %1610 = vmatmul.mubr.bf16.gmra.mxu0 %v1575
          %v1611 = vpop.f32.mrf.mxu0
          %v1612 = vadd.f32 0.0, %v1611
          %v1613 = vpop.f32.mrf.mxu0
          %v1614 = vpop.f32.mrf.mxu0
          %v1615 = vadd.f32 0.0, %v1614
          %v1616 = vpop.f32.mrf.mxu0
          %1617 = vdwg.mxu0
          %v1618 = vpack.c.bf16 %v1615, %v1612
          %v1620 = vunpack.c.l.b16 %v1618
          %v1621 = vunpack.c.h.b16 %v1618
          %v1622 = vpack.c.b16 %v1620, %v1620
          %v1623 = vpack.c.b16 %v1621, %v1621
          %1624 = vrot.lane.b32.xlu0 %v1622, 96
          %v1625 = vpop.permute.xlu0 %1624
          %1626 = vrot.lane.b32.xlu0 %v1623, 96
          %v1627 = vpop.permute.xlu0 %1626
          %vm1630 = vcmask 1044224
          %1631 = vst.msk [vmem:[%s1146] sm:$0xf] %vm1630, %v1625
          %1632 = vst.msk [vmem:[%s1146 + $0x4] sm:$0xf] %vm1630, %v1627
        $region105: #{text_encoder_forward.4} parent=75 // loop_footer
          %s985 = sadd.s32 1, %s981
        $region106: #{text_encoder_forward.4} parent=75 // loop_footer_branch
          %980 = sbr.rel target = $region102
        $region107: #{text_encoder_forward.4} parent=75 // loop_exit
          _
        %v1633 = vld [vmem:[#allocation3] sm:$0xf]
        %v1634 = vld [vmem:[#allocation3 + $0x4] sm:$0xf]
        %v1635 = vld [vmem:[#allocation3 + $0x8] sm:$0xf]
        %v1636 = vld [vmem:[#allocation3 + $0xc] sm:$0xf]
        %v1637 = vld [vmem:[%s6] sm:$0xf]
        %v1638 = vld [vmem:[%s6 + $0x4] sm:$0xf]
        %v1639 = vld [vmem:[%s6 + $0x8] sm:$0xf]
        %v1640 = vld [vmem:[%s6 + $0xc] sm:$0xf]
        %v1641 = vld [vmem:[%s6 + $0x10] sm:$0xf]
        %v1642 = vld [vmem:[%s6 + $0x14] sm:$0xf]
        %v1643 = vld [vmem:[%s6 + $0x18] sm:$0xf]
        %v1644 = vld [vmem:[%s6 + $0x1c] sm:$0xf]
        %v1645 = vld [vmem:[%s6 + $0x20] sm:$0xf]
        %v1646 = vld [vmem:[%s6 + $0x24] sm:$0xf]
        %v1647 = vld [vmem:[%s6 + $0x28] sm:$0xf]
        %v1648 = vld [vmem:[%s6 + $0x2c] sm:$0xf]
        %v1649 = vld [vmem:[%s6 + $0x30] sm:$0xf]
        %v1650 = vld [vmem:[%s6 + $0x34] sm:$0xf]
        %v1651 = vld [vmem:[%s6 + $0x38] sm:$0xf]
        %v1652 = vld [vmem:[%s6 + $0x3c] sm:$0xf]
        %v1657 = vunpack.c.l.b16 %v1633
        %v1658 = vunpack.c.l.b16 %v1634
        %v1659 = vunpack.c.l.b16 %v1635
        %v1660 = vunpack.c.l.b16 %v1636
        %v1661 = vpack.c.b16 %v1658, %v1657
        %v1662 = vpack.c.b16 %v1660, %v1659
        %v1681 = vunpack.c.l.b16 %v1637
        %v1682 = vunpack.c.l.b16 %v1638
        %v1683 = vunpack.c.l.b16 %v1639
        %v1684 = vunpack.c.l.b16 %v1640
        %v1685 = vunpack.c.l.b16 %v1641
        %v1686 = vunpack.c.l.b16 %v1642
        %v1687 = vunpack.c.l.b16 %v1643
        %v1688 = vunpack.c.l.b16 %v1644
        %v1689 = vunpack.c.l.b16 %v1645
        %v1690 = vunpack.c.l.b16 %v1646
        %v1691 = vunpack.c.l.b16 %v1647
        %v1692 = vunpack.c.l.b16 %v1648
        %v1693 = vunpack.c.l.b16 %v1649
        %v1694 = vunpack.c.l.b16 %v1650
        %v1695 = vunpack.c.l.b16 %v1651
        %v1696 = vunpack.c.l.b16 %v1652
        %v1697 = vpack.c.b16 %v1682, %v1681
        %v1698 = vpack.c.b16 %v1684, %v1683
        %v1699 = vpack.c.b16 %v1686, %v1685
        %v1700 = vpack.c.b16 %v1688, %v1687
        %v1701 = vpack.c.b16 %v1690, %v1689
        %v1702 = vpack.c.b16 %v1692, %v1691
        %v1703 = vpack.c.b16 %v1694, %v1693
        %v1704 = vpack.c.b16 %v1696, %v1695
        %1713 = vmatprep.subr.bf16.mxu0 0
        %1714 = vmatpush1.bf16.msra.mxu0 %v1704
        %1715 = vmatprep.subr.bf16.mxu0 0
        %1716 = vmatpush1.bf16.msra.mxu0 %v1703
        %1717 = vmatprep.subr.bf16.mxu0 0
        %1718 = vmatpush1.bf16.msra.mxu0 %v1702
        %1719 = vmatprep.subr.bf16.mxu0 0
        %1720 = vmatpush1.bf16.msra.mxu0 %v1701
        %1721 = vmatprep.subr.bf16.mxu0 0
        %1722 = vmatpush1.bf16.msra.mxu0 %v1700
        %1723 = vmatprep.subr.bf16.mxu0 0
        %1724 = vmatpush1.bf16.msra.mxu0 %v1699
        %1725 = vmatprep.subr.bf16.mxu0 0
        %1726 = vmatpush1.bf16.msra.mxu0 %v1698
        %1727 = vmatprep.subr.bf16.mxu0 0
        %1728 = vmatpush1.bf16.msra.mxu0 %v1697
        %1729 = vmatprep.subr.bf16.mxu0 0
        %1730 = vmatpush2.bf16.msra.mxu0 0
        %1731 = vmatprep.subr.bf16.mxu0 0
        %1732 = vmatpush2.bf16.msra.mxu0 0
        %1733 = vmatprep.subr.bf16.mxu0 0
        %1734 = vmatpush2.bf16.msra.mxu0 0
        %1735 = vmatprep.subr.bf16.mxu0 0
        %1736 = vmatpush2.bf16.msra.mxu0 0
        %1737 = vmatprep.subr.bf16.mxu0 0
        %1738 = vmatpush2.bf16.msra.mxu0 0
        %1739 = vmatprep.subr.bf16.mxu0 0
        %1740 = vmatpush2.bf16.msra.mxu0 0
        %1741 = vmatprep.subr.bf16.mxu0 0
        %1742 = vmatpush2.bf16.msra.mxu0 0
        %1743 = vmatprep.subr.bf16.mxu0 0
        %1744 = vmatpush2.bf16.msra.mxu0 0
        %1745 = vmatprep.mubr.bf16.mxu0 0
        %1746 = vmatmul.mubr.bf16.gmra.mxu0 %v1661
        %v1747 = vpop.f32.mrf.mxu0
        %v1748 = vadd.f32 0.0, %v1747
        %v1749 = vpop.f32.mrf.mxu0
        %v1750 = vpop.f32.mrf.mxu0
        %v1751 = vadd.f32 0.0, %v1750
        %v1752 = vpop.f32.mrf.mxu0
        %1753 = vmatprep.mubr.bf16.mxu0 0
        %1754 = vmatmul.mubr.bf16.gmra.mxu0 %v1662
        %v1755 = vpop.f32.mrf.mxu0
        %v1756 = vadd.f32 0.0, %v1755
        %v1757 = vpop.f32.mrf.mxu0
        %v1758 = vpop.f32.mrf.mxu0
        %v1759 = vadd.f32 0.0, %v1758
        %v1760 = vpop.f32.mrf.mxu0
        %1761 = vdwg.mxu0
        %v1762 = vld [vmem:[%s563] sm:$0xff]
        %v1763 = vld [vmem:[%s563 + $0x8] sm:$0xff]
        %v1764 = vld [vmem:[%s563 + $0x10] sm:$0xff]
        %v1765 = vld [vmem:[%s563 + $0x18] sm:$0xff]
        %v1766 = vadd.f32 %v1762, %v1748
        %v1767 = vadd.f32 %v1763, %v1751
        %v1768 = vadd.f32 %v1764, %v1756
        %v1769 = vadd.f32 %v1765, %v1759
        %v1770 = vld [vmem:[%s7] sm:$0x1]
        %v1772 = vlaneseq
        %v1773 = vshrl.u32 %v1772, 7
        %v1774 = vsub.s32 0, %v1773
        %v1775 = vrot.slane %v1770, %v1774
        %v1777 = vadd.f32 %v1766, %v1775
        %v1778 = vadd.f32 %v1767, %v1775
        %v1779 = vadd.f32 %v1768, %v1775
        %v1780 = vadd.f32 %v1769, %v1775
        %1781 = vst [vmem:[#allocation4] sm:$0xff] %v1777
        %1782 = vst [vmem:[#allocation4 + $0x8] sm:$0xff] %v1778
        %1783 = vst [vmem:[#allocation4 + $0x10] sm:$0xff] %v1779
        %1784 = vst [vmem:[#allocation4 + $0x18] sm:$0xff] %v1780
        %1785 = vadd.xlane.f32.xlu0 %v1777
        %v1786 = vpop.xlane.xlu0 %1785
        %1787 = vadd.xlane.f32.xlu0 %v1778
        %v1788 = vpop.xlane.xlu0 %1787
        %1789 = vadd.xlane.f32.xlu0 %v1779
        %v1790 = vpop.xlane.xlu0 %1789
        %1791 = vadd.xlane.f32.xlu0 %v1780
        %v1792 = vpop.xlane.xlu0 %1791
        %v1793 = vmul.f32 %v1786, %v592
        %v1794 = vmul.f32 %v1788, %v592
        %v1795 = vmul.f32 %v1790, %v592
        %v1796 = vmul.f32 %v1792, %v592
        %v1797 = vsub.f32 %v1777, %v1793
        %v1798 = vsub.f32 %v1778, %v1794
        %v1799 = vsub.f32 %v1779, %v1795
        %v1800 = vsub.f32 %v1780, %v1796
        %v1801 = vmul.f32 %v1797, %v1797
        %v1802 = vmul.f32 %v1798, %v1798
        %v1803 = vmul.f32 %v1799, %v1799
        %v1804 = vmul.f32 %v1800, %v1800
        %1805 = vadd.xlane.f32.xlu0 %v1801
        %v1806 = vpop.xlane.xlu0 %1805
        %1807 = vadd.xlane.f32.xlu0 %v1802
        %v1808 = vpop.xlane.xlu0 %1807
        %1809 = vadd.xlane.f32.xlu0 %v1803
        %v1810 = vpop.xlane.xlu0 %1809
        %1811 = vadd.xlane.f32.xlu0 %v1804
        %v1812 = vpop.xlane.xlu0 %1811
        %v1813 = vmul.f32 %v1806, %v592
        %v1814 = vmul.f32 %v1808, %v592
        %v1815 = vmul.f32 %v1810, %v592
        %v1816 = vmul.f32 %v1812, %v592
        %v1817 = vadd.f32 %v1813, 1e-05
        %v1818 = vadd.f32 %v1814, 1e-05
        %v1819 = vadd.f32 %v1815, 1e-05
        %v1820 = vadd.f32 %v1816, 1e-05
        %v1821 = vrsqrt.pop %v1817
        %v1822 = vrsqrt.pop %v1818
        %v1823 = vrsqrt.pop %v1819
        %v1824 = vrsqrt.pop %v1820
        %v1825 = vmul.f32 %v1797, %v1821
        %v1826 = vmul.f32 %v1798, %v1822
        %v1827 = vmul.f32 %v1799, %v1823
        %v1828 = vmul.f32 %v1800, %v1824
        %v1829 = vld [vmem:[#allocation10] sm:$0x1]
        %v1831 = vlaneseq
        %v1832 = vshrl.u32 %v1831, 7
        %v1833 = vsub.s32 0, %v1832
        %v1834 = vrot.slane %v1829, %v1833
        %v1836 = vmul.f32 %v1825, %v1834
        %v1837 = vmul.f32 %v1826, %v1834
        %v1838 = vmul.f32 %v1827, %v1834
        %v1839 = vmul.f32 %v1828, %v1834
        %v1840 = vld [vmem:[#allocation12] sm:$0x1]
        %v1842 = vlaneseq
        %v1843 = vshrl.u32 %v1842, 7
        %v1844 = vsub.s32 0, %v1843
        %v1845 = vrot.slane %v1840, %v1844
        %v1847 = vadd.f32 %v1836, %v1845
        %v1848 = vadd.f32 %v1837, %v1845
        %v1849 = vadd.f32 %v1838, %v1845
        %v1850 = vadd.f32 %v1839, %v1845
        %v1851 = vpack.c.bf16 %v1848, %v1847
        %v1852 = vpack.c.bf16 %v1850, %v1849
        %v1853 = vld [vmem:[%s10] sm:$0xff]
        %v1854 = vld [vmem:[%s10 + $0x8] sm:$0xff]
        %v1855 = vld [vmem:[%s10 + $0x10] sm:$0xff]
        %v1856 = vld [vmem:[%s10 + $0x18] sm:$0xff]
        %v1857 = vld [vmem:[%s10 + $0x20] sm:$0xff]
        %v1858 = vld [vmem:[%s10 + $0x28] sm:$0xff]
        %v1859 = vld [vmem:[%s10 + $0x30] sm:$0xff]
        %v1860 = vld [vmem:[%s10 + $0x38] sm:$0xff]
        %v1861 = vld [vmem:[%s10 + $0x40] sm:$0xff]
        %v1862 = vld [vmem:[%s10 + $0x48] sm:$0xff]
        %v1863 = vld [vmem:[%s10 + $0x50] sm:$0xff]
        %v1864 = vld [vmem:[%s10 + $0x58] sm:$0xff]
        %v1865 = vld [vmem:[%s10 + $0x60] sm:$0xff]
        %v1866 = vld [vmem:[%s10 + $0x68] sm:$0xff]
        %v1867 = vld [vmem:[%s10 + $0x70] sm:$0xff]
        %v1868 = vld [vmem:[%s10 + $0x78] sm:$0xff]
        %v1869 = vld [vmem:[%s10 + $0x80] sm:$0xff]
        %v1870 = vld [vmem:[%s10 + $0x88] sm:$0xff]
        %v1871 = vld [vmem:[%s10 + $0x90] sm:$0xff]
        %v1872 = vld [vmem:[%s10 + $0x98] sm:$0xff]
        %v1873 = vld [vmem:[%s10 + $0xa0] sm:$0xff]
        %v1874 = vld [vmem:[%s10 + $0xa8] sm:$0xff]
        %v1875 = vld [vmem:[%s10 + $0xb0] sm:$0xff]
        %v1876 = vld [vmem:[%s10 + $0xb8] sm:$0xff]
        %v1877 = vld [vmem:[%s10 + $0xc0] sm:$0xff]
        %v1878 = vld [vmem:[%s10 + $0xc8] sm:$0xff]
        %v1879 = vld [vmem:[%s10 + $0xd0] sm:$0xff]
        %v1880 = vld [vmem:[%s10 + $0xd8] sm:$0xff]
        %v1881 = vld [vmem:[%s10 + $0xe0] sm:$0xff]
        %v1882 = vld [vmem:[%s10 + $0xe8] sm:$0xff]
        %v1883 = vld [vmem:[%s10 + $0xf0] sm:$0xff]
        %v1884 = vld [vmem:[%s10 + $0xf8] sm:$0xff]
        %v1885 = vld [vmem:[%s11] sm:$0xf]
        %v1887 = vlaneseq
        %v1888 = vshrl.u32 %v1887, 7
        %v1889 = vsub.s32 0, %v1888
        %v1890 = vrot.slane %v1885, %v1889
        %v1891 = vlaneseq
        %v1892 = vshrl.u32 %v1891, 7
        %v1893 = vsub.s32 1, %v1892
        %v1894 = vrot.slane %v1885, %v1893
        %v1895 = vlaneseq
        %v1896 = vshrl.u32 %v1895, 7
        %v1897 = vsub.s32 2, %v1896
        %v1898 = vrot.slane %v1885, %v1897
        %v1899 = vlaneseq
        %v1900 = vshrl.u32 %v1899, 7
        %v1901 = vsub.s32 3, %v1900
        %v1902 = vrot.slane %v1885, %v1901
        %v1939 = vunpack.c.l.b16 %v1853
        %v1940 = vunpack.c.h.b16 %v1853
        %v1941 = vunpack.c.l.b16 %v1854
        %v1942 = vunpack.c.h.b16 %v1854
        %v1943 = vunpack.c.l.b16 %v1855
        %v1944 = vunpack.c.h.b16 %v1855
        %v1945 = vunpack.c.l.b16 %v1856
        %v1946 = vunpack.c.h.b16 %v1856
        %v1947 = vunpack.c.l.b16 %v1857
        %v1948 = vunpack.c.h.b16 %v1857
        %v1949 = vunpack.c.l.b16 %v1858
        %v1950 = vunpack.c.h.b16 %v1858
        %v1951 = vunpack.c.l.b16 %v1859
        %v1952 = vunpack.c.h.b16 %v1859
        %v1953 = vunpack.c.l.b16 %v1860
        %v1954 = vunpack.c.h.b16 %v1860
        %v1955 = vunpack.c.l.b16 %v1861
        %v1956 = vunpack.c.h.b16 %v1861
        %v1957 = vunpack.c.l.b16 %v1862
        %v1958 = vunpack.c.h.b16 %v1862
        %v1959 = vunpack.c.l.b16 %v1863
        %v1960 = vunpack.c.h.b16 %v1863
        %v1961 = vunpack.c.l.b16 %v1864
        %v1962 = vunpack.c.h.b16 %v1864
        %v1963 = vunpack.c.l.b16 %v1865
        %v1964 = vunpack.c.h.b16 %v1865
        %v1965 = vunpack.c.l.b16 %v1866
        %v1966 = vunpack.c.h.b16 %v1866
        %v1967 = vunpack.c.l.b16 %v1867
        %v1968 = vunpack.c.h.b16 %v1867
        %v1969 = vunpack.c.l.b16 %v1868
        %v1970 = vunpack.c.h.b16 %v1868
        %v1971 = vunpack.c.l.b16 %v1869
        %v1972 = vunpack.c.h.b16 %v1869
        %v1973 = vunpack.c.l.b16 %v1870
        %v1974 = vunpack.c.h.b16 %v1870
        %v1975 = vunpack.c.l.b16 %v1871
        %v1976 = vunpack.c.h.b16 %v1871
        %v1977 = vunpack.c.l.b16 %v1872
        %v1978 = vunpack.c.h.b16 %v1872
        %v1979 = vunpack.c.l.b16 %v1873
        %v1980 = vunpack.c.h.b16 %v1873
        %v1981 = vunpack.c.l.b16 %v1874
        %v1982 = vunpack.c.h.b16 %v1874
        %v1983 = vunpack.c.l.b16 %v1875
        %v1984 = vunpack.c.h.b16 %v1875
        %v1985 = vunpack.c.l.b16 %v1876
        %v1986 = vunpack.c.h.b16 %v1876
        %v1987 = vunpack.c.l.b16 %v1877
        %v1988 = vunpack.c.h.b16 %v1877
        %v1989 = vunpack.c.l.b16 %v1878
        %v1990 = vunpack.c.h.b16 %v1878
        %v1991 = vunpack.c.l.b16 %v1879
        %v1992 = vunpack.c.h.b16 %v1879
        %v1993 = vunpack.c.l.b16 %v1880
        %v1994 = vunpack.c.h.b16 %v1880
        %v1995 = vunpack.c.l.b16 %v1881
        %v1996 = vunpack.c.h.b16 %v1881
        %v1997 = vunpack.c.l.b16 %v1882
        %v1998 = vunpack.c.h.b16 %v1882
        %v1999 = vunpack.c.l.b16 %v1883
        %v2000 = vunpack.c.h.b16 %v1883
        %v2001 = vunpack.c.l.b16 %v1884
        %v2002 = vunpack.c.h.b16 %v1884
        %v2003 = vpack.c.b16 %v1943, %v1939
        %v2004 = vpack.c.b16 %v1944, %v1940
        %v2005 = vpack.c.b16 %v1945, %v1941
        %v2006 = vpack.c.b16 %v1946, %v1942
        %v2007 = vpack.c.b16 %v1951, %v1947
        %v2008 = vpack.c.b16 %v1952, %v1948
        %v2009 = vpack.c.b16 %v1953, %v1949
        %v2010 = vpack.c.b16 %v1954, %v1950
        %v2011 = vpack.c.b16 %v1959, %v1955
        %v2012 = vpack.c.b16 %v1960, %v1956
        %v2013 = vpack.c.b16 %v1961, %v1957
        %v2014 = vpack.c.b16 %v1962, %v1958
        %v2015 = vpack.c.b16 %v1967, %v1963
        %v2016 = vpack.c.b16 %v1968, %v1964
        %v2017 = vpack.c.b16 %v1969, %v1965
        %v2018 = vpack.c.b16 %v1970, %v1966
        %v2019 = vpack.c.b16 %v1975, %v1971
        %v2020 = vpack.c.b16 %v1976, %v1972
        %v2021 = vpack.c.b16 %v1977, %v1973
        %v2022 = vpack.c.b16 %v1978, %v1974
        %v2023 = vpack.c.b16 %v1983, %v1979
        %v2024 = vpack.c.b16 %v1984, %v1980
        %v2025 = vpack.c.b16 %v1985, %v1981
        %v2026 = vpack.c.b16 %v1986, %v1982
        %v2027 = vpack.c.b16 %v1991, %v1987
        %v2028 = vpack.c.b16 %v1992, %v1988
        %v2029 = vpack.c.b16 %v1993, %v1989
        %v2030 = vpack.c.b16 %v1994, %v1990
        %v2031 = vpack.c.b16 %v1999, %v1995
        %v2032 = vpack.c.b16 %v2000, %v1996
        %v2033 = vpack.c.b16 %v2001, %v1997
        %v2034 = vpack.c.b16 %v2002, %v1998
        %2067 = vmatprep.subr.bf16.mxu0 %v2032
        %2068 = vmatpush1.bf16.msra.mxu0 %v2031
        %2069 = vmatprep.subr.bf16.mxu0 %v2028
        %2070 = vmatpush1.bf16.msra.mxu0 %v2027
        %2071 = vmatprep.subr.bf16.mxu0 %v2024
        %2072 = vmatpush1.bf16.msra.mxu0 %v2023
        %2073 = vmatprep.subr.bf16.mxu0 %v2020
        %2074 = vmatpush1.bf16.msra.mxu0 %v2019
        %2075 = vmatprep.subr.bf16.mxu0 %v2016
        %2076 = vmatpush1.bf16.msra.mxu0 %v2015
        %2077 = vmatprep.subr.bf16.mxu0 %v2012
        %2078 = vmatpush1.bf16.msra.mxu0 %v2011
        %2079 = vmatprep.subr.bf16.mxu0 %v2008
        %2080 = vmatpush1.bf16.msra.mxu0 %v2007
        %2081 = vmatprep.subr.bf16.mxu0 %v2004
        %2082 = vmatpush1.bf16.msra.mxu0 %v2003
        %2083 = vmatprep.subr.bf16.mxu0 0
        %2084 = vmatpush2.bf16.msra.mxu0 0
        %2085 = vmatprep.subr.bf16.mxu0 0
        %2086 = vmatpush2.bf16.msra.mxu0 0
        %2087 = vmatprep.subr.bf16.mxu0 0
        %2088 = vmatpush2.bf16.msra.mxu0 0
        %2089 = vmatprep.subr.bf16.mxu0 0
        %2090 = vmatpush2.bf16.msra.mxu0 0
        %2091 = vmatprep.subr.bf16.mxu0 0
        %2092 = vmatpush2.bf16.msra.mxu0 0
        %2093 = vmatprep.subr.bf16.mxu0 0
        %2094 = vmatpush2.bf16.msra.mxu0 0
        %2095 = vmatprep.subr.bf16.mxu0 0
        %2096 = vmatpush2.bf16.msra.mxu0 0
        %2097 = vmatprep.subr.bf16.mxu0 0
        %2098 = vmatpush2.bf16.msra.mxu0 0
        %2099 = vmatprep.mubr.bf16.mxu0 0
        %2100 = vmatmul.mubr.bf16.gmra.mxu0 %v1851
        %v2101 = vpop.f32.mrf.mxu0
        %v2102 = vadd.f32 %v1890, %v2101
        %v2103 = vpop.f32.mrf.mxu0
        %v2104 = vadd.f32 %v1894, %v2103
        %v2105 = vpop.f32.mrf.mxu0
        %v2106 = vadd.f32 %v1890, %v2105
        %v2107 = vpop.f32.mrf.mxu0
        %v2108 = vadd.f32 %v1894, %v2107
        %2109 = vmatprep.mubr.bf16.mxu0 0
        %2110 = vmatmul.mubr.bf16.gmra.mxu0 %v1852
        %v2111 = vpop.f32.mrf.mxu0
        %v2112 = vadd.f32 %v1890, %v2111
        %v2113 = vpop.f32.mrf.mxu0
        %v2114 = vadd.f32 %v1894, %v2113
        %v2115 = vpop.f32.mrf.mxu0
        %v2116 = vadd.f32 %v1890, %v2115
        %v2117 = vpop.f32.mrf.mxu0
        %v2118 = vadd.f32 %v1894, %v2117
        %2119 = vdwg.mxu0
        %2120 = vmatprep.subr.bf16.mxu0 %v2034
        %2121 = vmatpush1.bf16.msra.mxu0 %v2033
        %2122 = vmatprep.subr.bf16.mxu0 %v2030
        %2123 = vmatpush1.bf16.msra.mxu0 %v2029
        %2124 = vmatprep.subr.bf16.mxu0 %v2026
        %2125 = vmatpush1.bf16.msra.mxu0 %v2025
        %2126 = vmatprep.subr.bf16.mxu0 %v2022
        %2127 = vmatpush1.bf16.msra.mxu0 %v2021
        %2128 = vmatprep.subr.bf16.mxu0 %v2018
        %2129 = vmatpush1.bf16.msra.mxu0 %v2017
        %2130 = vmatprep.subr.bf16.mxu0 %v2014
        %2131 = vmatpush1.bf16.msra.mxu0 %v2013
        %2132 = vmatprep.subr.bf16.mxu0 %v2010
        %2133 = vmatpush1.bf16.msra.mxu0 %v2009
        %2134 = vmatprep.subr.bf16.mxu0 %v2006
        %2135 = vmatpush1.bf16.msra.mxu0 %v2005
        %2136 = vmatprep.subr.bf16.mxu0 0
        %2137 = vmatpush2.bf16.msra.mxu0 0
        %2138 = vmatprep.subr.bf16.mxu0 0
        %2139 = vmatpush2.bf16.msra.mxu0 0
        %2140 = vmatprep.subr.bf16.mxu0 0
        %2141 = vmatpush2.bf16.msra.mxu0 0
        %2142 = vmatprep.subr.bf16.mxu0 0
        %2143 = vmatpush2.bf16.msra.mxu0 0
        %2144 = vmatprep.subr.bf16.mxu0 0
        %2145 = vmatpush2.bf16.msra.mxu0 0
        %2146 = vmatprep.subr.bf16.mxu0 0
        %2147 = vmatpush2.bf16.msra.mxu0 0
        %2148 = vmatprep.subr.bf16.mxu0 0
        %2149 = vmatpush2.bf16.msra.mxu0 0
        %2150 = vmatprep.subr.bf16.mxu0 0
        %2151 = vmatpush2.bf16.msra.mxu0 0
        %2152 = vmatprep.mubr.bf16.mxu0 0
        %2153 = vmatmul.mubr.bf16.gmra.mxu0 %v1851
        %v2154 = vpop.f32.mrf.mxu0
        %v2155 = vadd.f32 %v1898, %v2154
        %v2156 = vpop.f32.mrf.mxu0
        %v2157 = vadd.f32 %v1902, %v2156
        %v2158 = vpop.f32.mrf.mxu0
        %v2159 = vadd.f32 %v1898, %v2158
        %v2160 = vpop.f32.mrf.mxu0
        %v2161 = vadd.f32 %v1902, %v2160
        %2162 = vmatprep.mubr.bf16.mxu0 0
        %2163 = vmatmul.mubr.bf16.gmra.mxu0 %v1852
        %v2164 = vpop.f32.mrf.mxu0
        %v2165 = vadd.f32 %v1898, %v2164
        %v2166 = vpop.f32.mrf.mxu0
        %v2167 = vadd.f32 %v1902, %v2166
        %v2168 = vpop.f32.mrf.mxu0
        %v2169 = vadd.f32 %v1898, %v2168
        %v2170 = vpop.f32.mrf.mxu0
        %v2171 = vadd.f32 %v1902, %v2170
        %2172 = vdwg.mxu0
        %v2173 = vmul.f32 %v2102, 1.702
        %v2174 = vmul.f32 %v2104, 1.702
        %v2175 = vmul.f32 %v2155, 1.702
        %v2176 = vmul.f32 %v2157, 1.702
        %v2177 = vmul.f32 %v2106, 1.702
        %v2178 = vmul.f32 %v2108, 1.702
        %v2179 = vmul.f32 %v2159, 1.702
        %v2180 = vmul.f32 %v2161, 1.702
        %v2181 = vmul.f32 %v2112, 1.702
        %v2182 = vmul.f32 %v2114, 1.702
        %v2183 = vmul.f32 %v2165, 1.702
        %v2184 = vmul.f32 %v2167, 1.702
        %v2185 = vmul.f32 %v2116, 1.702
        %v2186 = vmul.f32 %v2118, 1.702
        %v2187 = vmul.f32 %v2169, 1.702
        %v2188 = vmul.f32 %v2171, 1.702
        %v2189 = vxor.u32 %v2173, 2147483648
        %v2190 = vxor.u32 %v2174, 2147483648
        %v2191 = vxor.u32 %v2175, 2147483648
        %v2192 = vxor.u32 %v2176, 2147483648
        %v2193 = vxor.u32 %v2177, 2147483648
        %v2194 = vxor.u32 %v2178, 2147483648
        %v2195 = vxor.u32 %v2179, 2147483648
        %v2196 = vxor.u32 %v2180, 2147483648
        %v2197 = vxor.u32 %v2181, 2147483648
        %v2198 = vxor.u32 %v2182, 2147483648
        %v2199 = vxor.u32 %v2183, 2147483648
        %v2200 = vxor.u32 %v2184, 2147483648
        %v2201 = vxor.u32 %v2185, 2147483648
        %v2202 = vxor.u32 %v2186, 2147483648
        %v2203 = vxor.u32 %v2187, 2147483648
        %v2204 = vxor.u32 %v2188, 2147483648
        %v2205 = vmul.f32 %v2189, 1.442695
        %v2206 = vpow.pop %v2205
        %v2207 = vmul.f32 %v2190, 1.442695
        %v2208 = vpow.pop %v2207
        %v2209 = vmul.f32 %v2191, 1.442695
        %v2210 = vpow.pop %v2209
        %v2211 = vmul.f32 %v2192, 1.442695
        %v2212 = vpow.pop %v2211
        %v2213 = vmul.f32 %v2193, 1.442695
        %v2214 = vpow.pop %v2213
        %v2215 = vmul.f32 %v2194, 1.442695
        %v2216 = vpow.pop %v2215
        %v2217 = vmul.f32 %v2195, 1.442695
        %v2218 = vpow.pop %v2217
        %v2219 = vmul.f32 %v2196, 1.442695
        %v2220 = vpow.pop %v2219
        %v2221 = vmul.f32 %v2197, 1.442695
        %v2222 = vpow.pop %v2221
        %v2223 = vmul.f32 %v2198, 1.442695
        %v2224 = vpow.pop %v2223
        %v2225 = vmul.f32 %v2199, 1.442695
        %v2226 = vpow.pop %v2225
        %v2227 = vmul.f32 %v2200, 1.442695
        %v2228 = vpow.pop %v2227
        %v2229 = vmul.f32 %v2201, 1.442695
        %v2230 = vpow.pop %v2229
        %v2231 = vmul.f32 %v2202, 1.442695
        %v2232 = vpow.pop %v2231
        %v2233 = vmul.f32 %v2203, 1.442695
        %v2234 = vpow.pop %v2233
        %v2235 = vmul.f32 %v2204, 1.442695
        %v2236 = vpow.pop %v2235
        %v2237 = vadd.f32 %v2206, 1.0
        %v2238 = vadd.f32 %v2208, 1.0
        %v2239 = vadd.f32 %v2210, 1.0
        %v2240 = vadd.f32 %v2212, 1.0
        %v2241 = vadd.f32 %v2214, 1.0
        %v2242 = vadd.f32 %v2216, 1.0
        %v2243 = vadd.f32 %v2218, 1.0
        %v2244 = vadd.f32 %v2220, 1.0
        %v2245 = vadd.f32 %v2222, 1.0
        %v2246 = vadd.f32 %v2224, 1.0
        %v2247 = vadd.f32 %v2226, 1.0
        %v2248 = vadd.f32 %v2228, 1.0
        %v2249 = vadd.f32 %v2230, 1.0
        %v2250 = vadd.f32 %v2232, 1.0
        %v2251 = vadd.f32 %v2234, 1.0
        %v2252 = vadd.f32 %v2236, 1.0
        %v2253 = vrcp.pop %v2237
        %v2254 = vmul.f32 1.0, %v2253
        %v2255 = vrcp.pop %v2238
        %v2256 = vmul.f32 1.0, %v2255
        %v2257 = vrcp.pop %v2239
        %v2258 = vmul.f32 1.0, %v2257
        %v2259 = vrcp.pop %v2240
        %v2260 = vmul.f32 1.0, %v2259
        %v2261 = vrcp.pop %v2241
        %v2262 = vmul.f32 1.0, %v2261
        %v2263 = vrcp.pop %v2242
        %v2264 = vmul.f32 1.0, %v2263
        %v2265 = vrcp.pop %v2243
        %v2266 = vmul.f32 1.0, %v2265
        %v2267 = vrcp.pop %v2244
        %v2268 = vmul.f32 1.0, %v2267
        %v2269 = vrcp.pop %v2245
        %v2270 = vmul.f32 1.0, %v2269
        %v2271 = vrcp.pop %v2246
        %v2272 = vmul.f32 1.0, %v2271
        %v2273 = vrcp.pop %v2247
        %v2274 = vmul.f32 1.0, %v2273
        %v2275 = vrcp.pop %v2248
        %v2276 = vmul.f32 1.0, %v2275
        %v2277 = vrcp.pop %v2249
        %v2278 = vmul.f32 1.0, %v2277
        %v2279 = vrcp.pop %v2250
        %v2280 = vmul.f32 1.0, %v2279
        %v2281 = vrcp.pop %v2251
        %v2282 = vmul.f32 1.0, %v2281
        %v2283 = vrcp.pop %v2252
        %v2284 = vmul.f32 1.0, %v2283
        %v2285 = vmul.f32 %v2102, %v2254
        %v2286 = vmul.f32 %v2104, %v2256
        %v2287 = vmul.f32 %v2155, %v2258
        %v2288 = vmul.f32 %v2157, %v2260
        %v2289 = vmul.f32 %v2106, %v2262
        %v2290 = vmul.f32 %v2108, %v2264
        %v2291 = vmul.f32 %v2159, %v2266
        %v2292 = vmul.f32 %v2161, %v2268
        %v2293 = vmul.f32 %v2112, %v2270
        %v2294 = vmul.f32 %v2114, %v2272
        %v2295 = vmul.f32 %v2165, %v2274
        %v2296 = vmul.f32 %v2167, %v2276
        %v2297 = vmul.f32 %v2116, %v2278
        %v2298 = vmul.f32 %v2118, %v2280
        %v2299 = vmul.f32 %v2169, %v2282
        %v2300 = vmul.f32 %v2171, %v2284
        %v2301 = vpack.c.bf16 %v2289, %v2285
        %v2302 = vpack.c.bf16 %v2290, %v2286
        %v2303 = vpack.c.bf16 %v2291, %v2287
        %v2304 = vpack.c.bf16 %v2292, %v2288
        %v2305 = vpack.c.bf16 %v2297, %v2293
        %v2306 = vpack.c.bf16 %v2298, %v2294
        %v2307 = vpack.c.bf16 %v2299, %v2295
        %v2308 = vpack.c.bf16 %v2300, %v2296
        %v2309 = vld [vmem:[%s12] sm:$0xf]
        %v2310 = vld [vmem:[%s12 + $0x4] sm:$0xf]
        %v2311 = vld [vmem:[%s12 + $0x8] sm:$0xf]
        %v2312 = vld [vmem:[%s12 + $0xc] sm:$0xf]
        %v2313 = vld [vmem:[%s12 + $0x10] sm:$0xf]
        %v2314 = vld [vmem:[%s12 + $0x14] sm:$0xf]
        %v2315 = vld [vmem:[%s12 + $0x18] sm:$0xf]
        %v2316 = vld [vmem:[%s12 + $0x1c] sm:$0xf]
        %v2317 = vld [vmem:[%s12 + $0x20] sm:$0xf]
        %v2318 = vld [vmem:[%s12 + $0x24] sm:$0xf]
        %v2319 = vld [vmem:[%s12 + $0x28] sm:$0xf]
        %v2320 = vld [vmem:[%s12 + $0x2c] sm:$0xf]
        %v2321 = vld [vmem:[%s12 + $0x30] sm:$0xf]
        %v2322 = vld [vmem:[%s12 + $0x34] sm:$0xf]
        %v2323 = vld [vmem:[%s12 + $0x38] sm:$0xf]
        %v2324 = vld [vmem:[%s12 + $0x3c] sm:$0xf]
        %v2325 = vld [vmem:[%s12 + $0x40] sm:$0xf]
        %v2326 = vld [vmem:[%s12 + $0x44] sm:$0xf]
        %v2327 = vld [vmem:[%s12 + $0x48] sm:$0xf]
        %v2328 = vld [vmem:[%s12 + $0x4c] sm:$0xf]
        %v2329 = vld [vmem:[%s12 + $0x50] sm:$0xf]
        %v2330 = vld [vmem:[%s12 + $0x54] sm:$0xf]
        %v2331 = vld [vmem:[%s12 + $0x58] sm:$0xf]
        %v2332 = vld [vmem:[%s12 + $0x5c] sm:$0xf]
        %v2333 = vld [vmem:[%s12 + $0x60] sm:$0xf]
        %v2334 = vld [vmem:[%s12 + $0x64] sm:$0xf]
        %v2335 = vld [vmem:[%s12 + $0x68] sm:$0xf]
        %v2336 = vld [vmem:[%s12 + $0x6c] sm:$0xf]
        %v2337 = vld [vmem:[%s12 + $0x70] sm:$0xf]
        %v2338 = vld [vmem:[%s12 + $0x74] sm:$0xf]
        %v2339 = vld [vmem:[%s12 + $0x78] sm:$0xf]
        %v2340 = vld [vmem:[%s12 + $0x7c] sm:$0xf]
        %v2341 = vld [vmem:[%s12 + $0x80] sm:$0xf]
        %v2342 = vld [vmem:[%s12 + $0x84] sm:$0xf]
        %v2343 = vld [vmem:[%s12 + $0x88] sm:$0xf]
        %v2344 = vld [vmem:[%s12 + $0x8c] sm:$0xf]
        %v2345 = vld [vmem:[%s12 + $0x90] sm:$0xf]
        %v2346 = vld [vmem:[%s12 + $0x94] sm:$0xf]
        %v2347 = vld [vmem:[%s12 + $0x98] sm:$0xf]
        %v2348 = vld [vmem:[%s12 + $0x9c] sm:$0xf]
        %v2349 = vld [vmem:[%s12 + $0xa0] sm:$0xf]
        %v2350 = vld [vmem:[%s12 + $0xa4] sm:$0xf]
        %v2351 = vld [vmem:[%s12 + $0xa8] sm:$0xf]
        %v2352 = vld [vmem:[%s12 + $0xac] sm:$0xf]
        %v2353 = vld [vmem:[%s12 + $0xb0] sm:$0xf]
        %v2354 = vld [vmem:[%s12 + $0xb4] sm:$0xf]
        %v2355 = vld [vmem:[%s12 + $0xb8] sm:$0xf]
        %v2356 = vld [vmem:[%s12 + $0xbc] sm:$0xf]
        %v2357 = vld [vmem:[%s12 + $0xc0] sm:$0xf]
        %v2358 = vld [vmem:[%s12 + $0xc4] sm:$0xf]
        %v2359 = vld [vmem:[%s12 + $0xc8] sm:$0xf]
        %v2360 = vld [vmem:[%s12 + $0xcc] sm:$0xf]
        %v2361 = vld [vmem:[%s12 + $0xd0] sm:$0xf]
        %v2362 = vld [vmem:[%s12 + $0xd4] sm:$0xf]
        %v2363 = vld [vmem:[%s12 + $0xd8] sm:$0xf]
        %v2364 = vld [vmem:[%s12 + $0xdc] sm:$0xf]
        %v2365 = vld [vmem:[%s12 + $0xe0] sm:$0xf]
        %v2366 = vld [vmem:[%s12 + $0xe4] sm:$0xf]
        %v2367 = vld [vmem:[%s12 + $0xe8] sm:$0xf]
        %v2368 = vld [vmem:[%s12 + $0xec] sm:$0xf]
        %v2369 = vld [vmem:[%s12 + $0xf0] sm:$0xf]
        %v2370 = vld [vmem:[%s12 + $0xf4] sm:$0xf]
        %v2371 = vld [vmem:[%s12 + $0xf8] sm:$0xf]
        %v2372 = vld [vmem:[%s12 + $0xfc] sm:$0xf]
        %v2437 = vunpack.c.l.b16 %v2309
        %v2438 = vunpack.c.l.b16 %v2310
        %v2439 = vunpack.c.l.b16 %v2311
        %v2440 = vunpack.c.l.b16 %v2312
        %v2441 = vunpack.c.l.b16 %v2313
        %v2442 = vunpack.c.l.b16 %v2314
        %v2443 = vunpack.c.l.b16 %v2315
        %v2444 = vunpack.c.l.b16 %v2316
        %v2445 = vunpack.c.l.b16 %v2317
        %v2446 = vunpack.c.l.b16 %v2318
        %v2447 = vunpack.c.l.b16 %v2319
        %v2448 = vunpack.c.l.b16 %v2320
        %v2449 = vunpack.c.l.b16 %v2321
        %v2450 = vunpack.c.l.b16 %v2322
        %v2451 = vunpack.c.l.b16 %v2323
        %v2452 = vunpack.c.l.b16 %v2324
        %v2453 = vunpack.c.l.b16 %v2325
        %v2454 = vunpack.c.l.b16 %v2326
        %v2455 = vunpack.c.l.b16 %v2327
        %v2456 = vunpack.c.l.b16 %v2328
        %v2457 = vunpack.c.l.b16 %v2329
        %v2458 = vunpack.c.l.b16 %v2330
        %v2459 = vunpack.c.l.b16 %v2331
        %v2460 = vunpack.c.l.b16 %v2332
        %v2461 = vunpack.c.l.b16 %v2333
        %v2462 = vunpack.c.l.b16 %v2334
        %v2463 = vunpack.c.l.b16 %v2335
        %v2464 = vunpack.c.l.b16 %v2336
        %v2465 = vunpack.c.l.b16 %v2337
        %v2466 = vunpack.c.l.b16 %v2338
        %v2467 = vunpack.c.l.b16 %v2339
        %v2468 = vunpack.c.l.b16 %v2340
        %v2469 = vunpack.c.l.b16 %v2341
        %v2470 = vunpack.c.l.b16 %v2342
        %v2471 = vunpack.c.l.b16 %v2343
        %v2472 = vunpack.c.l.b16 %v2344
        %v2473 = vunpack.c.l.b16 %v2345
        %v2474 = vunpack.c.l.b16 %v2346
        %v2475 = vunpack.c.l.b16 %v2347
        %v2476 = vunpack.c.l.b16 %v2348
        %v2477 = vunpack.c.l.b16 %v2349
        %v2478 = vunpack.c.l.b16 %v2350
        %v2479 = vunpack.c.l.b16 %v2351
        %v2480 = vunpack.c.l.b16 %v2352
        %v2481 = vunpack.c.l.b16 %v2353
        %v2482 = vunpack.c.l.b16 %v2354
        %v2483 = vunpack.c.l.b16 %v2355
        %v2484 = vunpack.c.l.b16 %v2356
        %v2485 = vunpack.c.l.b16 %v2357
        %v2486 = vunpack.c.l.b16 %v2358
        %v2487 = vunpack.c.l.b16 %v2359
        %v2488 = vunpack.c.l.b16 %v2360
        %v2489 = vunpack.c.l.b16 %v2361
        %v2490 = vunpack.c.l.b16 %v2362
        %v2491 = vunpack.c.l.b16 %v2363
        %v2492 = vunpack.c.l.b16 %v2364
        %v2493 = vunpack.c.l.b16 %v2365
        %v2494 = vunpack.c.l.b16 %v2366
        %v2495 = vunpack.c.l.b16 %v2367
        %v2496 = vunpack.c.l.b16 %v2368
        %v2497 = vunpack.c.l.b16 %v2369
        %v2498 = vunpack.c.l.b16 %v2370
        %v2499 = vunpack.c.l.b16 %v2371
        %v2500 = vunpack.c.l.b16 %v2372
        %v2501 = vpack.c.b16 %v2438, %v2437
        %v2502 = vpack.c.b16 %v2440, %v2439
        %v2503 = vpack.c.b16 %v2442, %v2441
        %v2504 = vpack.c.b16 %v2444, %v2443
        %v2505 = vpack.c.b16 %v2446, %v2445
        %v2506 = vpack.c.b16 %v2448, %v2447
        %v2507 = vpack.c.b16 %v2450, %v2449
        %v2508 = vpack.c.b16 %v2452, %v2451
        %v2509 = vpack.c.b16 %v2454, %v2453
        %v2510 = vpack.c.b16 %v2456, %v2455
        %v2511 = vpack.c.b16 %v2458, %v2457
        %v2512 = vpack.c.b16 %v2460, %v2459
        %v2513 = vpack.c.b16 %v2462, %v2461
        %v2514 = vpack.c.b16 %v2464, %v2463
        %v2515 = vpack.c.b16 %v2466, %v2465
        %v2516 = vpack.c.b16 %v2468, %v2467
        %v2517 = vpack.c.b16 %v2470, %v2469
        %v2518 = vpack.c.b16 %v2472, %v2471
        %v2519 = vpack.c.b16 %v2474, %v2473
        %v2520 = vpack.c.b16 %v2476, %v2475
        %v2521 = vpack.c.b16 %v2478, %v2477
        %v2522 = vpack.c.b16 %v2480, %v2479
        %v2523 = vpack.c.b16 %v2482, %v2481
        %v2524 = vpack.c.b16 %v2484, %v2483
        %v2525 = vpack.c.b16 %v2486, %v2485
        %v2526 = vpack.c.b16 %v2488, %v2487
        %v2527 = vpack.c.b16 %v2490, %v2489
        %v2528 = vpack.c.b16 %v2492, %v2491
        %v2529 = vpack.c.b16 %v2494, %v2493
        %v2530 = vpack.c.b16 %v2496, %v2495
        %v2531 = vpack.c.b16 %v2498, %v2497
        %v2532 = vpack.c.b16 %v2500, %v2499
        %2565 = vmatprep.subr.bf16.mxu0 0
        %2566 = vmatpush1.bf16.msra.mxu0 %v2508
        %2567 = vmatprep.subr.bf16.mxu0 0
        %2568 = vmatpush1.bf16.msra.mxu0 %v2507
        %2569 = vmatprep.subr.bf16.mxu0 0
        %2570 = vmatpush1.bf16.msra.mxu0 %v2506
        %2571 = vmatprep.subr.bf16.mxu0 0
        %2572 = vmatpush1.bf16.msra.mxu0 %v2505
        %2573 = vmatprep.subr.bf16.mxu0 0
        %2574 = vmatpush1.bf16.msra.mxu0 %v2504
        %2575 = vmatprep.subr.bf16.mxu0 0
        %2576 = vmatpush1.bf16.msra.mxu0 %v2503
        %2577 = vmatprep.subr.bf16.mxu0 0
        %2578 = vmatpush1.bf16.msra.mxu0 %v2502
        %2579 = vmatprep.subr.bf16.mxu0 0
        %2580 = vmatpush1.bf16.msra.mxu0 %v2501
        %2581 = vmatprep.subr.bf16.mxu0 0
        %2582 = vmatpush2.bf16.msra.mxu0 %v2516
        %2583 = vmatprep.subr.bf16.mxu0 0
        %2584 = vmatpush2.bf16.msra.mxu0 %v2515
        %2585 = vmatprep.subr.bf16.mxu0 0
        %2586 = vmatpush2.bf16.msra.mxu0 %v2514
        %2587 = vmatprep.subr.bf16.mxu0 0
        %2588 = vmatpush2.bf16.msra.mxu0 %v2513
        %2589 = vmatprep.subr.bf16.mxu0 0
        %2590 = vmatpush2.bf16.msra.mxu0 %v2512
        %2591 = vmatprep.subr.bf16.mxu0 0
        %2592 = vmatpush2.bf16.msra.mxu0 %v2511
        %2593 = vmatprep.subr.bf16.mxu0 0
        %2594 = vmatpush2.bf16.msra.mxu0 %v2510
        %2595 = vmatprep.subr.bf16.mxu0 0
        %2596 = vmatpush2.bf16.msra.mxu0 %v2509
        %2597 = vmatprep.mubr.bf16.mxu0 %v2302
        %2598 = vmatmul.mubr.bf16.gmra.mxu0 %v2301
        %v2599 = vpop.f32.mrf.mxu0
        %v2600 = vadd.f32 0.0, %v2599
        %v2601 = vpop.f32.mrf.mxu0
        %v2602 = vpop.f32.mrf.mxu0
        %v2603 = vadd.f32 0.0, %v2602
        %v2604 = vpop.f32.mrf.mxu0
        %2605 = vmatprep.mubr.bf16.mxu0 %v2306
        %2606 = vmatmul.mubr.bf16.gmra.mxu0 %v2305
        %v2607 = vpop.f32.mrf.mxu0
        %v2608 = vadd.f32 0.0, %v2607
        %v2609 = vpop.f32.mrf.mxu0
        %v2610 = vpop.f32.mrf.mxu0
        %v2611 = vadd.f32 0.0, %v2610
        %v2612 = vpop.f32.mrf.mxu0
        %2613 = vdwg.mxu0
        %2614 = vmatprep.subr.bf16.mxu0 0
        %2615 = vmatpush1.bf16.msra.mxu0 %v2524
        %2616 = vmatprep.subr.bf16.mxu0 0
        %2617 = vmatpush1.bf16.msra.mxu0 %v2523
        %2618 = vmatprep.subr.bf16.mxu0 0
        %2619 = vmatpush1.bf16.msra.mxu0 %v2522
        %2620 = vmatprep.subr.bf16.mxu0 0
        %2621 = vmatpush1.bf16.msra.mxu0 %v2521
        %2622 = vmatprep.subr.bf16.mxu0 0
        %2623 = vmatpush1.bf16.msra.mxu0 %v2520
        %2624 = vmatprep.subr.bf16.mxu0 0
        %2625 = vmatpush1.bf16.msra.mxu0 %v2519
        %2626 = vmatprep.subr.bf16.mxu0 0
        %2627 = vmatpush1.bf16.msra.mxu0 %v2518
        %2628 = vmatprep.subr.bf16.mxu0 0
        %2629 = vmatpush1.bf16.msra.mxu0 %v2517
        %2630 = vmatprep.subr.bf16.mxu0 0
        %2631 = vmatpush2.bf16.msra.mxu0 %v2532
        %2632 = vmatprep.subr.bf16.mxu0 0
        %2633 = vmatpush2.bf16.msra.mxu0 %v2531
        %2634 = vmatprep.subr.bf16.mxu0 0
        %2635 = vmatpush2.bf16.msra.mxu0 %v2530
        %2636 = vmatprep.subr.bf16.mxu0 0
        %2637 = vmatpush2.bf16.msra.mxu0 %v2529
        %2638 = vmatprep.subr.bf16.mxu0 0
        %2639 = vmatpush2.bf16.msra.mxu0 %v2528
        %2640 = vmatprep.subr.bf16.mxu0 0
        %2641 = vmatpush2.bf16.msra.mxu0 %v2527
        %2642 = vmatprep.subr.bf16.mxu0 0
        %2643 = vmatpush2.bf16.msra.mxu0 %v2526
        %2644 = vmatprep.subr.bf16.mxu0 0
        %2645 = vmatpush2.bf16.msra.mxu0 %v2525
        %2646 = vmatprep.mubr.bf16.mxu0 %v2304
        %2647 = vmatmul.mubr.bf16.gmra.mxu0 %v2303
        %v2648 = vpop.f32.mrf.mxu0
        %v2649 = vadd.f32 %v2600, %v2648
        %v2650 = vpop.f32.mrf.mxu0
        %v2651 = vpop.f32.mrf.mxu0
        %v2652 = vadd.f32 %v2603, %v2651
        %v2653 = vpop.f32.mrf.mxu0
        %2654 = vmatprep.mubr.bf16.mxu0 %v2308
        %2655 = vmatmul.mubr.bf16.gmra.mxu0 %v2307
        %v2656 = vpop.f32.mrf.mxu0
        %v2657 = vadd.f32 %v2608, %v2656
        %v2658 = vpop.f32.mrf.mxu0
        %v2659 = vpop.f32.mrf.mxu0
        %v2660 = vadd.f32 %v2611, %v2659
        %v2661 = vpop.f32.mrf.mxu0
        %2662 = vdwg.mxu0
        %v2663 = vld [vmem:[#allocation4] sm:$0xff]
        %v2664 = vld [vmem:[#allocation4 + $0x8] sm:$0xff]
        %v2665 = vld [vmem:[#allocation4 + $0x10] sm:$0xff]
        %v2666 = vld [vmem:[#allocation4 + $0x18] sm:$0xff]
        %v2667 = vadd.f32 %v2663, %v2649
        %v2668 = vadd.f32 %v2664, %v2652
        %v2669 = vadd.f32 %v2665, %v2657
        %v2670 = vadd.f32 %v2666, %v2660
        %v2671 = vld [vmem:[#allocation13] sm:$0x1]
        %v2673 = vlaneseq
        %v2674 = vshrl.u32 %v2673, 7
        %v2675 = vsub.s32 0, %v2674
        %v2676 = vrot.slane %v2671, %v2675
        %v2678 = vadd.f32 %v2667, %v2676
        %v2679 = vadd.f32 %v2668, %v2676
        %v2680 = vadd.f32 %v2669, %v2676
        %v2681 = vadd.f32 %v2670, %v2676
        %2682 = vst [vmem:[%s577] sm:$0xff] %v2678
        %2683 = vst [vmem:[%s577 + $0x8] sm:$0xff] %v2679
        %2684 = vst [vmem:[%s577 + $0x10] sm:$0xff] %v2680
        %2685 = vst [vmem:[%s577 + $0x18] sm:$0xff] %v2681
        %s2686 = smul.u32 2, %s29
        %p2687 = scmp.lt.s32.totalorder %s2686, 3
        %s2688 = scalar_select %p2687, %s2686, 3
        %s2689 = smul.addr %s2688, 2
        %s2690 = smul.addr %s2689, 8
        %s2691 = scalar_lea.vmem %s14, %s2690
        // Predicated region
        $region108: #{text_encoder_forward.4} parent=75 // pred_check
          %p2692 = pneg %p351
        $region109: #{text_encoder_forward.4} parent=75 // pred_check_branch
          %2694 = sbr.rel (%p2692) target = $region111
        $region110: #{text_encoder_forward.4} parent=75 // pred_region
          %s2695 = smul.u32 2, %s29
        $region111: #{text_encoder_forward.4} parent=75 // pred_fallthru
          _
      $region76: #{text_encoder_forward.4} parent=5 // pred_fallthru
        _
      %p2696 = scmp.le.s32.totalorder 2, %s24
      // Predicated region
      $region112: #{text_encoder_forward.4} parent=5 // pred_check
        %p2697 = pneg %p2696
      $region113: #{text_encoder_forward.4} parent=5 // pred_check_branch
        %2699 = sbr.rel (%p2697) target = $region115
      $region114: #{text_encoder_forward.4} parent=5 // pred_region
        %s2700 = ssub.s32 %s24, 2
        // Predicated region
        $region116: #{text_encoder_forward.4} parent=114 // pred_check
          %p2701 = pneg %p357
        $region117: #{text_encoder_forward.4} parent=114 // pred_check_branch
          %2703 = sbr.rel (%p2701) target = $region119
        $region118: #{text_encoder_forward.4} parent=114 // pred_region
          %s2704 = smul.u32 2, %s30
          %p2705 = scmp.lt.s32.totalorder %s2704, 3
          %s2706 = scalar_select %p2705, %s2704, 3
          %s2707 = smul.addr %s2706, 2
          %s2708 = smul.addr %s2707, 8
          %s2709 = scalar_lea.vmem %s14, %s2708
        $region119: #{text_encoder_forward.4} parent=114 // pred_fallthru
          _
      $region115: #{text_encoder_forward.4} parent=5 // pred_fallthru
        _
    $region6: #{text_encoder_forward.4} parent=1 // loop_footer
      %s28 = sadd.s32 1, %s24
    $region7: #{text_encoder_forward.4} parent=1 // loop_footer_branch
      %23 = sbr.rel target = $region3
    $region8: #{text_encoder_forward.4} parent=1 // loop_exit
      _
    %2710 = vsyncpa [#allocation6], 1
    %s2711 = scalar_lea.sflag [#allocation6], 1
    %2712 = vsyncpa %s2711, 1
    %2713 = vsyncpa [#allocation8], 1
    %2714 = vsyncpa [#allocation11], 1
    %2715 = vsyncpa [#allocation14], 1

// kernel: text_encoder_forward.5
$region0: #{text_encoder_forward.5}
  #allocation0 [shape = 'u32[]', space=smem, size = 0x4, offset = 0x4, fixed_abs, tag = 'smem constant byte address 0x4 - core index']
  #allocation1 [shape = 'u32[144,128]{1,0:T(1,128)}', space=vmem, size = 0x12000, scoped, tag = 'internal scratch']
  #allocation2 [shape = 'bf16[32,384]{1,0:T(8,128)(2,1)}', space=vmem, size = 0x6000, scoped, tag = 'scratch operand']
  #allocation3 [shape = 'bf16[32,128]{1,0:T(8,128)(2,1)}', space=vmem, size = 0x2000, scoped, tag = 'scratch operand']
  #allocation4 [shape = 'f32[32,128]{1,0:T(8,128)}', space=vmem, size = 0x4000, scoped, tag = 'scratch operand']
  %s0 = inlined_call_operand.vmem [shape: f32[4,16,128], index: 0, kind: input, shape index: {}]
  %s1 = inlined_call_operand.vmem [shape: f32[4,16,16], index: 1, kind: input, shape index: {}]
  %s2 = inlined_call_operand.vmem [shape: f32[1,128], index: 2, kind: input, shape index: {}]
  %s3 = inlined_call_operand.vmem [shape: f32[1,128], index: 3, kind: input, shape index: {}]
  %s4 = inlined_call_operand.vmem [shape: bf16[128,384], index: 4, kind: input, shape index: {}]
  %s5 = inlined_call_operand.vmem [shape: f32[1,384], index: 5, kind: input, shape index: {}]
  %s6 = inlined_call_operand.vmem [shape: bf16[128,128], index: 6, kind: input, shape index: {}]
  %s7 = inlined_call_operand.vmem [shape: f32[1,128], index: 7, kind: input, shape index: {}]
  %s8 = inlined_call_operand.vmem [shape: f32[1,128], index: 8, kind: input, shape index: {}]
  %s9 = inlined_call_operand.vmem [shape: f32[1,128], index: 9, kind: input, shape index: {}]
  %s10 = inlined_call_operand.vmem [shape: bf16[128,512], index: 10, kind: input, shape index: {}]
  %s11 = inlined_call_operand.vmem [shape: f32[1,512], index: 11, kind: input, shape index: {}]
  %s12 = inlined_call_operand.vmem [shape: bf16[512,128], index: 12, kind: input, shape index: {}]
  %s13 = inlined_call_operand.vmem [shape: f32[1,128], index: 13, kind: input, shape index: {}]
  %s14 = inlined_call_operand.vmem [shape: f32[4,16,128], index: 14, kind: output, shape index: {}]
  %s15 = sld [smem:[#allocation0]]
  $region96: #{text_encoder_forward.5} parent=0
    _
  %s17 = ssub.s32 1, %s15
  %s18 = scalar_select 0, %s17, %s15
  loop: start=0, step=1, limit=4
  $region2: #{text_encoder_forward.5} parent=0 // loop_pre_header
    _
  $region3: #{text_encoder_forward.5} parent=0 // loop_header
    %s20 = sphi 0, %s24
    %p21 = scmp.ge.s32.totalorder %s20, 4
    %s30 = sphi 0, %s32
    %s33 = sphi 0, %s30
    %s34 = sphi 0, %s33
    %s50 = sphi 0, %s34
    %s56 = sphi 0, %s58
    %s59 = sphi 0, %s56
    %s60 = sphi 0, %s59
    %s76 = sphi 0, %s60
    %s80 = sphi 0, %s80
    %s82 = sphi 0, %s80
    %s83 = sphi 0, %s82
    %s97 = sphi 0, %s83
    %s101 = sphi 0, %s101
    %s103 = sphi 0, %s101
    %s104 = sphi 0, %s103
    %s118 = sphi 0, %s104
    %s122 = sphi 0, %s122
    %s124 = sphi 0, %s122
    %s125 = sphi 0, %s124
    %s139 = sphi 0, %s125
    %s143 = sphi 0, %s143
    %s145 = sphi 0, %s143
    %s146 = sphi 0, %s145
    %s160 = sphi 0, %s146
    %s164 = sphi 0, %s164
    %s166 = sphi 0, %s164
    %s167 = sphi 0, %s166
    %s181 = sphi 0, %s167
    %s185 = sphi 0, %s185
    %s187 = sphi 0, %s185
    %s188 = sphi 0, %s187
    %s202 = sphi 0, %s188
    %s206 = sphi 0, %s206
    %s208 = sphi 0, %s206
    %s209 = sphi 0, %s208
    %s223 = sphi 0, %s209
    %s227 = sphi 0, %s227
    %s229 = sphi 0, %s227
    %s230 = sphi 0, %s229
    %s244 = sphi 0, %s230
    %s248 = sphi 0, %s248
    %s250 = sphi 0, %s248
    %s251 = sphi 0, %s250
    %s265 = sphi 0, %s251
    %s269 = sphi 0, %s269
    %s271 = sphi 0, %s269
    %s272 = sphi 0, %s271
    %s286 = sphi 0, %s272
    %s290 = sphi 0, %s290
    %s292 = sphi 0, %s290
    %s293 = sphi 0, %s292
    %s307 = sphi 0, %s293
    %s311 = sphi 0, %s311
    %s313 = sphi 0, %s311
    %s314 = sphi 0, %s313
    %s328 = sphi 0, %s314
    %s334 = sphi 0, %s336
    %s337 = sphi 0, %s334
    %s338 = sphi 0, %s337
    %s354 = sphi 0, %s338
  $region4: #{text_encoder_forward.5} parent=0 // loop_header_branch
    %23 = sbr.rel (%p21) target = $region8
  $region5: #{text_encoder_forward.5} parent=0 // loop_body
    %s25 = ssub.s32 %s20, 1
    %s26 = ssub.s32 %s20, 2
    %s27 = sadd.s32 %s20, 1
    %s28 = ssub.s32 %s20, %s27
    %p29 = scmp.eq.s32.totalorder %s28, 0
    %s31 = sadd.s32 %s30, 1
    %s32 = scalar_select %p29, %s30, %s31
    %p35 = pneg %p29
    %p36 = scmp.eq.s32.totalorder %s20, 1
    %p37 = por %p35, %p36
    %p38 = scmp.ne.s32.totalorder %s30, %s33
    %p39 = scmp.eq.s32.totalorder %s20, 0
    %p40 = por %p38, %p39
    %p41 = scmp.ne.s32.totalorder %s30, %s33
    %p42 = scmp.eq.s32.totalorder %s25, 1
    %p43 = por %p41, %p42
    %p44 = scmp.ne.s32.totalorder %s33, %s34
    %p45 = scmp.eq.s32.totalorder %s25, 0
    %p46 = por %p44, %p45
    %p47 = scmp.ne.s32.totalorder %s33, %s34
    %p48 = scmp.eq.s32.totalorder %s26, 1
    %p49 = por %p47, %p48
    %p51 = scmp.ne.s32.totalorder %s34, %s50
    %p52 = scmp.eq.s32.totalorder %s26, 0
    %p53 = por %p51, %p52
    %s54 = ssub.s32 %s20, %s27
    %p55 = scmp.eq.s32.totalorder %s54, 0
    %s57 = sadd.s32 %s56, 1
    %s58 = scalar_select %p55, %s56, %s57
    %p61 = pneg %p55
    %p62 = scmp.eq.s32.totalorder %s20, 1
    %p63 = por %p61, %p62
    %p64 = scmp.ne.s32.totalorder %s56, %s59
    %p65 = scmp.eq.s32.totalorder %s20, 0
    %p66 = por %p64, %p65
    %p67 = scmp.ne.s32.totalorder %s56, %s59
    %p68 = scmp.eq.s32.totalorder %s25, 1
    %p69 = por %p67, %p68
    %p70 = scmp.ne.s32.totalorder %s59, %s60
    %p71 = scmp.eq.s32.totalorder %s25, 0
    %p72 = por %p70, %p71
    %p73 = scmp.ne.s32.totalorder %s59, %s60
    %p74 = scmp.eq.s32.totalorder %s26, 1
    %p75 = por %p73, %p74
    %p77 = scmp.ne.s32.totalorder %s60, %s76
    %p78 = scmp.eq.s32.totalorder %s26, 0
    %p79 = por %p77, %p78
    %s81 = sadd.s32 %s80, 1
    %p84 = scmp.eq.s32.totalorder %s20, 1
    %p85 = scmp.ne.s32.totalorder %s80, %s82
    %p86 = scmp.eq.s32.totalorder %s20, 0
    %p87 = por %p85, %p86
    %p88 = scmp.ne.s32.totalorder %s80, %s82
    %p89 = scmp.eq.s32.totalorder %s25, 1
    %p90 = por %p88, %p89
    %p91 = scmp.ne.s32.totalorder %s82, %s83
    %p92 = scmp.eq.s32.totalorder %s25, 0
    %p93 = por %p91, %p92
    %p94 = scmp.ne.s32.totalorder %s82, %s83
    %p95 = scmp.eq.s32.totalorder %s26, 1
    %p96 = por %p94, %p95
    %p98 = scmp.ne.s32.totalorder %s83, %s97
    %p99 = scmp.eq.s32.totalorder %s26, 0
    %p100 = por %p98, %p99
    %s102 = sadd.s32 %s101, 1
    %p105 = scmp.eq.s32.totalorder %s20, 1
    %p106 = scmp.ne.s32.totalorder %s101, %s103
    %p107 = scmp.eq.s32.totalorder %s20, 0
    %p108 = por %p106, %p107
    %p109 = scmp.ne.s32.totalorder %s101, %s103
    %p110 = scmp.eq.s32.totalorder %s25, 1
    %p111 = por %p109, %p110
    %p112 = scmp.ne.s32.totalorder %s103, %s104
    %p113 = scmp.eq.s32.totalorder %s25, 0
    %p114 = por %p112, %p113
    %p115 = scmp.ne.s32.totalorder %s103, %s104
    %p116 = scmp.eq.s32.totalorder %s26, 1
    %p117 = por %p115, %p116
    %p119 = scmp.ne.s32.totalorder %s104, %s118
    %p120 = scmp.eq.s32.totalorder %s26, 0
    %p121 = por %p119, %p120
    %s123 = sadd.s32 %s122, 1
    %p126 = scmp.eq.s32.totalorder %s20, 1
    %p127 = scmp.ne.s32.totalorder %s122, %s124
    %p128 = scmp.eq.s32.totalorder %s20, 0
    %p129 = por %p127, %p128
    %p130 = scmp.ne.s32.totalorder %s122, %s124
    %p131 = scmp.eq.s32.totalorder %s25, 1
    %p132 = por %p130, %p131
    %p133 = scmp.ne.s32.totalorder %s124, %s125
    %p134 = scmp.eq.s32.totalorder %s25, 0
    %p135 = por %p133, %p134
    %p136 = scmp.ne.s32.totalorder %s124, %s125
    %p137 = scmp.eq.s32.totalorder %s26, 1
    %p138 = por %p136, %p137
    %p140 = scmp.ne.s32.totalorder %s125, %s139
    %p141 = scmp.eq.s32.totalorder %s26, 0
    %p142 = por %p140, %p141
    %s144 = sadd.s32 %s143, 1
    %p147 = scmp.eq.s32.totalorder %s20, 1
    %p148 = scmp.ne.s32.totalorder %s143, %s145
    %p149 = scmp.eq.s32.totalorder %s20, 0
    %p150 = por %p148, %p149
    %p151 = scmp.ne.s32.totalorder %s143, %s145
    %p152 = scmp.eq.s32.totalorder %s25, 1
    %p153 = por %p151, %p152
    %p154 = scmp.ne.s32.totalorder %s145, %s146
    %p155 = scmp.eq.s32.totalorder %s25, 0
    %p156 = por %p154, %p155
    %p157 = scmp.ne.s32.totalorder %s145, %s146
    %p158 = scmp.eq.s32.totalorder %s26, 1
    %p159 = por %p157, %p158
    %p161 = scmp.ne.s32.totalorder %s146, %s160
    %p162 = scmp.eq.s32.totalorder %s26, 0
    %p163 = por %p161, %p162
    %s165 = sadd.s32 %s164, 1
    %p168 = scmp.eq.s32.totalorder %s20, 1
    %p169 = scmp.ne.s32.totalorder %s164, %s166
    %p170 = scmp.eq.s32.totalorder %s20, 0
    %p171 = por %p169, %p170
    %p172 = scmp.ne.s32.totalorder %s164, %s166
    %p173 = scmp.eq.s32.totalorder %s25, 1
    %p174 = por %p172, %p173
    %p175 = scmp.ne.s32.totalorder %s166, %s167
    %p176 = scmp.eq.s32.totalorder %s25, 0
    %p177 = por %p175, %p176
    %p178 = scmp.ne.s32.totalorder %s166, %s167
    %p179 = scmp.eq.s32.totalorder %s26, 1
    %p180 = por %p178, %p179
    %p182 = scmp.ne.s32.totalorder %s167, %s181
    %p183 = scmp.eq.s32.totalorder %s26, 0
    %p184 = por %p182, %p183
    %s186 = sadd.s32 %s185, 1
    %p189 = scmp.eq.s32.totalorder %s20, 1
    %p190 = scmp.ne.s32.totalorder %s185, %s187
    %p191 = scmp.eq.s32.totalorder %s20, 0
    %p192 = por %p190, %p191
    %p193 = scmp.ne.s32.totalorder %s185, %s187
    %p194 = scmp.eq.s32.totalorder %s25, 1
    %p195 = por %p193, %p194
    %p196 = scmp.ne.s32.totalorder %s187, %s188
    %p197 = scmp.eq.s32.totalorder %s25, 0
    %p198 = por %p196, %p197
    %p199 = scmp.ne.s32.totalorder %s187, %s188
    %p200 = scmp.eq.s32.totalorder %s26, 1
    %p201 = por %p199, %p200
    %p203 = scmp.ne.s32.totalorder %s188, %s202
    %p204 = scmp.eq.s32.totalorder %s26, 0
    %p205 = por %p203, %p204
    %s207 = sadd.s32 %s206, 1
    %p210 = scmp.eq.s32.totalorder %s20, 1
    %p211 = scmp.ne.s32.totalorder %s206, %s208
    %p212 = scmp.eq.s32.totalorder %s20, 0
    %p213 = por %p211, %p212
    %p214 = scmp.ne.s32.totalorder %s206, %s208
    %p215 = scmp.eq.s32.totalorder %s25, 1
    %p216 = por %p214, %p215
    %p217 = scmp.ne.s32.totalorder %s208, %s209
    %p218 = scmp.eq.s32.totalorder %s25, 0
    %p219 = por %p217, %p218
    %p220 = scmp.ne.s32.totalorder %s208, %s209
    %p221 = scmp.eq.s32.totalorder %s26, 1
    %p222 = por %p220, %p221
    %p224 = scmp.ne.s32.totalorder %s209, %s223
    %p225 = scmp.eq.s32.totalorder %s26, 0
    %p226 = por %p224, %p225
    %s228 = sadd.s32 %s227, 1
    %p231 = scmp.eq.s32.totalorder %s20, 1
    %p232 = scmp.ne.s32.totalorder %s227, %s229
    %p233 = scmp.eq.s32.totalorder %s20, 0
    %p234 = por %p232, %p233
    %p235 = scmp.ne.s32.totalorder %s227, %s229
    %p236 = scmp.eq.s32.totalorder %s25, 1
    %p237 = por %p235, %p236
    %p238 = scmp.ne.s32.totalorder %s229, %s230
    %p239 = scmp.eq.s32.totalorder %s25, 0
    %p240 = por %p238, %p239
    %p241 = scmp.ne.s32.totalorder %s229, %s230
    %p242 = scmp.eq.s32.totalorder %s26, 1
    %p243 = por %p241, %p242
    %p245 = scmp.ne.s32.totalorder %s230, %s244
    %p246 = scmp.eq.s32.totalorder %s26, 0
    %p247 = por %p245, %p246
    %s249 = sadd.s32 %s248, 1
    %p252 = scmp.eq.s32.totalorder %s20, 1
    %p253 = scmp.ne.s32.totalorder %s248, %s250
    %p254 = scmp.eq.s32.totalorder %s20, 0
    %p255 = por %p253, %p254
    %p256 = scmp.ne.s32.totalorder %s248, %s250
    %p257 = scmp.eq.s32.totalorder %s25, 1
    %p258 = por %p256, %p257
    %p259 = scmp.ne.s32.totalorder %s250, %s251
    %p260 = scmp.eq.s32.totalorder %s25, 0
    %p261 = por %p259, %p260
    %p262 = scmp.ne.s32.totalorder %s250, %s251
    %p263 = scmp.eq.s32.totalorder %s26, 1
    %p264 = por %p262, %p263
    %p266 = scmp.ne.s32.totalorder %s251, %s265
    %p267 = scmp.eq.s32.totalorder %s26, 0
    %p268 = por %p266, %p267
    %s270 = sadd.s32 %s269, 1
    %p273 = scmp.eq.s32.totalorder %s20, 1
    %p274 = scmp.ne.s32.totalorder %s269, %s271
    %p275 = scmp.eq.s32.totalorder %s20, 0
    %p276 = por %p274, %p275
    %p277 = scmp.ne.s32.totalorder %s269, %s271
    %p278 = scmp.eq.s32.totalorder %s25, 1
    %p279 = por %p277, %p278
    %p280 = scmp.ne.s32.totalorder %s271, %s272
    %p281 = scmp.eq.s32.totalorder %s25, 0
    %p282 = por %p280, %p281
    %p283 = scmp.ne.s32.totalorder %s271, %s272
    %p284 = scmp.eq.s32.totalorder %s26, 1
    %p285 = por %p283, %p284
    %p287 = scmp.ne.s32.totalorder %s272, %s286
    %p288 = scmp.eq.s32.totalorder %s26, 0
    %p289 = por %p287, %p288
    %s291 = sadd.s32 %s290, 1
    %p294 = scmp.eq.s32.totalorder %s20, 1
    %p295 = scmp.ne.s32.totalorder %s290, %s292
    %p296 = scmp.eq.s32.totalorder %s20, 0
    %p297 = por %p295, %p296
    %p298 = scmp.ne.s32.totalorder %s290, %s292
    %p299 = scmp.eq.s32.totalorder %s25, 1
    %p300 = por %p298, %p299
    %p301 = scmp.ne.s32.totalorder %s292, %s293
    %p302 = scmp.eq.s32.totalorder %s25, 0
    %p303 = por %p301, %p302
    %p304 = scmp.ne.s32.totalorder %s292, %s293
    %p305 = scmp.eq.s32.totalorder %s26, 1
    %p306 = por %p304, %p305
    %p308 = scmp.ne.s32.totalorder %s293, %s307
    %p309 = scmp.eq.s32.totalorder %s26, 0
    %p310 = por %p308, %p309
    %s312 = sadd.s32 %s311, 1
    %p315 = scmp.eq.s32.totalorder %s20, 1
    %p316 = scmp.ne.s32.totalorder %s311, %s313
    %p317 = scmp.eq.s32.totalorder %s20, 0
    %p318 = por %p316, %p317
    %p319 = scmp.ne.s32.totalorder %s311, %s313
    %p320 = scmp.eq.s32.totalorder %s25, 1
    %p321 = por %p319, %p320
    %p322 = scmp.ne.s32.totalorder %s313, %s314
    %p323 = scmp.eq.s32.totalorder %s25, 0
    %p324 = por %p322, %p323
    %p325 = scmp.ne.s32.totalorder %s313, %s314
    %p326 = scmp.eq.s32.totalorder %s26, 1
    %p327 = por %p325, %p326
    %p329 = scmp.ne.s32.totalorder %s314, %s328
    %p330 = scmp.eq.s32.totalorder %s26, 0
    %p331 = por %p329, %p330
    %s332 = ssub.s32 %s20, %s27
    %p333 = scmp.eq.s32.totalorder %s332, 0
    %s335 = sadd.s32 %s334, 1
    %s336 = scalar_select %p333, %s334, %s335
    %p339 = pneg %p333
    %p340 = scmp.eq.s32.totalorder %s20, 1
    %p341 = por %p339, %p340
    %p342 = scmp.ne.s32.totalorder %s334, %s337
    %p343 = scmp.eq.s32.totalorder %s20, 0
    %p344 = por %p342, %p343
    %p345 = scmp.ne.s32.totalorder %s334, %s337
    %p346 = scmp.eq.s32.totalorder %s25, 1
    %p347 = por %p345, %p346
    %p348 = scmp.ne.s32.totalorder %s337, %s338
    %p349 = scmp.eq.s32.totalorder %s25, 0
    %p350 = por %p348, %p349
    %p351 = scmp.ne.s32.totalorder %s337, %s338
    %p352 = scmp.eq.s32.totalorder %s26, 1
    %p353 = por %p351, %p352
    %p355 = scmp.ne.s32.totalorder %s338, %s354
    %p356 = scmp.eq.s32.totalorder %s26, 0
    %p357 = por %p355, %p356
    %p358 = scmp.le.s32.totalorder 1, %s20
    %p359 = scmp.lt.s32.totalorder %s20, 3
    %p360 = pnand %p358, %p359
    %p361 = pneg %p360
    // Predicated region
    $region9: #{text_encoder_forward.5} parent=5 // pred_check
      _
    $region10: #{text_encoder_forward.5} parent=5 // pred_check_branch
      %363 = sbr.rel (%p360) target = $region12
    $region11: #{text_encoder_forward.5} parent=5 // pred_region
      %s364 = ssub.s32 %s20, 1
      // Predicated region
      $region13: #{text_encoder_forward.5} parent=11 // pred_check
        %p365 = pneg %p93
      $region14: #{text_encoder_forward.5} parent=11 // pred_check_branch
        %367 = sbr.rel (%p365) target = $region16
      $region15: #{text_encoder_forward.5} parent=11 // pred_region
        _
      $region16: #{text_encoder_forward.5} parent=11 // pred_fallthru
        _
      // Predicated region
      $region17: #{text_encoder_forward.5} parent=11 // pred_check
        %p368 = pneg %p114
      $region18: #{text_encoder_forward.5} parent=11 // pred_check_branch
        %370 = sbr.rel (%p368) target = $region20
      $region19: #{text_encoder_forward.5} parent=11 // pred_region
        _
      $region20: #{text_encoder_forward.5} parent=11 // pred_fallthru
        _
      // Predicated region
      $region21: #{text_encoder_forward.5} parent=11 // pred_check
        %p371 = pneg %p135
      $region22: #{text_encoder_forward.5} parent=11 // pred_check_branch
        %373 = sbr.rel (%p371) target = $region24
      $region23: #{text_encoder_forward.5} parent=11 // pred_region
        _
      $region24: #{text_encoder_forward.5} parent=11 // pred_fallthru
        _
      // Predicated region
      $region25: #{text_encoder_forward.5} parent=11 // pred_check
        %p374 = pneg %p156
      $region26: #{text_encoder_forward.5} parent=11 // pred_check_branch
        %376 = sbr.rel (%p374) target = $region28
      $region27: #{text_encoder_forward.5} parent=11 // pred_region
        _
      $region28: #{text_encoder_forward.5} parent=11 // pred_fallthru
        _
      // Predicated region
      $region29: #{text_encoder_forward.5} parent=11 // pred_check
        %p377 = pneg %p177
      $region30: #{text_encoder_forward.5} parent=11 // pred_check_branch
        %379 = sbr.rel (%p377) target = $region32
      $region31: #{text_encoder_forward.5} parent=11 // pred_region
        _
      $region32: #{text_encoder_forward.5} parent=11 // pred_fallthru
        _
      // Predicated region
      $region33: #{text_encoder_forward.5} parent=11 // pred_check
        %p380 = pneg %p198
      $region34: #{text_encoder_forward.5} parent=11 // pred_check_branch
        %382 = sbr.rel (%p380) target = $region36
      $region35: #{text_encoder_forward.5} parent=11 // pred_region
        _
      $region36: #{text_encoder_forward.5} parent=11 // pred_fallthru
        _
      // Predicated region
      $region37: #{text_encoder_forward.5} parent=11 // pred_check
        %p383 = pneg %p219
      $region38: #{text_encoder_forward.5} parent=11 // pred_check_branch
        %385 = sbr.rel (%p383) target = $region40
      $region39: #{text_encoder_forward.5} parent=11 // pred_region
        _
      $region40: #{text_encoder_forward.5} parent=11 // pred_fallthru
        _
      // Predicated region
      $region41: #{text_encoder_forward.5} parent=11 // pred_check
        %p386 = pneg %p240
      $region42: #{text_encoder_forward.5} parent=11 // pred_check_branch
        %388 = sbr.rel (%p386) target = $region44
      $region43: #{text_encoder_forward.5} parent=11 // pred_region
        _
      $region44: #{text_encoder_forward.5} parent=11 // pred_fallthru
        _
      // Predicated region
      $region45: #{text_encoder_forward.5} parent=11 // pred_check
        %p389 = pneg %p261
      $region46: #{text_encoder_forward.5} parent=11 // pred_check_branch
        %391 = sbr.rel (%p389) target = $region48
      $region47: #{text_encoder_forward.5} parent=11 // pred_region
        _
      $region48: #{text_encoder_forward.5} parent=11 // pred_fallthru
        _
      // Predicated region
      $region49: #{text_encoder_forward.5} parent=11 // pred_check
        %p392 = pneg %p282
      $region50: #{text_encoder_forward.5} parent=11 // pred_check_branch
        %394 = sbr.rel (%p392) target = $region52
      $region51: #{text_encoder_forward.5} parent=11 // pred_region
        _
      $region52: #{text_encoder_forward.5} parent=11 // pred_fallthru
        _
      // Predicated region
      $region53: #{text_encoder_forward.5} parent=11 // pred_check
        %p395 = pneg %p303
      $region54: #{text_encoder_forward.5} parent=11 // pred_check_branch
        %397 = sbr.rel (%p395) target = $region56
      $region55: #{text_encoder_forward.5} parent=11 // pred_region
        _
      $region56: #{text_encoder_forward.5} parent=11 // pred_fallthru
        _
      // Predicated region
      $region57: #{text_encoder_forward.5} parent=11 // pred_check
        %p398 = pneg %p324
      $region58: #{text_encoder_forward.5} parent=11 // pred_check_branch
        %400 = sbr.rel (%p398) target = $region60
      $region59: #{text_encoder_forward.5} parent=11 // pred_region
        _
      $region60: #{text_encoder_forward.5} parent=11 // pred_fallthru
        _
    $region12: #{text_encoder_forward.5} parent=5 // pred_fallthru
      _
    %p401 = scmp.lt.s32.totalorder %s20, 2
    // Predicated region
    $region61: #{text_encoder_forward.5} parent=5 // pred_check
      %p402 = pneg %p401
    $region62: #{text_encoder_forward.5} parent=5 // pred_check_branch
      %404 = sbr.rel (%p402) target = $region64
    $region63: #{text_encoder_forward.5} parent=5 // pred_region
      // Predicated region
      $region65: #{text_encoder_forward.5} parent=63 // pred_check
        %p405 = pneg %p40
      $region66: #{text_encoder_forward.5} parent=63 // pred_check_branch
        %407 = sbr.rel (%p405) target = $region68
      $region67: #{text_encoder_forward.5} parent=63 // pred_region
        %s408 = smul.u32 2, %s20
        %p409 = scmp.lt.s32.totalorder %s408, 3
        %s410 = scalar_select %p409, %s408, 3
        %s411 = smul.addr %s410, 2
        %s412 = smul.addr %s411, 8
        %s413 = scalar_lea.vmem %s0, %s412
        %s414 = smul.u32 2, %s20
      $region68: #{text_encoder_forward.5} parent=63 // pred_fallthru
        _
      // Predicated region
      $region69: #{text_encoder_forward.5} parent=63 // pred_check
        %p415 = pneg %p66
      $region70: #{text_encoder_forward.5} parent=63 // pred_check_branch
        %417 = sbr.rel (%p415) target = $region72
      $region71: #{text_encoder_forward.5} parent=63 // pred_region
        %s418 = smul.u32 2, %s20
        %p419 = scmp.lt.s32.totalorder %s418, 3
        %s420 = scalar_select %p419, %s418, 3
        %s421 = smul.addr %s420, 2
        %s422 = smul.addr %s421, 8
        %s423 = scalar_lea.vmem %s1, %s422
        %s424 = smul.u32 2, %s20
      $region72: #{text_encoder_forward.5} parent=63 // pred_fallthru
        _
    $region64: #{text_encoder_forward.5} parent=5 // pred_fallthru
      _
    %p425 = scmp.le.s32.totalorder 1, %s20
    %p426 = scmp.lt.s32.totalorder %s20, 3
    %p427 = pnand %p425, %p426
    %p428 = pneg %p427
    // Predicated region
    $region73: #{text_encoder_forward.5} parent=5 // pred_check
      _
    $region74: #{text_encoder_forward.5} parent=5 // pred_check_branch
      %430 = sbr.rel (%p427) target = $region76
    $region75: #{text_encoder_forward.5} parent=5 // pred_region
      %s431 = ssub.s32 %s20, 1
      %s432 = smul.u32 2, %s25
      %p433 = scmp.lt.s32.totalorder %s432, 3
      %s434 = scalar_select %p433, %s432, 3
      %s435 = smul.addr %s434, 2
      %s436 = smul.addr %s435, 8
      %s437 = scalar_lea.vmem %s0, %s436
      %p438 = pneg %p46
      %p439 = pneg %p43
      %s440 = smul.u32 2, %s25
      %p441 = scmp.lt.s32.totalorder %s440, 3
      %s442 = scalar_select %p441, %s440, 3
      %s443 = smul.addr %s442, 2
      %s444 = smul.addr %s443, 8
      %s445 = scalar_lea.vmem %s1, %s444
      %p446 = pneg %p72
      %p447 = pneg %p69
      %p448 = pneg %p93
      %p449 = pneg %p90
      %p450 = pneg %p114
      %p451 = pneg %p111
      %p452 = pneg %p135
      %p453 = pneg %p132
      %p454 = pneg %p156
      %p455 = pneg %p153
      %p456 = pneg %p177
      %p457 = pneg %p174
      %p458 = pneg %p198
      %p459 = pneg %p195
      %p460 = pneg %p219
      %p461 = pneg %p216
      %p462 = pneg %p240
      %p463 = pneg %p237
      %p464 = pneg %p261
      %p465 = pneg %p258
      %p466 = pneg %p282
      %p467 = pneg %p279
      %p468 = pneg %p303
      %p469 = pneg %p300
      %p470 = pneg %p324
      %p471 = pneg %p321
      %p472 = pneg %p350
      %p473 = pneg %p347
      %s474 = smul.u32 2, %s25
      %p475 = scmp.lt.s32.totalorder %s474, 3
      %s476 = scalar_select %p475, %s474, 3
      %s477 = smul.addr %s476, 2
      %s478 = smul.addr %s477, 8
      %s479 = scalar_lea.vmem %s14, %s478
      %s480 = smul.u32 2, %s25
      %p481 = scmp.lt.s32.totalorder %s480, 3
      %s482 = scalar_select %p481, %s480, 3
      %s483 = smul.addr %s482, 2
      %s484 = smul.addr %s483, 8
      %s485 = scalar_lea.vmem %s0, %s484
      %s486 = smul.u32 2, %s25
      %s487 = smul.u32 2, %s25
      %p488 = scmp.lt.s32.totalorder %s487, 3
      %s489 = scalar_select %p488, %s487, 3
      %s490 = smul.addr %s489, 2
      %s491 = smul.addr %s490, 8
      %s492 = scalar_lea.vmem %s1, %s491
      %s493 = smul.u32 2, %s25
      %s494 = smul.u32 2, %s25
      %p495 = scmp.lt.s32.totalorder %s494, 3
      %s496 = scalar_select %p495, %s494, 3
      %s497 = smul.addr %s496, 2
      %s498 = smul.addr %s497, 8
      %s499 = scalar_lea.vmem %s14, %s498
      %s500 = smul.u32 2, %s25
      %v502 = vld [vmem:[%s485] sm:$0xff]
      %v503 = vld [vmem:[%s485 + $0x8] sm:$0xff]
      %v504 = vld [vmem:[%s485 + $0x10] sm:$0xff]
      %v505 = vld [vmem:[%s485 + $0x18] sm:$0xff]
      %506 = vadd.xlane.f32.xlu0 %v502
      %v507 = vpop.xlane.xlu0 %506
      %508 = vadd.xlane.f32.xlu0 %v503
      %v509 = vpop.xlane.xlu0 %508
      %510 = vadd.xlane.f32.xlu0 %v504
      %v511 = vpop.xlane.xlu0 %510
      %512 = vadd.xlane.f32.xlu0 %v505
      %v513 = vpop.xlane.xlu0 %512
      %v514 = vrcp.pop 128.0
      %v515 = vmul.f32 %v507, %v514
      %v516 = vmul.f32 %v509, %v514
      %v517 = vmul.f32 %v511, %v514
      %v518 = vmul.f32 %v513, %v514
      %v519 = vsub.f32 %v502, %v515
      %v520 = vsub.f32 %v503, %v516
      %v521 = vsub.f32 %v504, %v517
      %v522 = vsub.f32 %v505, %v518
      %v523 = vmul.f32 %v519, %v519
      %v524 = vmul.f32 %v520, %v520
      %v525 = vmul.f32 %v521, %v521
      %v526 = vmul.f32 %v522, %v522
      %527 = vadd.xlane.f32.xlu0 %v523
      %v528 = vpop.xlane.xlu0 %527
      %529 = vadd.xlane.f32.xlu0 %v524
      %v530 = vpop.xlane.xlu0 %529
      %531 = vadd.xlane.f32.xlu0 %v525
      %v532 = vpop.xlane.xlu0 %531
      %533 = vadd.xlane.f32.xlu0 %v526
      %v534 = vpop.xlane.xlu0 %533
      %v535 = vmul.f32 %v528, %v514
      %v536 = vmul.f32 %v530, %v514
      %v537 = vmul.f32 %v532, %v514
      %v538 = vmul.f32 %v534, %v514
      %v539 = vadd.f32 %v535, 1e-05
      %v540 = vadd.f32 %v536, 1e-05
      %v541 = vadd.f32 %v537, 1e-05
      %v542 = vadd.f32 %v538, 1e-05
      %v543 = vrsqrt.pop %v539
      %v544 = vrsqrt.pop %v540
      %v545 = vrsqrt.pop %v541
      %v546 = vrsqrt.pop %v542
      %v547 = vmul.f32 %v519, %v543
      %v548 = vmul.f32 %v520, %v544
      %v549 = vmul.f32 %v521, %v545
      %v550 = vmul.f32 %v522, %v546
      %v551 = vld [vmem:[%s2] sm:$0x1]
      %v553 = vlaneseq
      %v554 = vshrl.u32 %v553, 7
      %v555 = vsub.s32 0, %v554
      %v556 = vrot.slane %v551, %v555
      %v558 = vmul.f32 %v547, %v556
      %v559 = vmul.f32 %v548, %v556
      %v560 = vmul.f32 %v549, %v556
      %v561 = vmul.f32 %v550, %v556
      %v562 = vld [vmem:[%s3] sm:$0x1]
      %v564 = vlaneseq
      %v565 = vshrl.u32 %v564, 7
      %v566 = vsub.s32 0, %v565
      %v567 = vrot.slane %v562, %v566
      %v569 = vadd.f32 %v558, %v567
      %v570 = vadd.f32 %v559, %v567
      %v571 = vadd.f32 %v560, %v567
      %v572 = vadd.f32 %v561, %v567
      %v573 = vpack.c.bf16 %v570, %v569
      %v574 = vpack.c.bf16 %v572, %v571
      %v575 = vld [vmem:[%s4] sm:$0xff]
      %v576 = vld [vmem:[%s4 + $0x8] sm:$0xf]
      %v577 = vld [vmem:[%s4 + $0xc] sm:$0xff]
      %v578 = vld [vmem:[%s4 + $0x14] sm:$0xf]
      %v579 = vld [vmem:[%s4 + $0x18] sm:$0xff]
      %v580 = vld [vmem:[%s4 + $0x20] sm:$0xf]
      %v581 = vld [vmem:[%s4 + $0x24] sm:$0xff]
      %v582 = vld [vmem:[%s4 + $0x2c] sm:$0xf]
      %v583 = vld [vmem:[%s4 + $0x30] sm:$0xff]
      %v584 = vld [vmem:[%s4 + $0x38] sm:$0xf]
      %v585 = vld [vmem:[%s4 + $0x3c] sm:$0xff]
      %v586 = vld [vmem:[%s4 + $0x44] sm:$0xf]
      %v587 = vld [vmem:[%s4 + $0x48] sm:$0xff]
      %v588 = vld [vmem:[%s4 + $0x50] sm:$0xf]
      %v589 = vld [vmem:[%s4 + $0x54] sm:$0xff]
      %v590 = vld [vmem:[%s4 + $0x5c] sm:$0xf]
      %v591 = vld [vmem:[%s4 + $0x60] sm:$0xff]
      %v592 = vld [vmem:[%s4 + $0x68] sm:$0xf]
      %v593 = vld [vmem:[%s4 + $0x6c] sm:$0xff]
      %v594 = vld [vmem:[%s4 + $0x74] sm:$0xf]
      %v595 = vld [vmem:[%s4 + $0x78] sm:$0xff]
      %v596 = vld [vmem:[%s4 + $0x80] sm:$0xf]
      %v597 = vld [vmem:[%s4 + $0x84] sm:$0xff]
      %v598 = vld [vmem:[%s4 + $0x8c] sm:$0xf]
      %v599 = vld [vmem:[%s4 + $0x90] sm:$0xff]
      %v600 = vld [vmem:[%s4 + $0x98] sm:$0xf]
      %v601 = vld [vmem:[%s4 + $0x9c] sm:$0xff]
      %v602 = vld [vmem:[%s4 + $0xa4] sm:$0xf]
      %v603 = vld [vmem:[%s4 + $0xa8] sm:$0xff]
      %v604 = vld [vmem:[%s4 + $0xb0] sm:$0xf]
      %v605 = vld [vmem:[%s4 + $0xb4] sm:$0xff]
      %v606 = vld [vmem:[%s4 + $0xbc] sm:$0xf]
      %v607 = vld [vmem:[%s5] sm:$0x7]
      %v609 = vlaneseq
      %v610 = vshrl.u32 %v609, 7
      %v611 = vsub.s32 0, %v610
      %v612 = vrot.slane %v607, %v611
      %v613 = vlaneseq
      %v614 = vshrl.u32 %v613, 7
      %v615 = vsub.s32 1, %v614
      %v616 = vrot.slane %v607, %v615
      %v617 = vlaneseq
      %v618 = vshrl.u32 %v617, 7
      %v619 = vsub.s32 2, %v618
      %v620 = vrot.slane %v607, %v619
      %v656 = vunpack.c.l.b16 %v575
      %v657 = vunpack.c.h.b16 %v575
      %v658 = vunpack.c.l.b16 %v576
      %v659 = vunpack.c.l.b16 %v577
      %v660 = vunpack.c.h.b16 %v577
      %v661 = vunpack.c.l.b16 %v578
      %v662 = vunpack.c.l.b16 %v579
      %v663 = vunpack.c.h.b16 %v579
      %v664 = vunpack.c.l.b16 %v580
      %v665 = vunpack.c.l.b16 %v581
      %v666 = vunpack.c.h.b16 %v581
      %v667 = vunpack.c.l.b16 %v582
      %v668 = vunpack.c.l.b16 %v583
      %v669 = vunpack.c.h.b16 %v583
      %v670 = vunpack.c.l.b16 %v584
      %v671 = vunpack.c.l.b16 %v585
      %v672 = vunpack.c.h.b16 %v585
      %v673 = vunpack.c.l.b16 %v586
      %v674 = vunpack.c.l.b16 %v587
      %v675 = vunpack.c.h.b16 %v587
      %v676 = vunpack.c.l.b16 %v588
      %v677 = vunpack.c.l.b16 %v589
      %v678 = vunpack.c.h.b16 %v589
      %v679 = vunpack.c.l.b16 %v590
      %v680 = vunpack.c.l.b16 %v591
      %v681 = vunpack.c.h.b16 %v591
      %v682 = vunpack.c.l.b16 %v592
      %v683 = vunpack.c.l.b16 %v593
      %v684 = vunpack.c.h.b16 %v593
      %v685 = vunpack.c.l.b16 %v594
      %v686 = vunpack.c.l.b16 %v595
      %v687 = vunpack.c.h.b16 %v595
      %v688 = vunpack.c.l.b16 %v596
      %v689 = vunpack.c.l.b16 %v597
      %v690 = vunpack.c.h.b16 %v597
      %v691 = vunpack.c.l.b16 %v598
      %v692 = vunpack.c.l.b16 %v599
      %v693 = vunpack.c.h.b16 %v599
      %v694 = vunpack.c.l.b16 %v600
      %v695 = vunpack.c.l.b16 %v601
      %v696 = vunpack.c.h.b16 %v601
      %v697 = vunpack.c.l.b16 %v602
      %v698 = vunpack.c.l.b16 %v603
      %v699 = vunpack.c.h.b16 %v603
      %v700 = vunpack.c.l.b16 %v604
      %v701 = vunpack.c.l.b16 %v605
      %v702 = vunpack.c.h.b16 %v605
      %v703 = vunpack.c.l.b16 %v606
      %v704 = vpack.c.b16 %v659, %v656
      %v705 = vpack.c.b16 %v660, %v657
      %v706 = vpack.c.b16 %v661, %v658
      %v707 = vpack.c.b16 %v665, %v662
      %v708 = vpack.c.b16 %v666, %v663
      %v709 = vpack.c.b16 %v667, %v664
      %v710 = vpack.c.b16 %v671, %v668
      %v711 = vpack.c.b16 %v672, %v669
      %v712 = vpack.c.b16 %v673, %v670
      %v713 = vpack.c.b16 %v677, %v674
      %v714 = vpack.c.b16 %v678, %v675
      %v715 = vpack.c.b16 %v679, %v676
      %v716 = vpack.c.b16 %v683, %v680
      %v717 = vpack.c.b16 %v684, %v681
      %v718 = vpack.c.b16 %v685, %v682
      %v719 = vpack.c.b16 %v689, %v686
      %v720 = vpack.c.b16 %v690, %v687
      %v721 = vpack.c.b16 %v691, %v688
      %v722 = vpack.c.b16 %v695, %v692
      %v723 = vpack.c.b16 %v696, %v693
      %v724 = vpack.c.b16 %v697, %v694
      %v725 = vpack.c.b16 %v701, %v698
      %v726 = vpack.c.b16 %v702, %v699
      %v727 = vpack.c.b16 %v703, %v700
      %752 = vmatprep.subr.bf16.mxu0 %v726
      %753 = vmatpush1.bf16.msra.mxu0 %v725
      %754 = vmatprep.subr.bf16.mxu0 %v723
      %755 = vmatpush1.bf16.msra.mxu0 %v722
      %756 = vmatprep.subr.bf16.mxu0 %v720
      %757 = vmatpush1.bf16.msra.mxu0 %v719
      %758 = vmatprep.subr.bf16.mxu0 %v717
      %759 = vmatpush1.bf16.msra.mxu0 %v716
      %760 = vmatprep.subr.bf16.mxu0 %v714
      %761 = vmatpush1.bf16.msra.mxu0 %v713
      %762 = vmatprep.subr.bf16.mxu0 %v711
      %763 = vmatpush1.bf16.msra.mxu0 %v710
      %764 = vmatprep.subr.bf16.mxu0 %v708
      %765 = vmatpush1.bf16.msra.mxu0 %v707
      %766 = vmatprep.subr.bf16.mxu0 %v705
      %767 = vmatpush1.bf16.msra.mxu0 %v704
      %768 = vmatprep.subr.bf16.mxu0 0
      %769 = vmatpush2.bf16.msra.mxu0 0
      %770 = vmatprep.subr.bf16.mxu0 0
      %771 = vmatpush2.bf16.msra.mxu0 0
      %772 = vmatprep.subr.bf16.mxu0 0
      %773 = vmatpush2.bf16.msra.mxu0 0
      %774 = vmatprep.subr.bf16.mxu0 0
      %775 = vmatpush2.bf16.msra.mxu0 0
      %776 = vmatprep.subr.bf16.mxu0 0
      %777 = vmatpush2.bf16.msra.mxu0 0
      %778 = vmatprep.subr.bf16.mxu0 0
      %779 = vmatpush2.bf16.msra.mxu0 0
      %780 = vmatprep.subr.bf16.mxu0 0
      %781 = vmatpush2.bf16.msra.mxu0 0
      %782 = vmatprep.subr.bf16.mxu0 0
      %783 = vmatpush2.bf16.msra.mxu0 0
      %784 = vmatprep.mubr.bf16.mxu0 0
      %785 = vmatmul.mubr.bf16.gmra.mxu0 %v573
      %v786 = vpop.f32.mrf.mxu0
      %v787 = vadd.f32 %v612, %v786
      %v788 = vpop.f32.mrf.mxu0
      %v789 = vadd.f32 %v616, %v788
      %v790 = vpop.f32.mrf.mxu0
      %v791 = vadd.f32 %v612, %v790
      %v792 = vpop.f32.mrf.mxu0
      %v793 = vadd.f32 %v616, %v792
      %794 = vmatprep.mubr.bf16.mxu0 0
      %795 = vmatmul.mubr.bf16.gmra.mxu0 %v574
      %v796 = vpop.f32.mrf.mxu0
      %v797 = vadd.f32 %v612, %v796
      %v798 = vpop.f32.mrf.mxu0
      %v799 = vadd.f32 %v616, %v798
      %v800 = vpop.f32.mrf.mxu0
      %v801 = vadd.f32 %v612, %v800
      %v802 = vpop.f32.mrf.mxu0
      %v803 = vadd.f32 %v616, %v802
      %804 = vdwg.mxu0
      %805 = vmatprep.subr.bf16.mxu0 0
      %806 = vmatpush1.bf16.msra.mxu0 %v727
      %807 = vmatprep.subr.bf16.mxu0 0
      %808 = vmatpush1.bf16.msra.mxu0 %v724
      %809 = vmatprep.subr.bf16.mxu0 0
      %810 = vmatpush1.bf16.msra.mxu0 %v721
      %811 = vmatprep.subr.bf16.mxu0 0
      %812 = vmatpush1.bf16.msra.mxu0 %v718
      %813 = vmatprep.subr.bf16.mxu0 0
      %814 = vmatpush1.bf16.msra.mxu0 %v715
      %815 = vmatprep.subr.bf16.mxu0 0
      %816 = vmatpush1.bf16.msra.mxu0 %v712
      %817 = vmatprep.subr.bf16.mxu0 0
      %818 = vmatpush1.bf16.msra.mxu0 %v709
      %819 = vmatprep.subr.bf16.mxu0 0
      %820 = vmatpush1.bf16.msra.mxu0 %v706
      %821 = vmatprep.subr.bf16.mxu0 0
      %822 = vmatpush2.bf16.msra.mxu0 0
      %823 = vmatprep.subr.bf16.mxu0 0
      %824 = vmatpush2.bf16.msra.mxu0 0
      %825 = vmatprep.subr.bf16.mxu0 0
      %826 = vmatpush2.bf16.msra.mxu0 0
      %827 = vmatprep.subr.bf16.mxu0 0
      %828 = vmatpush2.bf16.msra.mxu0 0
      %829 = vmatprep.subr.bf16.mxu0 0
      %830 = vmatpush2.bf16.msra.mxu0 0
      %831 = vmatprep.subr.bf16.mxu0 0
      %832 = vmatpush2.bf16.msra.mxu0 0
      %833 = vmatprep.subr.bf16.mxu0 0
      %834 = vmatpush2.bf16.msra.mxu0 0
      %835 = vmatprep.subr.bf16.mxu0 0
      %836 = vmatpush2.bf16.msra.mxu0 0
      %837 = vmatprep.mubr.bf16.mxu0 0
      %838 = vmatmul.mubr.bf16.gmra.mxu0 %v573
      %v839 = vpop.f32.mrf.mxu0
      %v840 = vadd.f32 %v620, %v839
      %v841 = vpop.f32.mrf.mxu0
      %v842 = vpop.f32.mrf.mxu0
      %v843 = vadd.f32 %v620, %v842
      %v844 = vpop.f32.mrf.mxu0
      %845 = vmatprep.mubr.bf16.mxu0 0
      %846 = vmatmul.mubr.bf16.gmra.mxu0 %v574
      %v847 = vpop.f32.mrf.mxu0
      %v848 = vadd.f32 %v620, %v847
      %v849 = vpop.f32.mrf.mxu0
      %v850 = vpop.f32.mrf.mxu0
      %v851 = vadd.f32 %v620, %v850
      %v852 = vpop.f32.mrf.mxu0
      %853 = vdwg.mxu0
      %v854 = vpack.c.bf16 %v791, %v787
      %v855 = vpack.c.bf16 %v793, %v789
      %v856 = vpack.c.bf16 %v843, %v840
      %v857 = vpack.c.bf16 %v801, %v797
      %v858 = vpack.c.bf16 %v803, %v799
      %v859 = vpack.c.bf16 %v851, %v848
      %v866 = vunpack.c.l.b16 %v854
      %v867 = vunpack.c.l.b16 %v855
      %v868 = vunpack.c.l.b16 %v856
      %v869 = vunpack.c.h.b16 %v854
      %v870 = vunpack.c.h.b16 %v855
      %v871 = vunpack.c.h.b16 %v856
      %v872 = vunpack.c.l.b16 %v857
      %v873 = vunpack.c.l.b16 %v858
      %v874 = vunpack.c.l.b16 %v859
      %v875 = vunpack.c.h.b16 %v857
      %v876 = vunpack.c.h.b16 %v858
      %v877 = vunpack.c.h.b16 %v859
      %v878 = vpack.c.b16 %v867, %v866
      %v879 = vpack.c.b16 %v868, %v868
      %v880 = vpack.c.b16 %v870, %v869
      %v881 = vpack.c.b16 %v871, %v871
      %v882 = vpack.c.b16 %v873, %v872
      %v883 = vpack.c.b16 %v874, %v874
      %v884 = vpack.c.b16 %v876, %v875
      %v885 = vpack.c.b16 %v877, %v877
      %894 = vst [vmem:[#allocation2] sm:$0xff] %v878
      %895 = vst [vmem:[#allocation2 + $0x8] sm:$0xf] %v879
      %896 = vst [vmem:[#allocation2 + $0xc] sm:$0xff] %v880
      %897 = vst [vmem:[#allocation2 + $0x14] sm:$0xf] %v881
      %898 = vst [vmem:[#allocation2 + $0x18] sm:$0xff] %v882
      %899 = vst [vmem:[#allocation2 + $0x20] sm:$0xf] %v883
      %900 = vst [vmem:[#allocation2 + $0x24] sm:$0xff] %v884
      %901 = vst [vmem:[#allocation2 + $0x2c] sm:$0xf] %v885
      loop: start=0, step=1, limit=2
      $region77: #{text_encoder_forward.5} parent=75 // loop_pre_header
        _
      $region78: #{text_encoder_forward.5} parent=75 // loop_header
        %s903 = sphi 0, %s907
        %p904 = scmp.ge.s32.totalorder %s903, 2
      $region79: #{text_encoder_forward.5} parent=75 // loop_header_branch
        %906 = sbr.rel (%p904) target = $region83
      $region80: #{text_encoder_forward.5} parent=75 // loop_body
        %s908 = smul.u32 %s903, 16
        %s909 = scalar_lea.vmem %s492, %s908
        %v910 = vld [vmem:[%s909] sm:$0xff]
        %v911 = vld [vmem:[%s909 + $0x8] sm:$0xff]
        %s912 = sshra.s32 %s908, 3
        %s913 = sand.u32 %s908, 7
        %s914 = smul.u32 %s912, 3
        %s915 = smul.addr %s914, 4
        %s916 = scalar_lea.vmem [#allocation2], %s915
        %v917 = vld [vmem:[%s916] sm:$0xf]
        %v918 = vld [vmem:[%s916 + $0xc] sm:$0xf]
        %v919 = vld [vmem:[%s916 + $0x4] sm:$0xf]
        %v920 = vld [vmem:[%s916 + $0x10] sm:$0xf]
        %v921 = vld [vmem:[%s916 + $0x8] sm:$0xf]
        %v922 = vld [vmem:[%s916 + $0x14] sm:$0xf]
        %v925 = vunpack.c.l.b16 %v917
        %v926 = vunpack.c.l.b16 %v918
        %v927 = vpack.c.b16 %v926, %v925
        %v930 = vunpack.c.l.b16 %v919
        %v931 = vunpack.c.l.b16 %v920
        %v932 = vpack.c.b16 %v931, %v930
        %vm933 = vcmask 261120
        %v935 = vsel %vm933, %v927, 0
        %v938 = vsel %vm933, %v932, 0
        %940 = vmatprep.subr.bf16.mxu0 0
        %941 = vmatpush1.bf16.xpose.msra.mxu0 0
        %942 = vmatprep.subr.bf16.mxu0 0
        %943 = vmatpush1.bf16.xpose.msra.mxu0 0
        %944 = vmatprep.subr.bf16.mxu0 0
        %945 = vmatpush1.bf16.xpose.msra.mxu0 0
        %946 = vmatprep.subr.bf16.mxu0 0
        %947 = vmatpush1.bf16.xpose.msra.mxu0 0
        %948 = vmatprep.subr.bf16.mxu0 0
        %949 = vmatpush1.bf16.xpose.msra.mxu0 0
        %950 = vmatprep.subr.bf16.mxu0 0
        %951 = vmatpush1.bf16.xpose.msra.mxu0 0
        %952 = vmatprep.subr.bf16.mxu0 0
        %953 = vmatpush1.bf16.xpose.msra.mxu0 0
        %954 = vmatprep.subr.bf16.mxu0 0
        %955 = vmatpush1.bf16.xpose.msra.mxu0 %v938
        %956 = vmatprep.subr.bf16.mxu0 0
        %957 = vmatpush2.bf16.xpose.msra.mxu0 0
        %958 = vmatprep.subr.bf16.mxu0 0
        %959 = vmatpush2.bf16.xpose.msra.mxu0 0
        %960 = vmatprep.subr.bf16.mxu0 0
        %961 = vmatpush2.bf16.xpose.msra.mxu0 0
        %962 = vmatprep.subr.bf16.mxu0 0
        %963 = vmatpush2.bf16.xpose.msra.mxu0 0
        %964 = vmatprep.subr.bf16.mxu0 0
        %965 = vmatpush2.bf16.xpose.msra.mxu0 0
        %966 = vmatprep.subr.bf16.mxu0 0
        %967 = vmatpush2.bf16.xpose.msra.mxu0 0
        %968 = vmatprep.subr.bf16.mxu0 0
        %969 = vmatpush2.bf16.xpose.msra.mxu0 0
        %970 = vmatprep.subr.bf16.mxu0 0
        %971 = vmatpush2.bf16.xpose.msra.mxu0 0
        %972 = vmatprep.mubr.bf16.mxu0 0
        %973 = vmatmul.mubr.bf16.gmra.mxu0 %v935
        %v974 = vpop.f32.mrf.mxu0
        %v975 = vadd.f32 0.0, %v974
        %v976 = vpop.f32.mrf.mxu0
        %v977 = vpop.f32.mrf.mxu0
        %v978 = vadd.f32 0.0, %v977
        %v979 = vpop.f32.mrf.mxu0
        %980 = vdwg.mxu0
        %v981 = vmul.f32 %v975, 0.17677669
        %v982 = vmul.f32 %v978, 0.17677669
        %v983 = vadd.f32 %v981, %v910
        %v984 = vadd.f32 %v982, %v911
        %vm985 = vcmask 130048
        %v986 = vsel %vm985, %v983, -inf
        %987 = vmax.xlane.f32.xlu0 %v986
        %v988 = vpop.xlane.xlu0 %987
        %v989 = vsel %vm985, %v984, -inf
        %990 = vmax.xlane.f32.xlu0 %v989
        %v991 = vpop.xlane.xlu0 %990
        %v992 = vsub.f32 %v983, %v988
        %v993 = vsub.f32 %v984, %v991
        %v994 = vmul.f32 %v992, 1.442695
        %v995 = vpow.pop %v994
        %v996 = vmul.f32 %v993, 1.442695
        %v997 = vpow.pop %v996
        %v998 = vsel %vm985, %v995, 0.0
        %999 = vadd.xlane.f32.xlu0 %v998
        %v1000 = vpop.xlane.xlu0 %999
        %v1001 = vsel %vm985, %v997, 0.0
        %1002 = vadd.xlane.f32.xlu0 %v1001
        %v1003 = vpop.xlane.xlu0 %1002
        %v1004 = vrcp.pop %v1000
        %v1005 = vrcp.pop %v1003
        %v1006 = vmul.f32 %v995, %v1004
        %v1007 = vmul.f32 %v997, %v1005
        %v1008 = vpack.c.bf16 %v1007, %v1006
        %v1011 = vunpack.c.l.b16 %v921
        %v1012 = vunpack.c.l.b16 %v922
        %v1013 = vpack.c.b16 %v1012, %v1011
        %v1016 = vsel %vm985, %v1008, 0
        %1018 = vmatprep.subr.bf16.mxu0 0
        %1019 = vmatpush1.bf16.msra.mxu0 0
        %1020 = vmatprep.subr.bf16.mxu0 0
        %1021 = vmatpush1.bf16.msra.mxu0 0
        %1022 = vmatprep.subr.bf16.mxu0 0
        %1023 = vmatpush1.bf16.msra.mxu0 0
        %1024 = vmatprep.subr.bf16.mxu0 0
        %1025 = vmatpush1.bf16.msra.mxu0 0
        %1026 = vmatprep.subr.bf16.mxu0 0
        %1027 = vmatpush1.bf16.msra.mxu0 0
        %1028 = vmatprep.subr.bf16.mxu0 0
        %1029 = vmatpush1.bf16.msra.mxu0 0
        %1030 = vmatprep.subr.bf16.mxu0 0
        %1031 = vmatpush1.bf16.msra.mxu0 0
        %1032 = vmatprep.subr.bf16.mxu0 0
        %1033 = vmatpush1.bf16.msra.mxu0 %v1013
        %1034 = vmatprep.subr.bf16.mxu0 0
        %1035 = vmatpush2.bf16.msra.mxu0 0
        %1036 = vmatprep.subr.bf16.mxu0 0
        %1037 = vmatpush2.bf16.msra.mxu0 0
        %1038 = vmatprep.subr.bf16.mxu0 0
        %1039 = vmatpush2.bf16.msra.mxu0 0
        %1040 = vmatprep.subr.bf16.mxu0 0
        %1041 = vmatpush2.bf16.msra.mxu0 0
        %1042 = vmatprep.subr.bf16.mxu0 0
        %1043 = vmatpush2.bf16.msra.mxu0 0
        %1044 = vmatprep.subr.bf16.mxu0 0
        %1045 = vmatpush2.bf16.msra.mxu0 0
        %1046 = vmatprep.subr.bf16.mxu0 0
        %1047 = vmatpush2.bf16.msra.mxu0 0
        %1048 = vmatprep.subr.bf16.mxu0 0
        %1049 = vmatpush2.bf16.msra.mxu0 0
        %1050 = vmatprep.mubr.bf16.mxu0 0
        %1051 = vmatmul.mubr.bf16.gmra.mxu0 %v1016
        %v1052 = vpop.f32.mrf.mxu0
        %v1053 = vadd.f32 0.0, %v1052
        %v1054 = vpop.f32.mrf.mxu0
        %v1055 = vpop.f32.mrf.mxu0
        %v1056 = vadd.f32 0.0, %v1055
        %v1057 = vpop.f32.mrf.mxu0
        %1058 = vdwg.mxu0
        %v1059 = vpack.c.bf16 %v1056, %v1053
        %v1061 = vunpack.c.l.b16 %v1059
        %v1062 = vunpack.c.h.b16 %v1059
        %v1063 = vpack.c.b16 %v1061, %v1061
        %v1064 = vpack.c.b16 %v1062, %v1062
        %s1067 = smul.addr %s912, 4
        %s1068 = scalar_lea.vmem [#allocation3], %s1067
        %vm1069 = vcmask 257024
        %1070 = vst.msk [vmem:[%s1068] sm:$0xf] %vm1069, %v1063
        %1071 = vst.msk [vmem:[%s1068 + $0x4] sm:$0xf] %vm1069, %v1064
        %v1072 = vld [vmem:[%s916] sm:$0xf]
        %v1073 = vld [vmem:[%s916 + $0xc] sm:$0xf]
        %v1074 = vld [vmem:[%s916 + $0x4] sm:$0xf]
        %v1075 = vld [vmem:[%s916 + $0x10] sm:$0xf]
        %v1076 = vld [vmem:[%s916 + $0x8] sm:$0xf]
        %v1077 = vld [vmem:[%s916 + $0x14] sm:$0xf]
        %v1080 = vunpack.c.l.b16 %v1072
        %v1081 = vunpack.c.l.b16 %v1073
        %v1082 = vpack.c.b16 %v1081, %v1080
        %1083 = vrot.lane.b32.xlu0 %v1082, 96
        %v1084 = vpop.permute.xlu0 %1083
        %v1087 = vunpack.c.l.b16 %v1074
        %v1088 = vunpack.c.l.b16 %v1075
        %v1089 = vpack.c.b16 %v1088, %v1087
        %1090 = vrot.lane.b32.xlu0 %v1089, 96
        %v1091 = vpop.permute.xlu0 %1090
        %v1093 = vsel %vm933, %v1084, 0
        %v1096 = vsel %vm933, %v1091, 0
        %1098 = vmatprep.subr.bf16.mxu0 0
        %1099 = vmatpush1.bf16.xpose.msra.mxu0 0
        %1100 = vmatprep.subr.bf16.mxu0 0
        %1101 = vmatpush1.bf16.xpose.msra.mxu0 0
        %1102 = vmatprep.subr.bf16.mxu0 0
        %1103 = vmatpush1.bf16.xpose.msra.mxu0 0
        %1104 = vmatprep.subr.bf16.mxu0 0
        %1105 = vmatpush1.bf16.xpose.msra.mxu0 0
        %1106 = vmatprep.subr.bf16.mxu0 0
        %1107 = vmatpush1.bf16.xpose.msra.mxu0 0
        %1108 = vmatprep.subr.bf16.mxu0 0
        %1109 = vmatpush1.bf16.xpose.msra.mxu0 0
        %1110 = vmatprep.subr.bf16.mxu0 0
        %1111 = vmatpush1.bf16.xpose.msra.mxu0 0
        %1112 = vmatprep.subr.bf16.mxu0 0
        %1113 = vmatpush1.bf16.xpose.msra.mxu0 %v1096
        %1114 = vmatprep.subr.bf16.mxu0 0
        %1115 = vmatpush2.bf16.xpose.msra.mxu0 0
        %1116 = vmatprep.subr.bf16.mxu0 0
        %1117 = vmatpush2.bf16.xpose.msra.mxu0 0
        %1118 = vmatprep.subr.bf16.mxu0 0
        %1119 = vmatpush2.bf16.xpose.msra.mxu0 0
        %1120 = vmatprep.subr.bf16.mxu0 0
        %1121 = vmatpush2.bf16.xpose.msra.mxu0 0
        %1122 = vmatprep.subr.bf16.mxu0 0
        %1123 = vmatpush2.bf16.xpose.msra.mxu0 0
        %1124 = vmatprep.subr.bf16.mxu0 0
        %1125 = vmatpush2.bf16.xpose.msra.mxu0 0
        %1126 = vmatprep.subr.bf16.mxu0 0
        %1127 = vmatpush2.bf16.xpose.msra.mxu0 0
        %1128 = vmatprep.subr.bf16.mxu0 0
        %1129 = vmatpush2.bf16.xpose.msra.mxu0 0
        %1130 = vmatprep.mubr.bf16.mxu0 0
        %1131 = vmatmul.mubr.bf16.gmra.mxu0 %v1093
        %v1132 = vpop.f32.mrf.mxu0
        %v1133 = vadd.f32 0.0, %v1132
        %v1134 = vpop.f32.mrf.mxu0
        %v1135 = vpop.f32.mrf.mxu0
        %v1136 = vadd.f32 0.0, %v1135
        %v1137 = vpop.f32.mrf.mxu0
        %1138 = vdwg.mxu0
        %v1139 = vmul.f32 %v1133, 0.17677669
        %v1140 = vmul.f32 %v1136, 0.17677669
        %v1141 = vadd.f32 %v1139, %v910
        %v1142 = vadd.f32 %v1140, %v911
        %v1143 = vsel %vm985, %v1141, -inf
        %1144 = vmax.xlane.f32.xlu0 %v1143
        %v1145 = vpop.xlane.xlu0 %1144
        %v1146 = vsel %vm985, %v1142, -inf
        %1147 = vmax.xlane.f32.xlu0 %v1146
        %v1148 = vpop.xlane.xlu0 %1147
        %v1149 = vsub.f32 %v1141, %v1145
        %v1150 = vsub.f32 %v1142, %v1148
        %v1151 = vmul.f32 %v1149, 1.442695
        %v1152 = vpow.pop %v1151
        %v1153 = vmul.f32 %v1150, 1.442695
        %v1154 = vpow.pop %v1153
        %v1155 = vsel %vm985, %v1152, 0.0
        %1156 = vadd.xlane.f32.xlu0 %v1155
        %v1157 = vpop.xlane.xlu0 %1156
        %v1158 = vsel %vm985, %v1154, 0.0
        %1159 = vadd.xlane.f32.xlu0 %v1158
        %v1160 = vpop.xlane.xlu0 %1159
        %v1161 = vrcp.pop %v1157
        %v1162 = vrcp.pop %v1160
        %v1163 = vmul.f32 %v1152, %v1161
        %v1164 = vmul.f32 %v1154, %v1162
        %v1165 = vpack.c.bf16 %v1164, %v1163
        %v1168 = vunpack.c.l.b16 %v1076
        %v1169 = vunpack.c.l.b16 %v1077
        %v1170 = vpack.c.b16 %v1169, %v1168
        %1171 = vrot.lane.b32.xlu0 %v1170, 96
        %v1172 = vpop.permute.xlu0 %1171
        %v1175 = vsel %vm985, %v1165, 0
        %1177 = vmatprep.subr.bf16.mxu0 0
        %1178 = vmatpush1.bf16.msra.mxu0 0
        %1179 = vmatprep.subr.bf16.mxu0 0
        %1180 = vmatpush1.bf16.msra.mxu0 0
        %1181 = vmatprep.subr.bf16.mxu0 0
        %1182 = vmatpush1.bf16.msra.mxu0 0
        %1183 = vmatprep.subr.bf16.mxu0 0
        %1184 = vmatpush1.bf16.msra.mxu0 0
        %1185 = vmatprep.subr.bf16.mxu0 0
        %1186 = vmatpush1.bf16.msra.mxu0 0
        %1187 = vmatprep.subr.bf16.mxu0 0
        %1188 = vmatpush1.bf16.msra.mxu0 0
        %1189 = vmatprep.subr.bf16.mxu0 0
        %1190 = vmatpush1.bf16.msra.mxu0 0
        %1191 = vmatprep.subr.bf16.mxu0 0
        %1192 = vmatpush1.bf16.msra.mxu0 %v1172
        %1193 = vmatprep.subr.bf16.mxu0 0
        %1194 = vmatpush2.bf16.msra.mxu0 0
        %1195 = vmatprep.subr.bf16.mxu0 0
        %1196 = vmatpush2.bf16.msra.mxu0 0
        %1197 = vmatprep.subr.bf16.mxu0 0
        %1198 = vmatpush2.bf16.msra.mxu0 0
        %1199 = vmatprep.subr.bf16.mxu0 0
        %1200 = vmatpush2.bf16.msra.mxu0 0
        %1201 = vmatprep.subr.bf16.mxu0 0
        %1202 = vmatpush2.bf16.msra.mxu0 0
        %1203 = vmatprep.subr.bf16.mxu0 0
        %1204 = vmatpush2.bf16.msra.mxu0 0
        %1205 = vmatprep.subr.bf16.mxu0 0
        %1206 = vmatpush2.bf16.msra.mxu0 0
        %1207 = vmatprep.subr.bf16.mxu0 0
        %1208 = vmatpush2.bf16.msra.mxu0 0
        %1209 = vmatprep.mubr.bf16.mxu0 0
        %1210 = vmatmul.mubr.bf16.gmra.mxu0 %v1175
        %v1211 = vpop.f32.mrf.mxu0
        %v1212 = vadd.f32 0.0, %v1211
        %v1213 = vpop.f32.mrf.mxu0
        %v1214 = vpop.f32.mrf.mxu0
        %v1215 = vadd.f32 0.0, %v1214
        %v1216 = vpop.f32.mrf.mxu0
        %1217 = vdwg.mxu0
        %v1218 = vpack.c.bf16 %v1215, %v1212
        %v1220 = vunpack.c.l.b16 %v1218
        %v1221 = vunpack.c.h.b16 %v1218
        %v1222 = vpack.c.b16 %v1220, %v1220
        %v1223 = vpack.c.b16 %v1221, %v1221
        %1224 = vrot.lane.b32.xlu0 %v1222, 32
        %v1225 = vpop.permute.xlu0 %1224
        %1226 = vrot.lane.b32.xlu0 %v1223, 32
        %v1227 = vpop.permute.xlu0 %1226
        %vm1230 = vcmask 519424
        %1231 = vst.msk [vmem:[%s1068] sm:$0xf] %vm1230, %v1225
        %1232 = vst.msk [vmem:[%s1068 + $0x4] sm:$0xf] %vm1230, %v1227
        %v1233 = vld [vmem:[%s916] sm:$0xf]
        %v1234 = vld [vmem:[%s916 + $0xc] sm:$0xf]
        %v1235 = vld [vmem:[%s916 + $0x4] sm:$0xf]
        %v1236 = vld [vmem:[%s916 + $0x10] sm:$0xf]
        %v1237 = vld [vmem:[%s916 + $0x8] sm:$0xf]
        %v1238 = vld [vmem:[%s916 + $0x14] sm:$0xf]
        %v1241 = vunpack.c.l.b16 %v1233
        %v1242 = vunpack.c.l.b16 %v1234
        %v1243 = vpack.c.b16 %v1242, %v1241
        %1244 = vrot.lane.b32.xlu0 %v1243, 64
        %v1245 = vpop.permute.xlu0 %1244
        %v1248 = vunpack.c.l.b16 %v1235
        %v1249 = vunpack.c.l.b16 %v1236
        %v1250 = vpack.c.b16 %v1249, %v1248
        %1251 = vrot.lane.b32.xlu0 %v1250, 64
        %v1252 = vpop.permute.xlu0 %1251
        %v1254 = vsel %vm933, %v1245, 0
        %v1257 = vsel %vm933, %v1252, 0
        %1259 = vmatprep.subr.bf16.mxu0 0
        %1260 = vmatpush1.bf16.xpose.msra.mxu0 0
        %1261 = vmatprep.subr.bf16.mxu0 0
        %1262 = vmatpush1.bf16.xpose.msra.mxu0 0
        %1263 = vmatprep.subr.bf16.mxu0 0
        %1264 = vmatpush1.bf16.xpose.msra.mxu0 0
        %1265 = vmatprep.subr.bf16.mxu0 0
        %1266 = vmatpush1.bf16.xpose.msra.mxu0 0
        %1267 = vmatprep.subr.bf16.mxu0 0
        %1268 = vmatpush1.bf16.xpose.msra.mxu0 0
        %1269 = vmatprep.subr.bf16.mxu0 0
        %1270 = vmatpush1.bf16.xpose.msra.mxu0 0
        %1271 = vmatprep.subr.bf16.mxu0 0
        %1272 = vmatpush1.bf16.xpose.msra.mxu0 0
        %1273 = vmatprep.subr.bf16.mxu0 0
        %1274 = vmatpush1.bf16.xpose.msra.mxu0 %v1257
        %1275 = vmatprep.subr.bf16.mxu0 0
        %1276 = vmatpush2.bf16.xpose.msra.mxu0 0
        %1277 = vmatprep.subr.bf16.mxu0 0
        %1278 = vmatpush2.bf16.xpose.msra.mxu0 0
        %1279 = vmatprep.subr.bf16.mxu0 0
        %1280 = vmatpush2.bf16.xpose.msra.mxu0 0
        %1281 = vmatprep.subr.bf16.mxu0 0
        %1282 = vmatpush2.bf16.xpose.msra.mxu0 0
        %1283 = vmatprep.subr.bf16.mxu0 0
        %1284 = vmatpush2.bf16.xpose.msra.mxu0 0
        %1285 = vmatprep.subr.bf16.mxu0 0
        %1286 = vmatpush2.bf16.xpose.msra.mxu0 0
        %1287 = vmatprep.subr.bf16.mxu0 0
        %1288 = vmatpush2.bf16.xpose.msra.mxu0 0
        %1289 = vmatprep.subr.bf16.mxu0 0
        %1290 = vmatpush2.bf16.xpose.msra.mxu0 0
        %1291 = vmatprep.mubr.bf16.mxu0 0
        %1292 = vmatmul.mubr.bf16.gmra.mxu0 %v1254
        %v1293 = vpop.f32.mrf.mxu0
        %v1294 = vadd.f32 0.0, %v1293
        %v1295 = vpop.f32.mrf.mxu0
        %v1296 = vpop.f32.mrf.mxu0
        %v1297 = vadd.f32 0.0, %v1296
        %v1298 = vpop.f32.mrf.mxu0
        %1299 = vdwg.mxu0
        %v1300 = vmul.f32 %v1294, 0.17677669
        %v1301 = vmul.f32 %v1297, 0.17677669
        %v1302 = vadd.f32 %v1300, %v910
        %v1303 = vadd.f32 %v1301, %v911
        %v1304 = vsel %vm985, %v1302, -inf
        %1305 = vmax.xlane.f32.xlu0 %v1304
        %v1306 = vpop.xlane.xlu0 %1305
        %v1307 = vsel %vm985, %v1303, -inf
        %1308 = vmax.xlane.f32.xlu0 %v1307
        %v1309 = vpop.xlane.xlu0 %1308
        %v1310 = vsub.f32 %v1302, %v1306
        %v1311 = vsub.f32 %v1303, %v1309
        %v1312 = vmul.f32 %v1310, 1.442695
        %v1313 = vpow.pop %v1312
        %v1314 = vmul.f32 %v1311, 1.442695
        %v1315 = vpow.pop %v1314
        %v1316 = vsel %vm985, %v1313, 0.0
        %1317 = vadd.xlane.f32.xlu0 %v1316
        %v1318 = vpop.xlane.xlu0 %1317
        %v1319 = vsel %vm985, %v1315, 0.0
        %1320 = vadd.xlane.f32.xlu0 %v1319
        %v1321 = vpop.xlane.xlu0 %1320
        %v1322 = vrcp.pop %v1318
        %v1323 = vrcp.pop %v1321
        %v1324 = vmul.f32 %v1313, %v1322
        %v1325 = vmul.f32 %v1315, %v1323
        %v1326 = vpack.c.bf16 %v1325, %v1324
        %v1329 = vunpack.c.l.b16 %v1237
        %v1330 = vunpack.c.l.b16 %v1238
        %v1331 = vpack.c.b16 %v1330, %v1329
        %1332 = vrot.lane.b32.xlu0 %v1331, 64
        %v1333 = vpop.permute.xlu0 %1332
        %v1336 = vsel %vm985, %v1326, 0
        %1338 = vmatprep.subr.bf16.mxu0 0
        %1339 = vmatpush1.bf16.msra.mxu0 0
        %1340 = vmatprep.subr.bf16.mxu0 0
        %1341 = vmatpush1.bf16.msra.mxu0 0
        %1342 = vmatprep.subr.bf16.mxu0 0
        %1343 = vmatpush1.bf16.msra.mxu0 0
        %1344 = vmatprep.subr.bf16.mxu0 0
        %1345 = vmatpush1.bf16.msra.mxu0 0
        %1346 = vmatprep.subr.bf16.mxu0 0
        %1347 = vmatpush1.bf16.msra.mxu0 0
        %1348 = vmatprep.subr.bf16.mxu0 0
        %1349 = vmatpush1.bf16.msra.mxu0 0
        %1350 = vmatprep.subr.bf16.mxu0 0
        %1351 = vmatpush1.bf16.msra.mxu0 0
        %1352 = vmatprep.subr.bf16.mxu0 0
        %1353 = vmatpush1.bf16.msra.mxu0 %v1333
        %1354 = vmatprep.subr.bf16.mxu0 0
        %1355 = vmatpush2.bf16.msra.mxu0 0
        %1356 = vmatprep.subr.bf16.mxu0 0
        %1357 = vmatpush2.bf16.msra.mxu0 0
        %1358 = vmatprep.subr.bf16.mxu0 0
        %1359 = vmatpush2.bf16.msra.mxu0 0
        %1360 = vmatprep.subr.bf16.mxu0 0
        %1361 = vmatpush2.bf16.msra.mxu0 0
        %1362 = vmatprep.subr.bf16.mxu0 0
        %1363 = vmatpush2.bf16.msra.mxu0 0
        %1364 = vmatprep.subr.bf16.mxu0 0
        %1365 = vmatpush2.bf16.msra.mxu0 0
        %1366 = vmatprep.subr.bf16.mxu0 0
        %1367 = vmatpush2.bf16.msra.mxu0 0
        %1368 = vmatprep.subr.bf16.mxu0 0
        %1369 = vmatpush2.bf16.msra.mxu0 0
        %1370 = vmatprep.mubr.bf16.mxu0 0
        %1371 = vmatmul.mubr.bf16.gmra.mxu0 %v1336
        %v1372 = vpop.f32.mrf.mxu0
        %v1373 = vadd.f32 0.0, %v1372
        %v1374 = vpop.f32.mrf.mxu0
        %v1375 = vpop.f32.mrf.mxu0
        %v1376 = vadd.f32 0.0, %v1375
        %v1377 = vpop.f32.mrf.mxu0
        %1378 = vdwg.mxu0
        %v1379 = vpack.c.bf16 %v1376, %v1373
        %v1381 = vunpack.c.l.b16 %v1379
        %v1382 = vunpack.c.h.b16 %v1379
        %v1383 = vpack.c.b16 %v1381, %v1381
        %v1384 = vpack.c.b16 %v1382, %v1382
        %1385 = vrot.lane.b32.xlu0 %v1383, 64
        %v1386 = vpop.permute.xlu0 %1385
        %1387 = vrot.lane.b32.xlu0 %v1384, 64
        %v1388 = vpop.permute.xlu0 %1387
        %vm1391 = vcmask 781824
        %1392 = vst.msk [vmem:[%s1068] sm:$0xf] %vm1391, %v1386
        %1393 = vst.msk [vmem:[%s1068 + $0x4] sm:$0xf] %vm1391, %v1388
        %v1394 = vld [vmem:[%s916] sm:$0xf]
        %v1395 = vld [vmem:[%s916 + $0xc] sm:$0xf]
        %v1396 = vld [vmem:[%s916 + $0x4] sm:$0xf]
        %v1397 = vld [vmem:[%s916 + $0x10] sm:$0xf]
        %v1398 = vld [vmem:[%s916 + $0x8] sm:$0xf]
        %v1399 = vld [vmem:[%s916 + $0x14] sm:$0xf]
        %v1402 = vunpack.c.l.b16 %v1394
        %v1403 = vunpack.c.l.b16 %v1395
        %v1404 = vpack.c.b16 %v1403, %v1402
        %1405 = vrot.lane.b32.xlu0 %v1404, 32
        %v1406 = vpop.permute.xlu0 %1405
        %v1409 = vunpack.c.l.b16 %v1396
        %v1410 = vunpack.c.l.b16 %v1397
        %v1411 = vpack.c.b16 %v1410, %v1409
        %1412 = vrot.lane.b32.xlu0 %v1411, 32
        %v1413 = vpop.permute.xlu0 %1412
        %v1415 = vsel %vm933, %v1406, 0
        %v1418 = vsel %vm933, %v1413, 0
        %1420 = vmatprep.subr.bf16.mxu0 0
        %1421 = vmatpush1.bf16.xpose.msra.mxu0 0
        %1422 = vmatprep.subr.bf16.mxu0 0
        %1423 = vmatpush1.bf16.xpose.msra.mxu0 0
        %1424 = vmatprep.subr.bf16.mxu0 0
        %1425 = vmatpush1.bf16.xpose.msra.mxu0 0
        %1426 = vmatprep.subr.bf16.mxu0 0
        %1427 = vmatpush1.bf16.xpose.msra.mxu0 0
        %1428 = vmatprep.subr.bf16.mxu0 0
        %1429 = vmatpush1.bf16.xpose.msra.mxu0 0
        %1430 = vmatprep.subr.bf16.mxu0 0
        %1431 = vmatpush1.bf16.xpose.msra.mxu0 0
        %1432 = vmatprep.subr.bf16.mxu0 0
        %1433 = vmatpush1.bf16.xpose.msra.mxu0 0
        %1434 = vmatprep.subr.bf16.mxu0 0
        %1435 = vmatpush1.bf16.xpose.msra.mxu0 %v1418
        %1436 = vmatprep.subr.bf16.mxu0 0
        %1437 = vmatpush2.bf16.xpose.msra.mxu0 0
        %1438 = vmatprep.subr.bf16.mxu0 0
        %1439 = vmatpush2.bf16.xpose.msra.mxu0 0
        %1440 = vmatprep.subr.bf16.mxu0 0
        %1441 = vmatpush2.bf16.xpose.msra.mxu0 0
        %1442 = vmatprep.subr.bf16.mxu0 0
        %1443 = vmatpush2.bf16.xpose.msra.mxu0 0
        %1444 = vmatprep.subr.bf16.mxu0 0
        %1445 = vmatpush2.bf16.xpose.msra.mxu0 0
        %1446 = vmatprep.subr.bf16.mxu0 0
        %1447 = vmatpush2.bf16.xpose.msra.mxu0 0
        %1448 = vmatprep.subr.bf16.mxu0 0
        %1449 = vmatpush2.bf16.xpose.msra.mxu0 0
        %1450 = vmatprep.subr.bf16.mxu0 0
        %1451 = vmatpush2.bf16.xpose.msra.mxu0 0
        %1452 = vmatprep.mubr.bf16.mxu0 0
        %1453 = vmatmul.mubr.bf16.gmra.mxu0 %v1415
        %v1454 = vpop.f32.mrf.mxu0
        %v1455 = vadd.f32 0.0, %v1454
        %v1456 = vpop.f32.mrf.mxu0
        %v1457 = vpop.f32.mrf.mxu0
        %v1458 = vadd.f32 0.0, %v1457
        %v1459 = vpop.f32.mrf.mxu0
        %1460 = vdwg.mxu0
        %v1461 = vmul.f32 %v1455, 0.17677669
        %v1462 = vmul.f32 %v1458, 0.17677669
        %v1463 = vadd.f32 %v1461, %v910
        %v1464 = vadd.f32 %v1462, %v911
        %v1465 = vsel %vm985, %v1463, -inf
        %1466 = vmax.xlane.f32.xlu0 %v1465
        %v1467 = vpop.xlane.xlu0 %1466
        %v1468 = vsel %vm985, %v1464, -inf
        %1469 = vmax.xlane.f32.xlu0 %v1468
        %v1470 = vpop.xlane.xlu0 %1469
        %v1471 = vsub.f32 %v1463, %v1467
        %v1472 = vsub.f32 %v1464, %v1470
        %v1473 = vmul.f32 %v1471, 1.442695
        %v1474 = vpow.pop %v1473
        %v1475 = vmul.f32 %v1472, 1.442695
        %v1476 = vpow.pop %v1475
        %v1477 = vsel %vm985, %v1474, 0.0
        %1478 = vadd.xlane.f32.xlu0 %v1477
        %v1479 = vpop.xlane.xlu0 %1478
        %v1480 = vsel %vm985, %v1476, 0.0
        %1481 = vadd.xlane.f32.xlu0 %v1480
        %v1482 = vpop.xlane.xlu0 %1481
        %v1483 = vrcp.pop %v1479
        %v1484 = vrcp.pop %v1482
        %v1485 = vmul.f32 %v1474, %v1483
        %v1486 = vmul.f32 %v1476, %v1484
        %v1487 = vpack.c.bf16 %v1486, %v1485
        %v1490 = vunpack.c.l.b16 %v1398
        %v1491 = vunpack.c.l.b16 %v1399
        %v1492 = vpack.c.b16 %v1491, %v1490
        %1493 = vrot.lane.b32.xlu0 %v1492, 32
        %v1494 = vpop.permute.xlu0 %1493
        %v1497 = vsel %vm985, %v1487, 0
        %1499 = vmatprep.subr.bf16.mxu0 0
        %1500 = vmatpush1.bf16.msra.mxu0 0
        %1501 = vmatprep.subr.bf16.mxu0 0
        %1502 = vmatpush1.bf16.msra.mxu0 0
        %1503 = vmatprep.subr.bf16.mxu0 0
        %1504 = vmatpush1.bf16.msra.mxu0 0
        %1505 = vmatprep.subr.bf16.mxu0 0
        %1506 = vmatpush1.bf16.msra.mxu0 0
        %1507 = vmatprep.subr.bf16.mxu0 0
        %1508 = vmatpush1.bf16.msra.mxu0 0
        %1509 = vmatprep.subr.bf16.mxu0 0
        %1510 = vmatpush1.bf16.msra.mxu0 0
        %1511 = vmatprep.subr.bf16.mxu0 0
        %1512 = vmatpush1.bf16.msra.mxu0 0
        %1513 = vmatprep.subr.bf16.mxu0 0
        %1514 = vmatpush1.bf16.msra.mxu0 %v1494
        %1515 = vmatprep.subr.bf16.mxu0 0
        %1516 = vmatpush2.bf16.msra.mxu0 0
        %1517 = vmatprep.subr.bf16.mxu0 0
        %1518 = vmatpush2.bf16.msra.mxu0 0
        %1519 = vmatprep.subr.bf16.mxu0 0
        %1520 = vmatpush2.bf16.msra.mxu0 0
        %1521 = vmatprep.subr.bf16.mxu0 0
        %1522 = vmatpush2.bf16.msra.mxu0 0
        %1523 = vmatprep.subr.bf16.mxu0 0
        %1524 = vmatpush2.bf16.msra.mxu0 0
        %1525 = vmatprep.subr.bf16.mxu0 0
        %1526 = vmatpush2.bf16.msra.mxu0 0
        %1527 = vmatprep.subr.bf16.mxu0 0
        %1528 = vmatpush2.bf16.msra.mxu0 0
        %1529 = vmatprep.subr.bf16.mxu0 0
        %1530 = vmatpush2.bf16.msra.mxu0 0
        %1531 = vmatprep.mubr.bf16.mxu0 0
        %1532 = vmatmul.mubr.bf16.gmra.mxu0 %v1497
        %v1533 = vpop.f32.mrf.mxu0
        %v1534 = vadd.f32 0.0, %v1533
        %v1535 = vpop.f32.mrf.mxu0
        %v1536 = vpop.f32.mrf.mxu0
        %v1537 = vadd.f32 0.0, %v1536
        %v1538 = vpop.f32.mrf.mxu0
        %1539 = vdwg.mxu0
        %v1540 = vpack.c.bf16 %v1537, %v1534
        %v1542 = vunpack.c.l.b16 %v1540
        %v1543 = vunpack.c.h.b16 %v1540
        %v1544 = vpack.c.b16 %v1542, %v1542
        %v1545 = vpack.c.b16 %v1543, %v1543
        %1546 = vrot.lane.b32.xlu0 %v1544, 96
        %v1547 = vpop.permute.xlu0 %1546
        %1548 = vrot.lane.b32.xlu0 %v1545, 96
        %v1549 = vpop.permute.xlu0 %1548
        %vm1552 = vcmask 1044224
        %1553 = vst.msk [vmem:[%s1068] sm:$0xf] %vm1552, %v1547
        %1554 = vst.msk [vmem:[%s1068 + $0x4] sm:$0xf] %vm1552, %v1549
      $region81: #{text_encoder_forward.5} parent=75 // loop_footer
        %s907 = sadd.s32 1, %s903
      $region82: #{text_encoder_forward.5} parent=75 // loop_footer_branch
        %902 = sbr.rel target = $region78
      $region83: #{text_encoder_forward.5} parent=75 // loop_exit
        _
      %v1555 = vld [vmem:[#allocation3] sm:$0xf]
      %v1556 = vld [vmem:[#allocation3 + $0x4] sm:$0xf]
      %v1557 = vld [vmem:[#allocation3 + $0x8] sm:$0xf]
      %v1558 = vld [vmem:[#allocation3 + $0xc] sm:$0xf]
      %v1559 = vld [vmem:[%s6] sm:$0xf]
      %v1560 = vld [vmem:[%s6 + $0x4] sm:$0xf]
      %v1561 = vld [vmem:[%s6 + $0x8] sm:$0xf]
      %v1562 = vld [vmem:[%s6 + $0xc] sm:$0xf]
      %v1563 = vld [vmem:[%s6 + $0x10] sm:$0xf]
      %v1564 = vld [vmem:[%s6 + $0x14] sm:$0xf]
      %v1565 = vld [vmem:[%s6 + $0x18] sm:$0xf]
      %v1566 = vld [vmem:[%s6 + $0x1c] sm:$0xf]
      %v1567 = vld [vmem:[%s6 + $0x20] sm:$0xf]
      %v1568 = vld [vmem:[%s6 + $0x24] sm:$0xf]
      %v1569 = vld [vmem:[%s6 + $0x28] sm:$0xf]
      %v1570 = vld [vmem:[%s6 + $0x2c] sm:$0xf]
      %v1571 = vld [vmem:[%s6 + $0x30] sm:$0xf]
      %v1572 = vld [vmem:[%s6 + $0x34] sm:$0xf]
      %v1573 = vld [vmem:[%s6 + $0x38] sm:$0xf]
      %v1574 = vld [vmem:[%s6 + $0x3c] sm:$0xf]
      %v1579 = vunpack.c.l.b16 %v1555
      %v1580 = vunpack.c.l.b16 %v1556
      %v1581 = vunpack.c.l.b16 %v1557
      %v1582 = vunpack.c.l.b16 %v1558
      %v1583 = vpack.c.b16 %v1580, %v1579
      %v1584 = vpack.c.b16 %v1582, %v1581
      %v1603 = vunpack.c.l.b16 %v1559
      %v1604 = vunpack.c.l.b16 %v1560
      %v1605 = vunpack.c.l.b16 %v1561
      %v1606 = vunpack.c.l.b16 %v1562
      %v1607 = vunpack.c.l.b16 %v1563
      %v1608 = vunpack.c.l.b16 %v1564
      %v1609 = vunpack.c.l.b16 %v1565
      %v1610 = vunpack.c.l.b16 %v1566
      %v1611 = vunpack.c.l.b16 %v1567
      %v1612 = vunpack.c.l.b16 %v1568
      %v1613 = vunpack.c.l.b16 %v1569
      %v1614 = vunpack.c.l.b16 %v1570
      %v1615 = vunpack.c.l.b16 %v1571
      %v1616 = vunpack.c.l.b16 %v1572
      %v1617 = vunpack.c.l.b16 %v1573
      %v1618 = vunpack.c.l.b16 %v1574
      %v1619 = vpack.c.b16 %v1604, %v1603
      %v1620 = vpack.c.b16 %v1606, %v1605
      %v1621 = vpack.c.b16 %v1608, %v1607
      %v1622 = vpack.c.b16 %v1610, %v1609
      %v1623 = vpack.c.b16 %v1612, %v1611
      %v1624 = vpack.c.b16 %v1614, %v1613
      %v1625 = vpack.c.b16 %v1616, %v1615
      %v1626 = vpack.c.b16 %v1618, %v1617
      %1635 = vmatprep.subr.bf16.mxu0 0
      %1636 = vmatpush1.bf16.msra.mxu0 %v1626
      %1637 = vmatprep.subr.bf16.mxu0 0
      %1638 = vmatpush1.bf16.msra.mxu0 %v1625
      %1639 = vmatprep.subr.bf16.mxu0 0
      %1640 = vmatpush1.bf16.msra.mxu0 %v1624
      %1641 = vmatprep.subr.bf16.mxu0 0
      %1642 = vmatpush1.bf16.msra.mxu0 %v1623
      %1643 = vmatprep.subr.bf16.mxu0 0
      %1644 = vmatpush1.bf16.msra.mxu0 %v1622
      %1645 = vmatprep.subr.bf16.mxu0 0
      %1646 = vmatpush1.bf16.msra.mxu0 %v1621
      %1647 = vmatprep.subr.bf16.mxu0 0
      %1648 = vmatpush1.bf16.msra.mxu0 %v1620
      %1649 = vmatprep.subr.bf16.mxu0 0
      %1650 = vmatpush1.bf16.msra.mxu0 %v1619
      %1651 = vmatprep.subr.bf16.mxu0 0
      %1652 = vmatpush2.bf16.msra.mxu0 0
      %1653 = vmatprep.subr.bf16.mxu0 0
      %1654 = vmatpush2.bf16.msra.mxu0 0
      %1655 = vmatprep.subr.bf16.mxu0 0
      %1656 = vmatpush2.bf16.msra.mxu0 0
      %1657 = vmatprep.subr.bf16.mxu0 0
      %1658 = vmatpush2.bf16.msra.mxu0 0
      %1659 = vmatprep.subr.bf16.mxu0 0
      %1660 = vmatpush2.bf16.msra.mxu0 0
      %1661 = vmatprep.subr.bf16.mxu0 0
      %1662 = vmatpush2.bf16.msra.mxu0 0
      %1663 = vmatprep.subr.bf16.mxu0 0
      %1664 = vmatpush2.bf16.msra.mxu0 0
      %1665 = vmatprep.subr.bf16.mxu0 0
      %1666 = vmatpush2.bf16.msra.mxu0 0
      %1667 = vmatprep.mubr.bf16.mxu0 0
      %1668 = vmatmul.mubr.bf16.gmra.mxu0 %v1583
      %v1669 = vpop.f32.mrf.mxu0
      %v1670 = vadd.f32 0.0, %v1669
      %v1671 = vpop.f32.mrf.mxu0
      %v1672 = vpop.f32.mrf.mxu0
      %v1673 = vadd.f32 0.0, %v1672
      %v1674 = vpop.f32.mrf.mxu0
      %1675 = vmatprep.mubr.bf16.mxu0 0
      %1676 = vmatmul.mubr.bf16.gmra.mxu0 %v1584
      %v1677 = vpop.f32.mrf.mxu0
      %v1678 = vadd.f32 0.0, %v1677
      %v1679 = vpop.f32.mrf.mxu0
      %v1680 = vpop.f32.mrf.mxu0
      %v1681 = vadd.f32 0.0, %v1680
      %v1682 = vpop.f32.mrf.mxu0
      %1683 = vdwg.mxu0
      %v1684 = vld [vmem:[%s485] sm:$0xff]
      %v1685 = vld [vmem:[%s485 + $0x8] sm:$0xff]
      %v1686 = vld [vmem:[%s485 + $0x10] sm:$0xff]
      %v1687 = vld [vmem:[%s485 + $0x18] sm:$0xff]
      %v1688 = vadd.f32 %v1684, %v1670
      %v1689 = vadd.f32 %v1685, %v1673
      %v1690 = vadd.f32 %v1686, %v1678
      %v1691 = vadd.f32 %v1687, %v1681
      %v1692 = vld [vmem:[%s7] sm:$0x1]
      %v1694 = vlaneseq
      %v1695 = vshrl.u32 %v1694, 7
      %v1696 = vsub.s32 0, %v1695
      %v1697 = vrot.slane %v1692, %v1696
      %v1699 = vadd.f32 %v1688, %v1697
      %v1700 = vadd.f32 %v1689, %v1697
      %v1701 = vadd.f32 %v1690, %v1697
      %v1702 = vadd.f32 %v1691, %v1697
      %1703 = vst [vmem:[#allocation4] sm:$0xff] %v1699
      %1704 = vst [vmem:[#allocation4 + $0x8] sm:$0xff] %v1700
      %1705 = vst [vmem:[#allocation4 + $0x10] sm:$0xff] %v1701
      %1706 = vst [vmem:[#allocation4 + $0x18] sm:$0xff] %v1702
      %1707 = vadd.xlane.f32.xlu0 %v1699
      %v1708 = vpop.xlane.xlu0 %1707
      %1709 = vadd.xlane.f32.xlu0 %v1700
      %v1710 = vpop.xlane.xlu0 %1709
      %1711 = vadd.xlane.f32.xlu0 %v1701
      %v1712 = vpop.xlane.xlu0 %1711
      %1713 = vadd.xlane.f32.xlu0 %v1702
      %v1714 = vpop.xlane.xlu0 %1713
      %v1715 = vmul.f32 %v1708, %v514
      %v1716 = vmul.f32 %v1710, %v514
      %v1717 = vmul.f32 %v1712, %v514
      %v1718 = vmul.f32 %v1714, %v514
      %v1719 = vsub.f32 %v1699, %v1715
      %v1720 = vsub.f32 %v1700, %v1716
      %v1721 = vsub.f32 %v1701, %v1717
      %v1722 = vsub.f32 %v1702, %v1718
      %v1723 = vmul.f32 %v1719, %v1719
      %v1724 = vmul.f32 %v1720, %v1720
      %v1725 = vmul.f32 %v1721, %v1721
      %v1726 = vmul.f32 %v1722, %v1722
      %1727 = vadd.xlane.f32.xlu0 %v1723
      %v1728 = vpop.xlane.xlu0 %1727
      %1729 = vadd.xlane.f32.xlu0 %v1724
      %v1730 = vpop.xlane.xlu0 %1729
      %1731 = vadd.xlane.f32.xlu0 %v1725
      %v1732 = vpop.xlane.xlu0 %1731
      %1733 = vadd.xlane.f32.xlu0 %v1726
      %v1734 = vpop.xlane.xlu0 %1733
      %v1735 = vmul.f32 %v1728, %v514
      %v1736 = vmul.f32 %v1730, %v514
      %v1737 = vmul.f32 %v1732, %v514
      %v1738 = vmul.f32 %v1734, %v514
      %v1739 = vadd.f32 %v1735, 1e-05
      %v1740 = vadd.f32 %v1736, 1e-05
      %v1741 = vadd.f32 %v1737, 1e-05
      %v1742 = vadd.f32 %v1738, 1e-05
      %v1743 = vrsqrt.pop %v1739
      %v1744 = vrsqrt.pop %v1740
      %v1745 = vrsqrt.pop %v1741
      %v1746 = vrsqrt.pop %v1742
      %v1747 = vmul.f32 %v1719, %v1743
      %v1748 = vmul.f32 %v1720, %v1744
      %v1749 = vmul.f32 %v1721, %v1745
      %v1750 = vmul.f32 %v1722, %v1746
      %v1751 = vld [vmem:[%s8] sm:$0x1]
      %v1753 = vlaneseq
      %v1754 = vshrl.u32 %v1753, 7
      %v1755 = vsub.s32 0, %v1754
      %v1756 = vrot.slane %v1751, %v1755
      %v1758 = vmul.f32 %v1747, %v1756
      %v1759 = vmul.f32 %v1748, %v1756
      %v1760 = vmul.f32 %v1749, %v1756
      %v1761 = vmul.f32 %v1750, %v1756
      %v1762 = vld [vmem:[%s9] sm:$0x1]
      %v1764 = vlaneseq
      %v1765 = vshrl.u32 %v1764, 7
      %v1766 = vsub.s32 0, %v1765
      %v1767 = vrot.slane %v1762, %v1766
      %v1769 = vadd.f32 %v1758, %v1767
      %v1770 = vadd.f32 %v1759, %v1767
      %v1771 = vadd.f32 %v1760, %v1767
      %v1772 = vadd.f32 %v1761, %v1767
      %v1773 = vpack.c.bf16 %v1770, %v1769
      %v1774 = vpack.c.bf16 %v1772, %v1771
      %v1775 = vld [vmem:[%s10] sm:$0xff]
      %v1776 = vld [vmem:[%s10 + $0x8] sm:$0xff]
      %v1777 = vld [vmem:[%s10 + $0x10] sm:$0xff]
      %v1778 = vld [vmem:[%s10 + $0x18] sm:$0xff]
      %v1779 = vld [vmem:[%s10 + $0x20] sm:$0xff]
      %v1780 = vld [vmem:[%s10 + $0x28] sm:$0xff]
      %v1781 = vld [vmem:[%s10 + $0x30] sm:$0xff]
      %v1782 = vld [vmem:[%s10 + $0x38] sm:$0xff]
      %v1783 = vld [vmem:[%s10 + $0x40] sm:$0xff]
      %v1784 = vld [vmem:[%s10 + $0x48] sm:$0xff]
      %v1785 = vld [vmem:[%s10 + $0x50] sm:$0xff]
      %v1786 = vld [vmem:[%s10 + $0x58] sm:$0xff]
      %v1787 = vld [vmem:[%s10 + $0x60] sm:$0xff]
      %v1788 = vld [vmem:[%s10 + $0x68] sm:$0xff]
      %v1789 = vld [vmem:[%s10 + $0x70] sm:$0xff]
      %v1790 = vld [vmem:[%s10 + $0x78] sm:$0xff]
      %v1791 = vld [vmem:[%s10 + $0x80] sm:$0xff]
      %v1792 = vld [vmem:[%s10 + $0x88] sm:$0xff]
      %v1793 = vld [vmem:[%s10 + $0x90] sm:$0xff]
      %v1794 = vld [vmem:[%s10 + $0x98] sm:$0xff]
      %v1795 = vld [vmem:[%s10 + $0xa0] sm:$0xff]
      %v1796 = vld [vmem:[%s10 + $0xa8] sm:$0xff]
      %v1797 = vld [vmem:[%s10 + $0xb0] sm:$0xff]
      %v1798 = vld [vmem:[%s10 + $0xb8] sm:$0xff]
      %v1799 = vld [vmem:[%s10 + $0xc0] sm:$0xff]
      %v1800 = vld [vmem:[%s10 + $0xc8] sm:$0xff]
      %v1801 = vld [vmem:[%s10 + $0xd0] sm:$0xff]
      %v1802 = vld [vmem:[%s10 + $0xd8] sm:$0xff]
      %v1803 = vld [vmem:[%s10 + $0xe0] sm:$0xff]
      %v1804 = vld [vmem:[%s10 + $0xe8] sm:$0xff]
      %v1805 = vld [vmem:[%s10 + $0xf0] sm:$0xff]
      %v1806 = vld [vmem:[%s10 + $0xf8] sm:$0xff]
      %v1807 = vld [vmem:[%s11] sm:$0xf]
      %v1809 = vlaneseq
      %v1810 = vshrl.u32 %v1809, 7
      %v1811 = vsub.s32 0, %v1810
      %v1812 = vrot.slane %v1807, %v1811
      %v1813 = vlaneseq
      %v1814 = vshrl.u32 %v1813, 7
      %v1815 = vsub.s32 1, %v1814
      %v1816 = vrot.slane %v1807, %v1815
      %v1817 = vlaneseq
      %v1818 = vshrl.u32 %v1817, 7
      %v1819 = vsub.s32 2, %v1818
      %v1820 = vrot.slane %v1807, %v1819
      %v1821 = vlaneseq
      %v1822 = vshrl.u32 %v1821, 7
      %v1823 = vsub.s32 3, %v1822
      %v1824 = vrot.slane %v1807, %v1823
      %v1861 = vunpack.c.l.b16 %v1775
      %v1862 = vunpack.c.h.b16 %v1775
      %v1863 = vunpack.c.l.b16 %v1776
      %v1864 = vunpack.c.h.b16 %v1776
      %v1865 = vunpack.c.l.b16 %v1777
      %v1866 = vunpack.c.h.b16 %v1777
      %v1867 = vunpack.c.l.b16 %v1778
      %v1868 = vunpack.c.h.b16 %v1778
      %v1869 = vunpack.c.l.b16 %v1779
      %v1870 = vunpack.c.h.b16 %v1779
      %v1871 = vunpack.c.l.b16 %v1780
      %v1872 = vunpack.c.h.b16 %v1780
      %v1873 = vunpack.c.l.b16 %v1781
      %v1874 = vunpack.c.h.b16 %v1781
      %v1875 = vunpack.c.l.b16 %v1782
      %v1876 = vunpack.c.h.b16 %v1782
      %v1877 = vunpack.c.l.b16 %v1783
      %v1878 = vunpack.c.h.b16 %v1783
      %v1879 = vunpack.c.l.b16 %v1784
      %v1880 = vunpack.c.h.b16 %v1784
      %v1881 = vunpack.c.l.b16 %v1785
      %v1882 = vunpack.c.h.b16 %v1785
      %v1883 = vunpack.c.l.b16 %v1786
      %v1884 = vunpack.c.h.b16 %v1786
      %v1885 = vunpack.c.l.b16 %v1787
      %v1886 = vunpack.c.h.b16 %v1787
      %v1887 = vunpack.c.l.b16 %v1788
      %v1888 = vunpack.c.h.b16 %v1788
      %v1889 = vunpack.c.l.b16 %v1789
      %v1890 = vunpack.c.h.b16 %v1789
      %v1891 = vunpack.c.l.b16 %v1790
      %v1892 = vunpack.c.h.b16 %v1790
      %v1893 = vunpack.c.l.b16 %v1791
      %v1894 = vunpack.c.h.b16 %v1791
      %v1895 = vunpack.c.l.b16 %v1792
      %v1896 = vunpack.c.h.b16 %v1792
      %v1897 = vunpack.c.l.b16 %v1793
      %v1898 = vunpack.c.h.b16 %v1793
      %v1899 = vunpack.c.l.b16 %v1794
      %v1900 = vunpack.c.h.b16 %v1794
      %v1901 = vunpack.c.l.b16 %v1795
      %v1902 = vunpack.c.h.b16 %v1795
      %v1903 = vunpack.c.l.b16 %v1796
      %v1904 = vunpack.c.h.b16 %v1796
      %v1905 = vunpack.c.l.b16 %v1797
      %v1906 = vunpack.c.h.b16 %v1797
      %v1907 = vunpack.c.l.b16 %v1798
      %v1908 = vunpack.c.h.b16 %v1798
      %v1909 = vunpack.c.l.b16 %v1799
      %v1910 = vunpack.c.h.b16 %v1799
      %v1911 = vunpack.c.l.b16 %v1800
      %v1912 = vunpack.c.h.b16 %v1800
      %v1913 = vunpack.c.l.b16 %v1801
      %v1914 = vunpack.c.h.b16 %v1801
      %v1915 = vunpack.c.l.b16 %v1802
      %v1916 = vunpack.c.h.b16 %v1802
      %v1917 = vunpack.c.l.b16 %v1803
      %v1918 = vunpack.c.h.b16 %v1803
      %v1919 = vunpack.c.l.b16 %v1804
      %v1920 = vunpack.c.h.b16 %v1804
      %v1921 = vunpack.c.l.b16 %v1805
      %v1922 = vunpack.c.h.b16 %v1805
      %v1923 = vunpack.c.l.b16 %v1806
      %v1924 = vunpack.c.h.b16 %v1806
      %v1925 = vpack.c.b16 %v1865, %v1861
      %v1926 = vpack.c.b16 %v1866, %v1862
      %v1927 = vpack.c.b16 %v1867, %v1863
      %v1928 = vpack.c.b16 %v1868, %v1864
      %v1929 = vpack.c.b16 %v1873, %v1869
      %v1930 = vpack.c.b16 %v1874, %v1870
      %v1931 = vpack.c.b16 %v1875, %v1871
      %v1932 = vpack.c.b16 %v1876, %v1872
      %v1933 = vpack.c.b16 %v1881, %v1877
      %v1934 = vpack.c.b16 %v1882, %v1878
      %v1935 = vpack.c.b16 %v1883, %v1879
      %v1936 = vpack.c.b16 %v1884, %v1880
      %v1937 = vpack.c.b16 %v1889, %v1885
      %v1938 = vpack.c.b16 %v1890, %v1886
      %v1939 = vpack.c.b16 %v1891, %v1887
      %v1940 = vpack.c.b16 %v1892, %v1888
      %v1941 = vpack.c.b16 %v1897, %v1893
      %v1942 = vpack.c.b16 %v1898, %v1894
      %v1943 = vpack.c.b16 %v1899, %v1895
      %v1944 = vpack.c.b16 %v1900, %v1896
      %v1945 = vpack.c.b16 %v1905, %v1901
      %v1946 = vpack.c.b16 %v1906, %v1902
      %v1947 = vpack.c.b16 %v1907, %v1903
      %v1948 = vpack.c.b16 %v1908, %v1904
      %v1949 = vpack.c.b16 %v1913, %v1909
      %v1950 = vpack.c.b16 %v1914, %v1910
      %v1951 = vpack.c.b16 %v1915, %v1911
      %v1952 = vpack.c.b16 %v1916, %v1912
      %v1953 = vpack.c.b16 %v1921, %v1917
      %v1954 = vpack.c.b16 %v1922, %v1918
      %v1955 = vpack.c.b16 %v1923, %v1919
      %v1956 = vpack.c.b16 %v1924, %v1920
      %1989 = vmatprep.subr.bf16.mxu0 %v1954
      %1990 = vmatpush1.bf16.msra.mxu0 %v1953
      %1991 = vmatprep.subr.bf16.mxu0 %v1950
      %1992 = vmatpush1.bf16.msra.mxu0 %v1949
      %1993 = vmatprep.subr.bf16.mxu0 %v1946
      %1994 = vmatpush1.bf16.msra.mxu0 %v1945
      %1995 = vmatprep.subr.bf16.mxu0 %v1942
      %1996 = vmatpush1.bf16.msra.mxu0 %v1941
      %1997 = vmatprep.subr.bf16.mxu0 %v1938
      %1998 = vmatpush1.bf16.msra.mxu0 %v1937
      %1999 = vmatprep.subr.bf16.mxu0 %v1934
      %2000 = vmatpush1.bf16.msra.mxu0 %v1933
      %2001 = vmatprep.subr.bf16.mxu0 %v1930
      %2002 = vmatpush1.bf16.msra.mxu0 %v1929
      %2003 = vmatprep.subr.bf16.mxu0 %v1926
      %2004 = vmatpush1.bf16.msra.mxu0 %v1925
      %2005 = vmatprep.subr.bf16.mxu0 0
      %2006 = vmatpush2.bf16.msra.mxu0 0
      %2007 = vmatprep.subr.bf16.mxu0 0
      %2008 = vmatpush2.bf16.msra.mxu0 0
      %2009 = vmatprep.subr.bf16.mxu0 0
      %2010 = vmatpush2.bf16.msra.mxu0 0
      %2011 = vmatprep.subr.bf16.mxu0 0
      %2012 = vmatpush2.bf16.msra.mxu0 0
      %2013 = vmatprep.subr.bf16.mxu0 0
      %2014 = vmatpush2.bf16.msra.mxu0 0
      %2015 = vmatprep.subr.bf16.mxu0 0
      %2016 = vmatpush2.bf16.msra.mxu0 0
      %2017 = vmatprep.subr.bf16.mxu0 0
      %2018 = vmatpush2.bf16.msra.mxu0 0
      %2019 = vmatprep.subr.bf16.mxu0 0
      %2020 = vmatpush2.bf16.msra.mxu0 0
      %2021 = vmatprep.mubr.bf16.mxu0 0
      %2022 = vmatmul.mubr.bf16.gmra.mxu0 %v1773
      %v2023 = vpop.f32.mrf.mxu0
      %v2024 = vadd.f32 %v1812, %v2023
      %v2025 = vpop.f32.mrf.mxu0
      %v2026 = vadd.f32 %v1816, %v2025
      %v2027 = vpop.f32.mrf.mxu0
      %v2028 = vadd.f32 %v1812, %v2027
      %v2029 = vpop.f32.mrf.mxu0
      %v2030 = vadd.f32 %v1816, %v2029
      %2031 = vmatprep.mubr.bf16.mxu0 0
      %2032 = vmatmul.mubr.bf16.gmra.mxu0 %v1774
      %v2033 = vpop.f32.mrf.mxu0
      %v2034 = vadd.f32 %v1812, %v2033
      %v2035 = vpop.f32.mrf.mxu0
      %v2036 = vadd.f32 %v1816, %v2035
      %v2037 = vpop.f32.mrf.mxu0
      %v2038 = vadd.f32 %v1812, %v2037
      %v2039 = vpop.f32.mrf.mxu0
      %v2040 = vadd.f32 %v1816, %v2039
      %2041 = vdwg.mxu0
      %2042 = vmatprep.subr.bf16.mxu0 %v1956
      %2043 = vmatpush1.bf16.msra.mxu0 %v1955
      %2044 = vmatprep.subr.bf16.mxu0 %v1952
      %2045 = vmatpush1.bf16.msra.mxu0 %v1951
      %2046 = vmatprep.subr.bf16.mxu0 %v1948
      %2047 = vmatpush1.bf16.msra.mxu0 %v1947
      %2048 = vmatprep.subr.bf16.mxu0 %v1944
      %2049 = vmatpush1.bf16.msra.mxu0 %v1943
      %2050 = vmatprep.subr.bf16.mxu0 %v1940
      %2051 = vmatpush1.bf16.msra.mxu0 %v1939
      %2052 = vmatprep.subr.bf16.mxu0 %v1936
      %2053 = vmatpush1.bf16.msra.mxu0 %v1935
      %2054 = vmatprep.subr.bf16.mxu0 %v1932
      %2055 = vmatpush1.bf16.msra.mxu0 %v1931
      %2056 = vmatprep.subr.bf16.mxu0 %v1928
      %2057 = vmatpush1.bf16.msra.mxu0 %v1927
      %2058 = vmatprep.subr.bf16.mxu0 0
      %2059 = vmatpush2.bf16.msra.mxu0 0
      %2060 = vmatprep.subr.bf16.mxu0 0
      %2061 = vmatpush2.bf16.msra.mxu0 0
      %2062 = vmatprep.subr.bf16.mxu0 0
      %2063 = vmatpush2.bf16.msra.mxu0 0
      %2064 = vmatprep.subr.bf16.mxu0 0
      %2065 = vmatpush2.bf16.msra.mxu0 0
      %2066 = vmatprep.subr.bf16.mxu0 0
      %2067 = vmatpush2.bf16.msra.mxu0 0
      %2068 = vmatprep.subr.bf16.mxu0 0
      %2069 = vmatpush2.bf16.msra.mxu0 0
      %2070 = vmatprep.subr.bf16.mxu0 0
      %2071 = vmatpush2.bf16.msra.mxu0 0
      %2072 = vmatprep.subr.bf16.mxu0 0
      %2073 = vmatpush2.bf16.msra.mxu0 0
      %2074 = vmatprep.mubr.bf16.mxu0 0
      %2075 = vmatmul.mubr.bf16.gmra.mxu0 %v1773
      %v2076 = vpop.f32.mrf.mxu0
      %v2077 = vadd.f32 %v1820, %v2076
      %v2078 = vpop.f32.mrf.mxu0
      %v2079 = vadd.f32 %v1824, %v2078
      %v2080 = vpop.f32.mrf.mxu0
      %v2081 = vadd.f32 %v1820, %v2080
      %v2082 = vpop.f32.mrf.mxu0
      %v2083 = vadd.f32 %v1824, %v2082
      %2084 = vmatprep.mubr.bf16.mxu0 0
      %2085 = vmatmul.mubr.bf16.gmra.mxu0 %v1774
      %v2086 = vpop.f32.mrf.mxu0
      %v2087 = vadd.f32 %v1820, %v2086
      %v2088 = vpop.f32.mrf.mxu0
      %v2089 = vadd.f32 %v1824, %v2088
      %v2090 = vpop.f32.mrf.mxu0
      %v2091 = vadd.f32 %v1820, %v2090
      %v2092 = vpop.f32.mrf.mxu0
      %v2093 = vadd.f32 %v1824, %v2092
      %2094 = vdwg.mxu0
      %v2095 = vmul.f32 %v2024, 1.702
      %v2096 = vmul.f32 %v2026, 1.702
      %v2097 = vmul.f32 %v2077, 1.702
      %v2098 = vmul.f32 %v2079, 1.702
      %v2099 = vmul.f32 %v2028, 1.702
      %v2100 = vmul.f32 %v2030, 1.702
      %v2101 = vmul.f32 %v2081, 1.702
      %v2102 = vmul.f32 %v2083, 1.702
      %v2103 = vmul.f32 %v2034, 1.702
      %v2104 = vmul.f32 %v2036, 1.702
      %v2105 = vmul.f32 %v2087, 1.702
      %v2106 = vmul.f32 %v2089, 1.702
      %v2107 = vmul.f32 %v2038, 1.702
      %v2108 = vmul.f32 %v2040, 1.702
      %v2109 = vmul.f32 %v2091, 1.702
      %v2110 = vmul.f32 %v2093, 1.702
      %v2111 = vxor.u32 %v2095, 2147483648
      %v2112 = vxor.u32 %v2096, 2147483648
      %v2113 = vxor.u32 %v2097, 2147483648
      %v2114 = vxor.u32 %v2098, 2147483648
      %v2115 = vxor.u32 %v2099, 2147483648
      %v2116 = vxor.u32 %v2100, 2147483648
      %v2117 = vxor.u32 %v2101, 2147483648
      %v2118 = vxor.u32 %v2102, 2147483648
      %v2119 = vxor.u32 %v2103, 2147483648
      %v2120 = vxor.u32 %v2104, 2147483648
      %v2121 = vxor.u32 %v2105, 2147483648
      %v2122 = vxor.u32 %v2106, 2147483648
      %v2123 = vxor.u32 %v2107, 2147483648
      %v2124 = vxor.u32 %v2108, 2147483648
      %v2125 = vxor.u32 %v2109, 2147483648
      %v2126 = vxor.u32 %v2110, 2147483648
      %v2127 = vmul.f32 %v2111, 1.442695
      %v2128 = vpow.pop %v2127
      %v2129 = vmul.f32 %v2112, 1.442695
      %v2130 = vpow.pop %v2129
      %v2131 = vmul.f32 %v2113, 1.442695
      %v2132 = vpow.pop %v2131
      %v2133 = vmul.f32 %v2114, 1.442695
      %v2134 = vpow.pop %v2133
      %v2135 = vmul.f32 %v2115, 1.442695
      %v2136 = vpow.pop %v2135
      %v2137 = vmul.f32 %v2116, 1.442695
      %v2138 = vpow.pop %v2137
      %v2139 = vmul.f32 %v2117, 1.442695
      %v2140 = vpow.pop %v2139
      %v2141 = vmul.f32 %v2118, 1.442695
      %v2142 = vpow.pop %v2141
      %v2143 = vmul.f32 %v2119, 1.442695
      %v2144 = vpow.pop %v2143
      %v2145 = vmul.f32 %v2120, 1.442695
      %v2146 = vpow.pop %v2145
      %v2147 = vmul.f32 %v2121, 1.442695
      %v2148 = vpow.pop %v2147
      %v2149 = vmul.f32 %v2122, 1.442695
      %v2150 = vpow.pop %v2149
      %v2151 = vmul.f32 %v2123, 1.442695
      %v2152 = vpow.pop %v2151
      %v2153 = vmul.f32 %v2124, 1.442695
      %v2154 = vpow.pop %v2153
      %v2155 = vmul.f32 %v2125, 1.442695
      %v2156 = vpow.pop %v2155
      %v2157 = vmul.f32 %v2126, 1.442695
      %v2158 = vpow.pop %v2157
      %v2159 = vadd.f32 %v2128, 1.0
      %v2160 = vadd.f32 %v2130, 1.0
      %v2161 = vadd.f32 %v2132, 1.0
      %v2162 = vadd.f32 %v2134, 1.0
      %v2163 = vadd.f32 %v2136, 1.0
      %v2164 = vadd.f32 %v2138, 1.0
      %v2165 = vadd.f32 %v2140, 1.0
      %v2166 = vadd.f32 %v2142, 1.0
      %v2167 = vadd.f32 %v2144, 1.0
      %v2168 = vadd.f32 %v2146, 1.0
      %v2169 = vadd.f32 %v2148, 1.0
      %v2170 = vadd.f32 %v2150, 1.0
      %v2171 = vadd.f32 %v2152, 1.0
      %v2172 = vadd.f32 %v2154, 1.0
      %v2173 = vadd.f32 %v2156, 1.0
      %v2174 = vadd.f32 %v2158, 1.0
      %v2175 = vrcp.pop %v2159
      %v2176 = vmul.f32 1.0, %v2175
      %v2177 = vrcp.pop %v2160
      %v2178 = vmul.f32 1.0, %v2177
      %v2179 = vrcp.pop %v2161
      %v2180 = vmul.f32 1.0, %v2179
      %v2181 = vrcp.pop %v2162
      %v2182 = vmul.f32 1.0, %v2181
      %v2183 = vrcp.pop %v2163
      %v2184 = vmul.f32 1.0, %v2183
      %v2185 = vrcp.pop %v2164
      %v2186 = vmul.f32 1.0, %v2185
      %v2187 = vrcp.pop %v2165
      %v2188 = vmul.f32 1.0, %v2187
      %v2189 = vrcp.pop %v2166
      %v2190 = vmul.f32 1.0, %v2189
      %v2191 = vrcp.pop %v2167
      %v2192 = vmul.f32 1.0, %v2191
      %v2193 = vrcp.pop %v2168
      %v2194 = vmul.f32 1.0, %v2193
      %v2195 = vrcp.pop %v2169
      %v2196 = vmul.f32 1.0, %v2195
      %v2197 = vrcp.pop %v2170
      %v2198 = vmul.f32 1.0, %v2197
      %v2199 = vrcp.pop %v2171
      %v2200 = vmul.f32 1.0, %v2199
      %v2201 = vrcp.pop %v2172
      %v2202 = vmul.f32 1.0, %v2201
      %v2203 = vrcp.pop %v2173
      %v2204 = vmul.f32 1.0, %v2203
      %v2205 = vrcp.pop %v2174
      %v2206 = vmul.f32 1.0, %v2205
      %v2207 = vmul.f32 %v2024, %v2176
      %v2208 = vmul.f32 %v2026, %v2178
      %v2209 = vmul.f32 %v2077, %v2180
      %v2210 = vmul.f32 %v2079, %v2182
      %v2211 = vmul.f32 %v2028, %v2184
      %v2212 = vmul.f32 %v2030, %v2186
      %v2213 = vmul.f32 %v2081, %v2188
      %v2214 = vmul.f32 %v2083, %v2190
      %v2215 = vmul.f32 %v2034, %v2192
      %v2216 = vmul.f32 %v2036, %v2194
      %v2217 = vmul.f32 %v2087, %v2196
      %v2218 = vmul.f32 %v2089, %v2198
      %v2219 = vmul.f32 %v2038, %v2200
      %v2220 = vmul.f32 %v2040, %v2202
      %v2221 = vmul.f32 %v2091, %v2204
      %v2222 = vmul.f32 %v2093, %v2206
      %v2223 = vpack.c.bf16 %v2211, %v2207
      %v2224 = vpack.c.bf16 %v2212, %v2208
      %v2225 = vpack.c.bf16 %v2213, %v2209
      %v2226 = vpack.c.bf16 %v2214, %v2210
      %v2227 = vpack.c.bf16 %v2219, %v2215
      %v2228 = vpack.c.bf16 %v2220, %v2216
      %v2229 = vpack.c.bf16 %v2221, %v2217
      %v2230 = vpack.c.bf16 %v2222, %v2218
      %v2231 = vld [vmem:[%s12] sm:$0xf]
      %v2232 = vld [vmem:[%s12 + $0x4] sm:$0xf]
      %v2233 = vld [vmem:[%s12 + $0x8] sm:$0xf]
      %v2234 = vld [vmem:[%s12 + $0xc] sm:$0xf]
      %v2235 = vld [vmem:[%s12 + $0x10] sm:$0xf]
      %v2236 = vld [vmem:[%s12 + $0x14] sm:$0xf]
      %v2237 = vld [vmem:[%s12 + $0x18] sm:$0xf]
      %v2238 = vld [vmem:[%s12 + $0x1c] sm:$0xf]
      %v2239 = vld [vmem:[%s12 + $0x20] sm:$0xf]
      %v2240 = vld [vmem:[%s12 + $0x24] sm:$0xf]
      %v2241 = vld [vmem:[%s12 + $0x28] sm:$0xf]
      %v2242 = vld [vmem:[%s12 + $0x2c] sm:$0xf]
      %v2243 = vld [vmem:[%s12 + $0x30] sm:$0xf]
      %v2244 = vld [vmem:[%s12 + $0x34] sm:$0xf]
      %v2245 = vld [vmem:[%s12 + $0x38] sm:$0xf]
      %v2246 = vld [vmem:[%s12 + $0x3c] sm:$0xf]
      %v2247 = vld [vmem:[%s12 + $0x40] sm:$0xf]
      %v2248 = vld [vmem:[%s12 + $0x44] sm:$0xf]
      %v2249 = vld [vmem:[%s12 + $0x48] sm:$0xf]
      %v2250 = vld [vmem:[%s12 + $0x4c] sm:$0xf]
      %v2251 = vld [vmem:[%s12 + $0x50] sm:$0xf]
      %v2252 = vld [vmem:[%s12 + $0x54] sm:$0xf]
      %v2253 = vld [vmem:[%s12 + $0x58] sm:$0xf]
      %v2254 = vld [vmem:[%s12 + $0x5c] sm:$0xf]
      %v2255 = vld [vmem:[%s12 + $0x60] sm:$0xf]
      %v2256 = vld [vmem:[%s12 + $0x64] sm:$0xf]
      %v2257 = vld [vmem:[%s12 + $0x68] sm:$0xf]
      %v2258 = vld [vmem:[%s12 + $0x6c] sm:$0xf]
      %v2259 = vld [vmem:[%s12 + $0x70] sm:$0xf]
      %v2260 = vld [vmem:[%s12 + $0x74] sm:$0xf]
      %v2261 = vld [vmem:[%s12 + $0x78] sm:$0xf]
      %v2262 = vld [vmem:[%s12 + $0x7c] sm:$0xf]
      %v2263 = vld [vmem:[%s12 + $0x80] sm:$0xf]
      %v2264 = vld [vmem:[%s12 + $0x84] sm:$0xf]
      %v2265 = vld [vmem:[%s12 + $0x88] sm:$0xf]
      %v2266 = vld [vmem:[%s12 + $0x8c] sm:$0xf]
      %v2267 = vld [vmem:[%s12 + $0x90] sm:$0xf]
      %v2268 = vld [vmem:[%s12 + $0x94] sm:$0xf]
      %v2269 = vld [vmem:[%s12 + $0x98] sm:$0xf]
      %v2270 = vld [vmem:[%s12 + $0x9c] sm:$0xf]
      %v2271 = vld [vmem:[%s12 + $0xa0] sm:$0xf]
      %v2272 = vld [vmem:[%s12 + $0xa4] sm:$0xf]
      %v2273 = vld [vmem:[%s12 + $0xa8] sm:$0xf]
      %v2274 = vld [vmem:[%s12 + $0xac] sm:$0xf]
      %v2275 = vld [vmem:[%s12 + $0xb0] sm:$0xf]
      %v2276 = vld [vmem:[%s12 + $0xb4] sm:$0xf]
      %v2277 = vld [vmem:[%s12 + $0xb8] sm:$0xf]
      %v2278 = vld [vmem:[%s12 + $0xbc] sm:$0xf]
      %v2279 = vld [vmem:[%s12 + $0xc0] sm:$0xf]
      %v2280 = vld [vmem:[%s12 + $0xc4] sm:$0xf]
      %v2281 = vld [vmem:[%s12 + $0xc8] sm:$0xf]
      %v2282 = vld [vmem:[%s12 + $0xcc] sm:$0xf]
      %v2283 = vld [vmem:[%s12 + $0xd0] sm:$0xf]
      %v2284 = vld [vmem:[%s12 + $0xd4] sm:$0xf]
      %v2285 = vld [vmem:[%s12 + $0xd8] sm:$0xf]
      %v2286 = vld [vmem:[%s12 + $0xdc] sm:$0xf]
      %v2287 = vld [vmem:[%s12 + $0xe0] sm:$0xf]
      %v2288 = vld [vmem:[%s12 + $0xe4] sm:$0xf]
      %v2289 = vld [vmem:[%s12 + $0xe8] sm:$0xf]
      %v2290 = vld [vmem:[%s12 + $0xec] sm:$0xf]
      %v2291 = vld [vmem:[%s12 + $0xf0] sm:$0xf]
      %v2292 = vld [vmem:[%s12 + $0xf4] sm:$0xf]
      %v2293 = vld [vmem:[%s12 + $0xf8] sm:$0xf]
      %v2294 = vld [vmem:[%s12 + $0xfc] sm:$0xf]
      %v2359 = vunpack.c.l.b16 %v2231
      %v2360 = vunpack.c.l.b16 %v2232
      %v2361 = vunpack.c.l.b16 %v2233
      %v2362 = vunpack.c.l.b16 %v2234
      %v2363 = vunpack.c.l.b16 %v2235
      %v2364 = vunpack.c.l.b16 %v2236
      %v2365 = vunpack.c.l.b16 %v2237
      %v2366 = vunpack.c.l.b16 %v2238
      %v2367 = vunpack.c.l.b16 %v2239
      %v2368 = vunpack.c.l.b16 %v2240
      %v2369 = vunpack.c.l.b16 %v2241
      %v2370 = vunpack.c.l.b16 %v2242
      %v2371 = vunpack.c.l.b16 %v2243
      %v2372 = vunpack.c.l.b16 %v2244
      %v2373 = vunpack.c.l.b16 %v2245
      %v2374 = vunpack.c.l.b16 %v2246
      %v2375 = vunpack.c.l.b16 %v2247
      %v2376 = vunpack.c.l.b16 %v2248
      %v2377 = vunpack.c.l.b16 %v2249
      %v2378 = vunpack.c.l.b16 %v2250
      %v2379 = vunpack.c.l.b16 %v2251
      %v2380 = vunpack.c.l.b16 %v2252
      %v2381 = vunpack.c.l.b16 %v2253
      %v2382 = vunpack.c.l.b16 %v2254
      %v2383 = vunpack.c.l.b16 %v2255
      %v2384 = vunpack.c.l.b16 %v2256
      %v2385 = vunpack.c.l.b16 %v2257
      %v2386 = vunpack.c.l.b16 %v2258
      %v2387 = vunpack.c.l.b16 %v2259
      %v2388 = vunpack.c.l.b16 %v2260
      %v2389 = vunpack.c.l.b16 %v2261
      %v2390 = vunpack.c.l.b16 %v2262
      %v2391 = vunpack.c.l.b16 %v2263
      %v2392 = vunpack.c.l.b16 %v2264
      %v2393 = vunpack.c.l.b16 %v2265
      %v2394 = vunpack.c.l.b16 %v2266
      %v2395 = vunpack.c.l.b16 %v2267
      %v2396 = vunpack.c.l.b16 %v2268
      %v2397 = vunpack.c.l.b16 %v2269
      %v2398 = vunpack.c.l.b16 %v2270
      %v2399 = vunpack.c.l.b16 %v2271
      %v2400 = vunpack.c.l.b16 %v2272
      %v2401 = vunpack.c.l.b16 %v2273
      %v2402 = vunpack.c.l.b16 %v2274
      %v2403 = vunpack.c.l.b16 %v2275
      %v2404 = vunpack.c.l.b16 %v2276
      %v2405 = vunpack.c.l.b16 %v2277
      %v2406 = vunpack.c.l.b16 %v2278
      %v2407 = vunpack.c.l.b16 %v2279
      %v2408 = vunpack.c.l.b16 %v2280
      %v2409 = vunpack.c.l.b16 %v2281
      %v2410 = vunpack.c.l.b16 %v2282
      %v2411 = vunpack.c.l.b16 %v2283
      %v2412 = vunpack.c.l.b16 %v2284
      %v2413 = vunpack.c.l.b16 %v2285
      %v2414 = vunpack.c.l.b16 %v2286
      %v2415 = vunpack.c.l.b16 %v2287
      %v2416 = vunpack.c.l.b16 %v2288
      %v2417 = vunpack.c.l.b16 %v2289
      %v2418 = vunpack.c.l.b16 %v2290
      %v2419 = vunpack.c.l.b16 %v2291
      %v2420 = vunpack.c.l.b16 %v2292
      %v2421 = vunpack.c.l.b16 %v2293
      %v2422 = vunpack.c.l.b16 %v2294
      %v2423 = vpack.c.b16 %v2360, %v2359
      %v2424 = vpack.c.b16 %v2362, %v2361
      %v2425 = vpack.c.b16 %v2364, %v2363
      %v2426 = vpack.c.b16 %v2366, %v2365
      %v2427 = vpack.c.b16 %v2368, %v2367
      %v2428 = vpack.c.b16 %v2370, %v2369
      %v2429 = vpack.c.b16 %v2372, %v2371
      %v2430 = vpack.c.b16 %v2374, %v2373
      %v2431 = vpack.c.b16 %v2376, %v2375
      %v2432 = vpack.c.b16 %v2378, %v2377
      %v2433 = vpack.c.b16 %v2380, %v2379
      %v2434 = vpack.c.b16 %v2382, %v2381
      %v2435 = vpack.c.b16 %v2384, %v2383
      %v2436 = vpack.c.b16 %v2386, %v2385
      %v2437 = vpack.c.b16 %v2388, %v2387
      %v2438 = vpack.c.b16 %v2390, %v2389
      %v2439 = vpack.c.b16 %v2392, %v2391
      %v2440 = vpack.c.b16 %v2394, %v2393
      %v2441 = vpack.c.b16 %v2396, %v2395
      %v2442 = vpack.c.b16 %v2398, %v2397
      %v2443 = vpack.c.b16 %v2400, %v2399
      %v2444 = vpack.c.b16 %v2402, %v2401
      %v2445 = vpack.c.b16 %v2404, %v2403
      %v2446 = vpack.c.b16 %v2406, %v2405
      %v2447 = vpack.c.b16 %v2408, %v2407
      %v2448 = vpack.c.b16 %v2410, %v2409
      %v2449 = vpack.c.b16 %v2412, %v2411
      %v2450 = vpack.c.b16 %v2414, %v2413
      %v2451 = vpack.c.b16 %v2416, %v2415
      %v2452 = vpack.c.b16 %v2418, %v2417
      %v2453 = vpack.c.b16 %v2420, %v2419
      %v2454 = vpack.c.b16 %v2422, %v2421
      %2487 = vmatprep.subr.bf16.mxu0 0
      %2488 = vmatpush1.bf16.msra.mxu0 %v2430
      %2489 = vmatprep.subr.bf16.mxu0 0
      %2490 = vmatpush1.bf16.msra.mxu0 %v2429
      %2491 = vmatprep.subr.bf16.mxu0 0
      %2492 = vmatpush1.bf16.msra.mxu0 %v2428
      %2493 = vmatprep.subr.bf16.mxu0 0
      %2494 = vmatpush1.bf16.msra.mxu0 %v2427
      %2495 = vmatprep.subr.bf16.mxu0 0
      %2496 = vmatpush1.bf16.msra.mxu0 %v2426
      %2497 = vmatprep.subr.bf16.mxu0 0
      %2498 = vmatpush1.bf16.msra.mxu0 %v2425
      %2499 = vmatprep.subr.bf16.mxu0 0
      %2500 = vmatpush1.bf16.msra.mxu0 %v2424
      %2501 = vmatprep.subr.bf16.mxu0 0
      %2502 = vmatpush1.bf16.msra.mxu0 %v2423
      %2503 = vmatprep.subr.bf16.mxu0 0
      %2504 = vmatpush2.bf16.msra.mxu0 %v2438
      %2505 = vmatprep.subr.bf16.mxu0 0
      %2506 = vmatpush2.bf16.msra.mxu0 %v2437
      %2507 = vmatprep.subr.bf16.mxu0 0
      %2508 = vmatpush2.bf16.msra.mxu0 %v2436
      %2509 = vmatprep.subr.bf16.mxu0 0
      %2510 = vmatpush2.bf16.msra.mxu0 %v2435
      %2511 = vmatprep.subr.bf16.mxu0 0
      %2512 = vmatpush2.bf16.msra.mxu0 %v2434
      %2513 = vmatprep.subr.bf16.mxu0 0
      %2514 = vmatpush2.bf16.msra.mxu0 %v2433
      %2515 = vmatprep.subr.bf16.mxu0 0
      %2516 = vmatpush2.bf16.msra.mxu0 %v2432
      %2517 = vmatprep.subr.bf16.mxu0 0
      %2518 = vmatpush2.bf16.msra.mxu0 %v2431
      %2519 = vmatprep.mubr.bf16.mxu0 %v2224
      %2520 = vmatmul.mubr.bf16.gmra.mxu0 %v2223
      %v2521 = vpop.f32.mrf.mxu0
      %v2522 = vadd.f32 0.0, %v2521
      %v2523 = vpop.f32.mrf.mxu0
      %v2524 = vpop.f32.mrf.mxu0
      %v2525 = vadd.f32 0.0, %v2524
      %v2526 = vpop.f32.mrf.mxu0
      %2527 = vmatprep.mubr.bf16.mxu0 %v2228
      %2528 = vmatmul.mubr.bf16.gmra.mxu0 %v2227
      %v2529 = vpop.f32.mrf.mxu0
      %v2530 = vadd.f32 0.0, %v2529
      %v2531 = vpop.f32.mrf.mxu0
      %v2532 = vpop.f32.mrf.mxu0
      %v2533 = vadd.f32 0.0, %v2532
      %v2534 = vpop.f32.mrf.mxu0
      %2535 = vdwg.mxu0
      %2536 = vmatprep.subr.bf16.mxu0 0
      %2537 = vmatpush1.bf16.msra.mxu0 %v2446
      %2538 = vmatprep.subr.bf16.mxu0 0
      %2539 = vmatpush1.bf16.msra.mxu0 %v2445
      %2540 = vmatprep.subr.bf16.mxu0 0
      %2541 = vmatpush1.bf16.msra.mxu0 %v2444
      %2542 = vmatprep.subr.bf16.mxu0 0
      %2543 = vmatpush1.bf16.msra.mxu0 %v2443
      %2544 = vmatprep.subr.bf16.mxu0 0
      %2545 = vmatpush1.bf16.msra.mxu0 %v2442
      %2546 = vmatprep.subr.bf16.mxu0 0
      %2547 = vmatpush1.bf16.msra.mxu0 %v2441
      %2548 = vmatprep.subr.bf16.mxu0 0
      %2549 = vmatpush1.bf16.msra.mxu0 %v2440
      %2550 = vmatprep.subr.bf16.mxu0 0
      %2551 = vmatpush1.bf16.msra.mxu0 %v2439
      %2552 = vmatprep.subr.bf16.mxu0 0
      %2553 = vmatpush2.bf16.msra.mxu0 %v2454
      %2554 = vmatprep.subr.bf16.mxu0 0
      %2555 = vmatpush2.bf16.msra.mxu0 %v2453
      %2556 = vmatprep.subr.bf16.mxu0 0
      %2557 = vmatpush2.bf16.msra.mxu0 %v2452
      %2558 = vmatprep.subr.bf16.mxu0 0
      %2559 = vmatpush2.bf16.msra.mxu0 %v2451
      %2560 = vmatprep.subr.bf16.mxu0 0
      %2561 = vmatpush2.bf16.msra.mxu0 %v2450
      %2562 = vmatprep.subr.bf16.mxu0 0
      %2563 = vmatpush2.bf16.msra.mxu0 %v2449
      %2564 = vmatprep.subr.bf16.mxu0 0
      %2565 = vmatpush2.bf16.msra.mxu0 %v2448
      %2566 = vmatprep.subr.bf16.mxu0 0
      %2567 = vmatpush2.bf16.msra.mxu0 %v2447
      %2568 = vmatprep.mubr.bf16.mxu0 %v2226
      %2569 = vmatmul.mubr.bf16.gmra.mxu0 %v2225
      %v2570 = vpop.f32.mrf.mxu0
      %v2571 = vadd.f32 %v2522, %v2570
      %v2572 = vpop.f32.mrf.mxu0
      %v2573 = vpop.f32.mrf.mxu0
      %v2574 = vadd.f32 %v2525, %v2573
      %v2575 = vpop.f32.mrf.mxu0
      %2576 = vmatprep.mubr.bf16.mxu0 %v2230
      %2577 = vmatmul.mubr.bf16.gmra.mxu0 %v2229
      %v2578 = vpop.f32.mrf.mxu0
      %v2579 = vadd.f32 %v2530, %v2578
      %v2580 = vpop.f32.mrf.mxu0
      %v2581 = vpop.f32.mrf.mxu0
      %v2582 = vadd.f32 %v2533, %v2581
      %v2583 = vpop.f32.mrf.mxu0
      %2584 = vdwg.mxu0
      %v2585 = vld [vmem:[#allocation4] sm:$0xff]
      %v2586 = vld [vmem:[#allocation4 + $0x8] sm:$0xff]
      %v2587 = vld [vmem:[#allocation4 + $0x10] sm:$0xff]
      %v2588 = vld [vmem:[#allocation4 + $0x18] sm:$0xff]
      %v2589 = vadd.f32 %v2585, %v2571
      %v2590 = vadd.f32 %v2586, %v2574
      %v2591 = vadd.f32 %v2587, %v2579
      %v2592 = vadd.f32 %v2588, %v2582
      %v2593 = vld [vmem:[%s13] sm:$0x1]
      %v2595 = vlaneseq
      %v2596 = vshrl.u32 %v2595, 7
      %v2597 = vsub.s32 0, %v2596
      %v2598 = vrot.slane %v2593, %v2597
      %v2600 = vadd.f32 %v2589, %v2598
      %v2601 = vadd.f32 %v2590, %v2598
      %v2602 = vadd.f32 %v2591, %v2598
      %v2603 = vadd.f32 %v2592, %v2598
      %2604 = vst [vmem:[%s499] sm:$0xff] %v2600
      %2605 = vst [vmem:[%s499 + $0x8] sm:$0xff] %v2601
      %2606 = vst [vmem:[%s499 + $0x10] sm:$0xff] %v2602
      %2607 = vst [vmem:[%s499 + $0x18] sm:$0xff] %v2603
      %s2608 = smul.u32 2, %s25
      %p2609 = scmp.lt.s32.totalorder %s2608, 3
      %s2610 = scalar_select %p2609, %s2608, 3
      %s2611 = smul.addr %s2610, 2
      %s2612 = smul.addr %s2611, 8
      %s2613 = scalar_lea.vmem %s14, %s2612
      // Predicated region
      $region84: #{text_encoder_forward.5} parent=75 // pred_check
        %p2614 = pneg %p347
      $region85: #{text_encoder_forward.5} parent=75 // pred_check_branch
        %2616 = sbr.rel (%p2614) target = $region87
      $region86: #{text_encoder_forward.5} parent=75 // pred_region
        %s2617 = smul.u32 2, %s25
      $region87: #{text_encoder_forward.5} parent=75 // pred_fallthru
        _
    $region76: #{text_encoder_forward.5} parent=5 // pred_fallthru
      _
    %p2618 = scmp.le.s32.totalorder 2, %s20
    // Predicated region
    $region88: #{text_encoder_forward.5} parent=5 // pred_check
      %p2619 = pneg %p2618
    $region89: #{text_encoder_forward.5} parent=5 // pred_check_branch
      %2621 = sbr.rel (%p2619) target = $region91
    $region90: #{text_encoder_forward.5} parent=5 // pred_region
      %s2622 = ssub.s32 %s20, 2
      // Predicated region
      $region92: #{text_encoder_forward.5} parent=90 // pred_check
        %p2623 = pneg %p353
      $region93: #{text_encoder_forward.5} parent=90 // pred_check_branch
        %2625 = sbr.rel (%p2623) target = $region95
      $region94: #{text_encoder_forward.5} parent=90 // pred_region
        %s2626 = smul.u32 2, %s26
        %p2627 = scmp.lt.s32.totalorder %s2626, 3
        %s2628 = scalar_select %p2627, %s2626, 3
        %s2629 = smul.addr %s2628, 2
        %s2630 = smul.addr %s2629, 8
        %s2631 = scalar_lea.vmem %s14, %s2630
      $region95: #{text_encoder_forward.5} parent=90 // pred_fallthru
        _
    $region91: #{text_encoder_forward.5} parent=5 // pred_fallthru
      _
  $region6: #{text_encoder_forward.5} parent=0 // loop_footer
    %s24 = sadd.s32 1, %s20
  $region7: #{text_encoder_forward.5} parent=0 // loop_footer_branch
    %19 = sbr.rel target = $region3
  $region8: #{text_encoder_forward.5} parent=0 // loop_exit
    _

</llo_original>
